<compile_context>
chip_gen: v5e
topology: v5e:2x2
jax: 0.10.0
libtpu: 0.0.40
codegen_flags: <defaults>
</compile_context>

<pallas_src>
import functools

import jax
import jax.numpy as jnp
import numpy as np
from jax.experimental import pallas as pl
from jax.experimental.pallas import tpu as pltpu


def _round_up(v, m):
    return (v + m - 1) // m * m


# ---------------------------------------------------------------------------
# The single fused kernel.
# ---------------------------------------------------------------------------
def _crnn_kernel(*refs, n_stages, n_layers, T, B):
    f32 = jnp.float32
    bf16 = jnp.bfloat16

    it = iter(refs)
    x1_ref = next(it)                                       # (M1, k1*k1*Cin) bf16
    w1_ref, b1_ref = next(it), next(it)                     # (K1, C1) bf16, (1, C1) f32
    stage_refs = [(next(it), next(it))                      # ((g, Cin, Cout) bf16, (1, Cout) f32)
                  for _ in range(n_stages - 1)]
    hproj_ref, hbias_ref = next(it), next(it)               # (T*B, Mn) f32, (T*B, 1) f32
    gru_refs = [(next(it), next(it), next(it), next(it))    # (wih4, bi4, whh4, bh4)
                for _ in range(n_layers)]
    fcw_ref, fcb_ref = next(it), next(it)                   # (H, NCp) bf16, (1, NCp) f32
    out_ref = next(it)                                      # (T*B, NCp) f32

    # ---------------- backbone: chained patchify convs, fully VMEM resident -------
    # Later-stage group index is OUTERMOST in the row order, so each group is a
    # contiguous static row slice (no selection matmuls).
    act = jax.nn.silu(
        jnp.dot(x1_ref[...], w1_ref[...], preferred_element_type=f32) + b1_ref[...])
    for w_ref, b_ref in stage_refs:
        g = w_ref.shape[0]
        m_out = act.shape[0] // g
        acc = b_ref[...]
        for j in range(g):
            blk = act[j * m_out:(j + 1) * m_out, :].astype(bf16)
            acc = acc + jnp.dot(blk, w_ref[j], preferred_element_type=f32)
        act = jax.nn.silu(acc)
    feat = act                                              # (B*Hc*Wc, F) f32, rows = (b, hc, wc)

    # -------- AvgPool over Hc + 1x1 projection folded into one row-space matmul ----
    seq = jnp.dot(hproj_ref[...], feat, preferred_element_type=f32) + hbias_ref[...]
    # seq: (T*B, F), rows ordered (t, b)

    # ---------------- GRU stack (PyTorch gate order r, z, n), wavefronted ----------
    H = gru_refs[0][2].shape[0]
    L = n_layers

    # Layer-0 input projection hoisted off the recurrence: ONE fused bf16 matmul.
    wih0, bi0, whh0, bh0 = gru_refs[0]
    gi0 = jnp.dot(seq.astype(bf16), wih0[...], preferred_element_type=f32) + bi0[...]
    whh0_v, bh0_v = whh0[...], bh0[...]

    lay_w = [None]
    for l in range(1, L):
        wih_l, bi_l, whh_l, bh_l = gru_refs[l]
        lay_w.append((wih_l[...], bi_l[...], whh_l[...], bh_l[...]))
    fcw_v, fcb_v = fcw_ref[...], fcb_ref[...]

    # Wavefront: layer l processes timestep t = s - l at diagonal step s; layer l's
    # input at step t is exactly layer (l-1)'s (pre-update) hidden state.
    # Gate columns: [r | z | n_from_x | n_from_h | pad] so PyTorch's
    #   n = tanh(W_in x + b_in + r * (W_hn h + b_hn))
    # comes straight out of static lane slices.
    h = [jnp.zeros((B, H), f32) for _ in range(L)]
    for s in range(T + L - 1):
        new_h = list(h)
        for l in range(L):
            t = s - l
            if t < 0 or t >= T:
                continue
            if l == 0:
                g4 = (gi0[t * B:(t + 1) * B, :]
                      + jnp.dot(h[0].astype(bf16), whh0_v, preferred_element_type=f32)
                      + bh0_v)
            else:
                wih_v, bi_v, whh_v, bh_v = lay_w[l]
                x_t = h[l - 1]                              # layer l-1 output at step t
                g4 = (jnp.dot(x_t.astype(bf16), wih_v, preferred_element_type=f32) + bi_v
                      + jnp.dot(h[l].astype(bf16), whh_v, preferred_element_type=f32) + bh_v)
            r = jax.nn.sigmoid(g4[:, 0:H])
            z = jax.nn.sigmoid(g4[:, H:2 * H])
            n = jnp.tanh(g4[:, 2 * H:3 * H] + r * g4[:, 3 * H:4 * H])
            hn = (1.0 - z) * n + z * h[l]
            new_h[l] = hn
            if l == L - 1:
                # classifier for this timestep; lane-dense 128-wide store.
                out_t = (jnp.dot(hn.astype(bf16), fcw_v, preferred_element_type=f32)
                         + fcb_v)
                out_ref[pl.ds(t * B, B), :] = out_t.astype(out_ref.dtype)
            # nn.GRU inter-layer dropout is train-only; eval semantics -> no-op.
        h = new_h


# ---------------------------------------------------------------------------
# Wrapper-side layout prep (pure XLA, runs once inside the jitted forward).
# ---------------------------------------------------------------------------
def _hier_patchify(x_nhwc, ks):
    """Rearrange the NHWC image so every backbone stage is a plain matmul and each
    later stage's patch-group index (p_s, q_s) is the OUTERMOST row index of its
    input (-> contiguous slice per group, no selection matmuls).
    Row order of the result: (p_2, q_2, p_3, q_3, ..., p_n, q_n, b, hc, wc);
    columns hold the finest (stage-1) patch flattened as (p_1, q_1, c)."""
    B, H, W, C = x_nhwc.shape
    n = len(ks)
    down = 1
    for k in ks:
        down *= int(k)
    Hn, Wn = H // down, W // down
    rev = tuple(int(k) for k in reversed(ks))               # (k_n, ..., k_1)
    x = x_nhwc.reshape((B, Hn) + rev + (Wn,) + rev + (C,))
    # axes: 0=b, 1=hn, 2..n+1 = p_n..p_1, n+2=wn, n+3..2n+2 = q_n..q_1, 2n+3=c
    perm = []
    for s in range(2, n + 1):                               # (p_2, q_2) outermost, ..., (p_n, q_n)
        perm += [2 + (n - s), 2 * n + 3 - s]
    perm += [0, 1, n + 2]                                   # b, hc, wc
    perm += [n + 1, 2 * n + 2, 2 * n + 3]                   # p_1, q_1, c
    x = jnp.transpose(x, perm)
    rows = B * Hn * Wn
    for k in ks[1:]:
        rows *= int(k) * int(k)
    return x.reshape(rows, int(ks[0]) * int(ks[0]) * C)


@jax.jit
def crnn_forward(x_nchw, params):
    f32, bf16 = jnp.float32, jnp.bfloat16
    x = jnp.transpose(x_nchw, (0, 2, 3, 1))                 # NCHW -> NHWC (one-time)
    Bn, H, W, _ = x.shape
    ks = [int(layer["w"].shape[-1]) for layer in params["cnn"]]
    down = 1
    for k in ks:
        down *= k
    assert H % down == 0 and W % down == 0
    Hc, Wc = H // down, W // down

    inputs = []
    flops = 0
    trans = 0

    # ---- backbone operands --------------------------------------------------------
    x1 = _hier_patchify(x, ks).astype(bf16)
    w0 = params["cnn"][0]["w"]                              # (C1, Cin, k, k) torch layout
    c_in = int(w0.shape[1])
    w1 = jnp.transpose(w0, (2, 3, 1, 0)).reshape(ks[0] * ks[0] * c_in, -1).astype(bf16)
    b1 = params["cnn"][0]["b"].reshape(1, -1).astype(f32)
    inputs += [x1, w1, b1]
    m = int(x1.shape[0])
    flops += 2 * m * int(w1.shape[0]) * int(w1.shape[1])
    trans += m * int(w1.shape[1])
    for layer in params["cnn"][1:]:
        w = layer["w"]                                      # (Cout, Cin, k, k)
        kk, cin_s, cout_s = int(w.shape[-1]), int(w.shape[1]), int(w.shape[0])
        g = kk * kk
        w_s = jnp.transpose(w, (2, 3, 1, 0)).reshape(g, cin_s, cout_s).astype(bf16)
        b_s = layer["b"].reshape(1, -1).astype(f32)
        inputs += [w_s, b_s]
        flops += 2 * m * cin_s * cout_s
        m = m // g
        trans += m * cout_s

    # ---- AvgPool(Hc) + 1x1 projection over Wc folded into one matmul operand -------
    proj_w = params["proj_w"].astype(f32)                   # (T, Wc)
    proj_b = params["proj_b"].astype(f32)                   # (T,)
    T = int(proj_w.shape[0])
    F = int(params["cnn"][-1]["w"].shape[0])
    hproj = jnp.einsum("tw,bc,h->tbchw", proj_w, jnp.eye(Bn, dtype=f32),
                       jnp.full((Hc,), 1.0 / Hc, f32)).reshape(T * Bn, Bn * Hc * Wc)
    hbias = jnp.repeat(proj_b, Bn).reshape(T * Bn, 1)
    inputs += [hproj, hbias]
    flops += 2 * T * Bn * Bn * Hc * Wc * F

    # ---- GRU stack: fused gate operands, columns [r | z | n_from_x | n_from_h | pad]
    hidden = int(params["gru"][0]["w_hh"].shape[1])
    GP = _round_up(4 * hidden, 128)
    Hh = hidden
    for lyr in params["gru"]:
        w_ih, w_hh = lyr["w_ih"], lyr["w_hh"]               # (3H, D), (3H, H)
        b_ih, b_hh = lyr["b_ih"], lyr["b_hh"]
        d = int(w_ih.shape[1])
        wih4 = jnp.zeros((d, GP), f32).at[:, 0:3 * Hh].set(w_ih.T)
        whh4 = jnp.zeros((Hh, GP), f32)
        whh4 = whh4.at[:, 0:2 * Hh].set(w_hh[0:2 * Hh, :].T)
        whh4 = whh4.at[:, 3 * Hh:4 * Hh].set(w_hh[2 * Hh:3 * Hh, :].T)
        bi4 = jnp.zeros((1, GP), f32)
        bi4 = bi4.at[0, 0:2 * Hh].set(b_ih[0:2 * Hh] + b_hh[0:2 * Hh])
        bi4 = bi4.at[0, 2 * Hh:3 * Hh].set(b_ih[2 * Hh:3 * Hh])
        bh4 = jnp.zeros((1, GP), f32).at[0, 3 * Hh:4 * Hh].set(b_hh[2 * Hh:3 * Hh])
        inputs += [wih4.astype(bf16), bi4, whh4.astype(bf16), bh4]
        flops += 2 * T * Bn * (d + Hh) * GP
        trans += 3 * T * Bn * Hh

    # ---- classifier (lane-padded to 128 for dense stores) --------------------------
    NC = int(params["fc_w"].shape[0])
    NCp = _round_up(NC, 128)
    fcw = jnp.zeros((hidden, NCp), f32).at[:, 0:NC].set(params["fc_w"].T).astype(bf16)
    fcb = jnp.zeros((1, NCp), f32).at[0, 0:NC].set(params["fc_b"])
    inputs += [fcw, fcb]
    flops += 2 * T * Bn * hidden * NCp

    bytes_accessed = int(sum(int(a.size) * a.dtype.itemsize for a in inputs)
                         + T * Bn * NCp * 4)

    kernel = functools.partial(_crnn_kernel, n_stages=len(params["cnn"]),
                               n_layers=len(params["gru"]), T=T, B=Bn)
    in_specs = [pl.BlockSpec(a.shape, lambda i, nd=a.ndim: (0,) * nd) for a in inputs]

    out = pl.pallas_call(
        kernel,
        grid=(1,),
        out_shape=jax.ShapeDtypeStruct((T * Bn, NCp), f32),
        in_specs=in_specs,
        out_specs=pl.BlockSpec((T * Bn, NCp), lambda i: (0, 0)),
        compiler_params=pltpu.CompilerParams(
            dimension_semantics=("arbitrary",),             # serial; never "parallel"
            vmem_limit_bytes=32 * 1024 * 1024,
        ),
        cost_estimate=pl.CostEstimate(flops=int(flops), transcendentals=int(trans),
                                      bytes_accessed=bytes_accessed),
    )(*inputs)
    return out[:, :NC].reshape(T, Bn, NC)                   # (T, B, num_classes)


# ---------------------------------------------------------------------------
# Pure-JAX reference (PyTorch semantics; weights passed through bf16 like the
# kernel stores them, all math in f32).  Guards the row-reordering / gate layout.
# ---------------------------------------------------------------------------
@jax.jit
def crnn_reference(x_nchw, params):
    f32, bf16 = jnp.float32, jnp.bfloat16
    q = lambda w: w.astype(bf16).astype(f32)
    x = x_nchw.astype(f32)
    for layer in params["cnn"]:
        w, b = q(layer["w"]), layer["b"].astype(f32)
        k = int(w.shape[-1])
        x = jax.lax.conv_general_dilated(x, w, window_strides=(k, k), padding="VALID",
                                         dimension_numbers=("NCHW", "OIHW", "NCHW"))
        x = jax.nn.silu(x + b[None, :, None, None])
    x = jnp.mean(x, axis=2, keepdims=True)                  # AvgPool2d((Hc, 1))
    pw, pb = params["proj_w"].astype(f32), params["proj_b"].astype(f32)
    xp = jnp.transpose(x, (0, 3, 2, 1))                     # (B, Wc, 1, F)
    xp = jnp.einsum("tw,bwhf->bthf", pw, xp) + pb[None, :, None, None]
    xp = jnp.transpose(xp, (0, 2, 3, 1))                    # (B, 1, F, T)
    s = jnp.transpose(jnp.squeeze(xp, 1), (2, 0, 1))        # (T, B, F)
    hidden = int(params["gru"][0]["w_hh"].shape[1])
    seq = s
    for lyr in params["gru"]:
        w_ih, w_hh = q(lyr["w_ih"]), q(lyr["w_hh"])
        b_ih, b_hh = lyr["b_ih"].astype(f32), lyr["b_hh"].astype(f32)
        Hh = hidden
        h = jnp.zeros((seq.shape[1], Hh), f32)
        ys = []
        for t in range(seq.shape[0]):
            gi = seq[t] @ w_ih.T + b_ih
            gh = h @ w_hh.T + b_hh
            r = jax.nn.sigmoid(gi[:, :Hh] + gh[:, :Hh])
            z = jax.nn.sigmoid(gi[:, Hh:2 * Hh] + gh[:, Hh:2 * Hh])
            n = jnp.tanh(gi[:, 2 * Hh:3 * Hh] + r * gh[:, 2 * Hh:3 * Hh])
            h = (1.0 - z) * n + z * h
            ys.append(h)
        seq = jnp.stack(ys, axis=0)
    return seq @ q(params["fc_w"]).T + params["fc_b"].astype(f32)   # (T, B, NC)


# ---------------------------------------------------------------------------
# Deterministic synthetic parameters (PyTorch layouts, shapes follow __init__).
# ---------------------------------------------------------------------------
def init_params(key, *, in_ch=3, feat_ch=(16, 32, 48, 64), patch_ks=(4, 2, 2, 2),
                cnn_output_len=8, hidden=32, num_layers=2, num_classes=11, wc=2):
    keys = iter(jax.random.split(key, 64))
    params = {"cnn": []}
    c_in = in_ch
    for k, c_out in zip(patch_ks, feat_ch):
        fan_in = k * k * c_in
        params["cnn"].append({
            "w": jax.random.normal(next(keys), (c_out, c_in, k, k), jnp.float32) / np.sqrt(fan_in),
            "b": jax.random.normal(next(keys), (c_out,), jnp.float32) * 0.01,
        })
        c_in = c_out
    # proj: Conv2d(w//32 -> cnn_output_len, kernel 1)
    params["proj_w"] = jax.random.normal(next(keys), (cnn_output_len, wc), jnp.float32) / np.sqrt(wc)
    params["proj_b"] = jax.random.normal(next(keys), (cnn_output_len,), jnp.float32) * 0.01
    # GRU stack (PyTorch layout: weight_ih (3H, D), weight_hh (3H, H), gate order r,z,n)
    params["gru"] = []
    d = c_in                                                # num_output_features
    for _ in range(num_layers):
        params["gru"].append({
            "w_ih": jax.random.normal(next(keys), (3 * hidden, d), jnp.float32) / np.sqrt(d),
            "w_hh": jax.random.normal(next(keys), (3 * hidden, hidden), jnp.float32) / np.sqrt(hidden),
            "b_ih": jax.random.normal(next(keys), (3 * hidden,), jnp.float32) * 0.01,
            "b_hh": jax.random.normal(next(keys), (3 * hidden,), jnp.float32) * 0.01,
        })
        d = hidden
    params["fc_w"] = jax.random.normal(next(keys), (num_classes, hidden), jnp.float32) / np.sqrt(hidden)
    params["fc_b"] = jax.random.normal(next(keys), (num_classes,), jnp.float32) * 0.01
    return params


if __name__ == "__main__":
    B = 2
    H_IN, W_IN = 32, 64            # small cnn_input_size (divisible by 32)
    CNN_OUTPUT_LEN = 8             # sequence length T
    HIDDEN = 32
    NUM_LAYERS = 2
    ALPHABET_LEN = 10
    NUM_CLASSES = ALPHABET_LEN + 1

    x = jax.random.normal(jax.random.PRNGKey(0), (B, 3, H_IN, W_IN), jnp.float32)
    params = init_params(jax.random.PRNGKey(1),
                         cnn_output_len=CNN_OUTPUT_LEN, hidden=HIDDEN,
                         num_layers=NUM_LAYERS, num_classes=NUM_CLASSES,
                         wc=W_IN // 32)

    out = jax.block_until_ready(crnn_forward(x, params))
    assert out.shape == (CNN_OUTPUT_LEN, B, NUM_CLASSES), out.shape
    assert bool(jnp.all(jnp.isfinite(out)))

    ref = jax.block_until_ready(crnn_reference(x, params))
    np.testing.assert_allclose(np.asarray(out), np.asarray(ref), rtol=0.1, atol=0.1)

    print("KERNEL_OK")
</pallas_src>

<mosaic_0001>
module attributes {stable_mosaic.version = 11 : i64} {
  func.func @_crnn_kernel(%arg0: i32, %arg1: memref<256x48xbf16, #tpu.memory_space<vmem>>, %arg2: memref<48x16xbf16, #tpu.memory_space<vmem>>, %arg3: memref<1x16xf32, #tpu.memory_space<vmem>>, %arg4: memref<4x16x32xbf16, #tpu.memory_space<vmem>>, %arg5: memref<1x32xf32, #tpu.memory_space<vmem>>, %arg6: memref<4x32x48xbf16, #tpu.memory_space<vmem>>, %arg7: memref<1x48xf32, #tpu.memory_space<vmem>>, %arg8: memref<4x48x64xbf16, #tpu.memory_space<vmem>>, %arg9: memref<1x64xf32, #tpu.memory_space<vmem>>, %arg10: memref<16x4xf32, #tpu.memory_space<vmem>>, %arg11: memref<16x1xf32, #tpu.memory_space<vmem>>, %arg12: memref<64x128xbf16, #tpu.memory_space<vmem>>, %arg13: memref<1x128xf32, #tpu.memory_space<vmem>>, %arg14: memref<32x128xbf16, #tpu.memory_space<vmem>>, %arg15: memref<1x128xf32, #tpu.memory_space<vmem>>, %arg16: memref<32x128xbf16, #tpu.memory_space<vmem>>, %arg17: memref<1x128xf32, #tpu.memory_space<vmem>>, %arg18: memref<32x128xbf16, #tpu.memory_space<vmem>>, %arg19: memref<1x128xf32, #tpu.memory_space<vmem>>, %arg20: memref<32x128xbf16, #tpu.memory_space<vmem>>, %arg21: memref<1x128xf32, #tpu.memory_space<vmem>>, %arg22: memref<16x128xf32, #tpu.memory_space<vmem>>) attributes {dimension_semantics = [#tpu.dimension_semantics<arbitrary>], iteration_bounds = array<i64: 1>, scalar_prefetch = 0 : i64, scratch_operands = 0 : i64, tpu.core_type = #tpu.core_type<tc>, window_params = [{pipeline_mode = #tpu.pipeline_mode<synchronous>, transform_indices = @transform_0, window_bounds = array<i64: 256, 48>}, {pipeline_mode = #tpu.pipeline_mode<synchronous>, transform_indices = @transform_1, window_bounds = array<i64: 48, 16>}, {pipeline_mode = #tpu.pipeline_mode<synchronous>, transform_indices = @transform_2, window_bounds = array<i64: 1, 16>}, {pipeline_mode = #tpu.pipeline_mode<synchronous>, transform_indices = @transform_3, window_bounds = array<i64: 4, 16, 32>}, {pipeline_mode = #tpu.pipeline_mode<synchronous>, transform_indices = @transform_4, window_bounds = array<i64: 1, 32>}, {pipeline_mode = #tpu.pipeline_mode<synchronous>, transform_indices = @transform_5, window_bounds = array<i64: 4, 32, 48>}, {pipeline_mode = #tpu.pipeline_mode<synchronous>, transform_indices = @transform_6, window_bounds = array<i64: 1, 48>}, {pipeline_mode = #tpu.pipeline_mode<synchronous>, transform_indices = @transform_7, window_bounds = array<i64: 4, 48, 64>}, {pipeline_mode = #tpu.pipeline_mode<synchronous>, transform_indices = @transform_8, window_bounds = array<i64: 1, 64>}, {pipeline_mode = #tpu.pipeline_mode<synchronous>, transform_indices = @transform_9, window_bounds = array<i64: 16, 4>}, {pipeline_mode = #tpu.pipeline_mode<synchronous>, transform_indices = @transform_10, window_bounds = array<i64: 16, 1>}, {pipeline_mode = #tpu.pipeline_mode<synchronous>, transform_indices = @transform_11, window_bounds = array<i64: 64, 128>}, {pipeline_mode = #tpu.pipeline_mode<synchronous>, transform_indices = @transform_12, window_bounds = array<i64: 1, 128>}, {pipeline_mode = #tpu.pipeline_mode<synchronous>, transform_indices = @transform_13, window_bounds = array<i64: 32, 128>}, {pipeline_mode = #tpu.pipeline_mode<synchronous>, transform_indices = @transform_14, window_bounds = array<i64: 1, 128>}, {pipeline_mode = #tpu.pipeline_mode<synchronous>, transform_indices = @transform_15, window_bounds = array<i64: 32, 128>}, {pipeline_mode = #tpu.pipeline_mode<synchronous>, transform_indices = @transform_16, window_bounds = array<i64: 1, 128>}, {pipeline_mode = #tpu.pipeline_mode<synchronous>, transform_indices = @transform_17, window_bounds = array<i64: 32, 128>}, {pipeline_mode = #tpu.pipeline_mode<synchronous>, transform_indices = @transform_18, window_bounds = array<i64: 1, 128>}, {pipeline_mode = #tpu.pipeline_mode<synchronous>, transform_indices = @transform_19, window_bounds = array<i64: 32, 128>}, {pipeline_mode = #tpu.pipeline_mode<synchronous>, transform_indices = @transform_20, window_bounds = array<i64: 1, 128>}, {pipeline_mode = #tpu.pipeline_mode<synchronous>, transform_indices = @transform_21, window_bounds = array<i64: 16, 128>}]} {
    %c0 = arith.constant 0 : index
    %c0_0 = arith.constant 0 : index
    %0 = vector.load %arg1[%c0, %c0_0] : memref<256x48xbf16, #tpu.memory_space<vmem>>, vector<256x48xbf16>
    %c0_1 = arith.constant 0 : index
    %c0_2 = arith.constant 0 : index
    %1 = vector.load %arg2[%c0_1, %c0_2] : memref<48x16xbf16, #tpu.memory_space<vmem>>, vector<48x16xbf16>
    %cst = arith.constant dense<0.000000e+00> : vector<256x16xf32>
    %2 = tpu.matmul %0, %1, %cst {dimension_numbers = #tpu.dot_dimension_numbers<[1], [0], [0], [1], [0, 0, 1, 1], [], []>} : vector<256x48xbf16>, vector<48x16xbf16>, vector<256x16xf32> -> vector<256x16xf32>
    %c0_3 = arith.constant 0 : index
    %c0_4 = arith.constant 0 : index
    %3 = vector.load %arg3[%c0_3, %c0_4] : memref<1x16xf32, #tpu.memory_space<vmem>>, vector<1x16xf32>
    %4 = vector.broadcast %3 : vector<1x16xf32> to vector<256x16xf32>
    %5 = arith.addf %2, %4 : vector<256x16xf32>
    %6 = arith.negf %5 : vector<256x16xf32>
    %7 = math.exp %6 : vector<256x16xf32>
    %cst_5 = arith.constant 1.000000e+00 : f32
    %8 = vector.broadcast %cst_5 : f32 to vector<256x16xf32>
    %9 = arith.addf %8, %7 : vector<256x16xf32>
    %10 = arith.divf %8, %9 : vector<256x16xf32>
    %11 = arith.mulf %5, %10 : vector<256x16xf32>
    %c0_6 = arith.constant 0 : index
    %c0_7 = arith.constant 0 : index
    %12 = vector.load %arg5[%c0_6, %c0_7] : memref<1x32xf32, #tpu.memory_space<vmem>>, vector<1x32xf32>
    %13 = vector.extract_strided_slice %11 {offsets = [0, 0], sizes = [64, 16], strides = [1, 1]} : vector<256x16xf32> to vector<64x16xf32>
    %14 = arith.truncf %13 : vector<64x16xf32> to vector<64x16xbf16>
    %c0_8 = arith.constant 0 : index
    %c0_9 = arith.constant 0 : index
    %c0_10 = arith.constant 0 : index
    %15 = vector.load %arg4[%c0_8, %c0_9, %c0_10] : memref<4x16x32xbf16, #tpu.memory_space<vmem>>, vector<1x16x32xbf16>
    %16 = vector.shape_cast %15 : vector<1x16x32xbf16> to vector<16x32xbf16>
    %cst_11 = arith.constant dense<0.000000e+00> : vector<64x32xf32>
    %17 = tpu.matmul %14, %16, %cst_11 {dimension_numbers = #tpu.dot_dimension_numbers<[1], [0], [0], [1], [0, 0, 1, 1], [], []>} : vector<64x16xbf16>, vector<16x32xbf16>, vector<64x32xf32> -> vector<64x32xf32>
    %18 = vector.broadcast %12 : vector<1x32xf32> to vector<64x32xf32>
    %19 = arith.addf %18, %17 : vector<64x32xf32>
    %20 = vector.extract_strided_slice %11 {offsets = [64, 0], sizes = [64, 16], strides = [1, 1]} : vector<256x16xf32> to vector<64x16xf32>
    %21 = arith.truncf %20 : vector<64x16xf32> to vector<64x16xbf16>
    %c1 = arith.constant 1 : index
    %c0_12 = arith.constant 0 : index
    %c0_13 = arith.constant 0 : index
    %22 = vector.load %arg4[%c1, %c0_12, %c0_13] : memref<4x16x32xbf16, #tpu.memory_space<vmem>>, vector<1x16x32xbf16>
    %23 = vector.shape_cast %22 : vector<1x16x32xbf16> to vector<16x32xbf16>
    %cst_14 = arith.constant dense<0.000000e+00> : vector<64x32xf32>
    %24 = tpu.matmul %21, %23, %cst_14 {dimension_numbers = #tpu.dot_dimension_numbers<[1], [0], [0], [1], [0, 0, 1, 1], [], []>} : vector<64x16xbf16>, vector<16x32xbf16>, vector<64x32xf32> -> vector<64x32xf32>
    %25 = arith.addf %19, %24 : vector<64x32xf32>
    %26 = vector.extract_strided_slice %11 {offsets = [128, 0], sizes = [64, 16], strides = [1, 1]} : vector<256x16xf32> to vector<64x16xf32>
    %27 = arith.truncf %26 : vector<64x16xf32> to vector<64x16xbf16>
    %c2 = arith.constant 2 : index
    %c0_15 = arith.constant 0 : index
    %c0_16 = arith.constant 0 : index
    %28 = vector.load %arg4[%c2, %c0_15, %c0_16] : memref<4x16x32xbf16, #tpu.memory_space<vmem>>, vector<1x16x32xbf16>
    %29 = vector.shape_cast %28 : vector<1x16x32xbf16> to vector<16x32xbf16>
    %cst_17 = arith.constant dense<0.000000e+00> : vector<64x32xf32>
    %30 = tpu.matmul %27, %29, %cst_17 {dimension_numbers = #tpu.dot_dimension_numbers<[1], [0], [0], [1], [0, 0, 1, 1], [], []>} : vector<64x16xbf16>, vector<16x32xbf16>, vector<64x32xf32> -> vector<64x32xf32>
    %31 = arith.addf %25, %30 : vector<64x32xf32>
    %32 = vector.extract_strided_slice %11 {offsets = [192, 0], sizes = [64, 16], strides = [1, 1]} : vector<256x16xf32> to vector<64x16xf32>
    %33 = arith.truncf %32 : vector<64x16xf32> to vector<64x16xbf16>
    %c3 = arith.constant 3 : index
    %c0_18 = arith.constant 0 : index
    %c0_19 = arith.constant 0 : index
    %34 = vector.load %arg4[%c3, %c0_18, %c0_19] : memref<4x16x32xbf16, #tpu.memory_space<vmem>>, vector<1x16x32xbf16>
    %35 = vector.shape_cast %34 : vector<1x16x32xbf16> to vector<16x32xbf16>
    %cst_20 = arith.constant dense<0.000000e+00> : vector<64x32xf32>
    %36 = tpu.matmul %33, %35, %cst_20 {dimension_numbers = #tpu.dot_dimension_numbers<[1], [0], [0], [1], [0, 0, 1, 1], [], []>} : vector<64x16xbf16>, vector<16x32xbf16>, vector<64x32xf32> -> vector<64x32xf32>
    %37 = arith.addf %31, %36 : vector<64x32xf32>
    %38 = arith.negf %37 : vector<64x32xf32>
    %39 = math.exp %38 : vector<64x32xf32>
    %cst_21 = arith.constant 1.000000e+00 : f32
    %40 = vector.broadcast %cst_21 : f32 to vector<64x32xf32>
    %41 = arith.addf %40, %39 : vector<64x32xf32>
    %42 = arith.divf %40, %41 : vector<64x32xf32>
    %43 = arith.mulf %37, %42 : vector<64x32xf32>
    %c0_22 = arith.constant 0 : index
    %c0_23 = arith.constant 0 : index
    %44 = vector.load %arg7[%c0_22, %c0_23] : memref<1x48xf32, #tpu.memory_space<vmem>>, vector<1x48xf32>
    %45 = vector.extract_strided_slice %43 {offsets = [0, 0], sizes = [16, 32], strides = [1, 1]} : vector<64x32xf32> to vector<16x32xf32>
    %46 = arith.truncf %45 : vector<16x32xf32> to vector<16x32xbf16>
    %c0_24 = arith.constant 0 : index
    %c0_25 = arith.constant 0 : index
    %c0_26 = arith.constant 0 : index
    %47 = vector.load %arg6[%c0_24, %c0_25, %c0_26] : memref<4x32x48xbf16, #tpu.memory_space<vmem>>, vector<1x32x48xbf16>
    %48 = vector.shape_cast %47 : vector<1x32x48xbf16> to vector<32x48xbf16>
    %cst_27 = arith.constant dense<0.000000e+00> : vector<16x48xf32>
    %49 = tpu.matmul %46, %48, %cst_27 {dimension_numbers = #tpu.dot_dimension_numbers<[1], [0], [0], [1], [0, 0, 1, 1], [], []>} : vector<16x32xbf16>, vector<32x48xbf16>, vector<16x48xf32> -> vector<16x48xf32>
    %50 = vector.broadcast %44 : vector<1x48xf32> to vector<16x48xf32>
    %51 = arith.addf %50, %49 : vector<16x48xf32>
    %52 = vector.extract_strided_slice %43 {offsets = [16, 0], sizes = [16, 32], strides = [1, 1]} : vector<64x32xf32> to vector<16x32xf32>
    %53 = arith.truncf %52 : vector<16x32xf32> to vector<16x32xbf16>
    %c1_28 = arith.constant 1 : index
    %c0_29 = arith.constant 0 : index
    %c0_30 = arith.constant 0 : index
    %54 = vector.load %arg6[%c1_28, %c0_29, %c0_30] : memref<4x32x48xbf16, #tpu.memory_space<vmem>>, vector<1x32x48xbf16>
    %55 = vector.shape_cast %54 : vector<1x32x48xbf16> to vector<32x48xbf16>
    %cst_31 = arith.constant dense<0.000000e+00> : vector<16x48xf32>
    %56 = tpu.matmul %53, %55, %cst_31 {dimension_numbers = #tpu.dot_dimension_numbers<[1], [0], [0], [1], [0, 0, 1, 1], [], []>} : vector<16x32xbf16>, vector<32x48xbf16>, vector<16x48xf32> -> vector<16x48xf32>
    %57 = arith.addf %51, %56 : vector<16x48xf32>
    %58 = vector.extract_strided_slice %43 {offsets = [32, 0], sizes = [16, 32], strides = [1, 1]} : vector<64x32xf32> to vector<16x32xf32>
    %59 = arith.truncf %58 : vector<16x32xf32> to vector<16x32xbf16>
    %c2_32 = arith.constant 2 : index
    %c0_33 = arith.constant 0 : index
    %c0_34 = arith.constant 0 : index
    %60 = vector.load %arg6[%c2_32, %c0_33, %c0_34] : memref<4x32x48xbf16, #tpu.memory_space<vmem>>, vector<1x32x48xbf16>
    %61 = vector.shape_cast %60 : vector<1x32x48xbf16> to vector<32x48xbf16>
    %cst_35 = arith.constant dense<0.000000e+00> : vector<16x48xf32>
    %62 = tpu.matmul %59, %61, %cst_35 {dimension_numbers = #tpu.dot_dimension_numbers<[1], [0], [0], [1], [0, 0, 1, 1], [], []>} : vector<16x32xbf16>, vector<32x48xbf16>, vector<16x48xf32> -> vector<16x48xf32>
    %63 = arith.addf %57, %62 : vector<16x48xf32>
    %64 = vector.extract_strided_slice %43 {offsets = [48, 0], sizes = [16, 32], strides = [1, 1]} : vector<64x32xf32> to vector<16x32xf32>
    %65 = arith.truncf %64 : vector<16x32xf32> to vector<16x32xbf16>
    %c3_36 = arith.constant 3 : index
    %c0_37 = arith.constant 0 : index
    %c0_38 = arith.constant 0 : index
    %66 = vector.load %arg6[%c3_36, %c0_37, %c0_38] : memref<4x32x48xbf16, #tpu.memory_space<vmem>>, vector<1x32x48xbf16>
    %67 = vector.shape_cast %66 : vector<1x32x48xbf16> to vector<32x48xbf16>
    %cst_39 = arith.constant dense<0.000000e+00> : vector<16x48xf32>
    %68 = tpu.matmul %65, %67, %cst_39 {dimension_numbers = #tpu.dot_dimension_numbers<[1], [0], [0], [1], [0, 0, 1, 1], [], []>} : vector<16x32xbf16>, vector<32x48xbf16>, vector<16x48xf32> -> vector<16x48xf32>
    %69 = arith.addf %63, %68 : vector<16x48xf32>
    %70 = arith.negf %69 : vector<16x48xf32>
    %71 = math.exp %70 : vector<16x48xf32>
    %cst_40 = arith.constant 1.000000e+00 : f32
    %72 = vector.broadcast %cst_40 : f32 to vector<16x48xf32>
    %73 = arith.addf %72, %71 : vector<16x48xf32>
    %74 = arith.divf %72, %73 : vector<16x48xf32>
    %75 = arith.mulf %69, %74 : vector<16x48xf32>
    %c0_41 = arith.constant 0 : index
    %c0_42 = arith.constant 0 : index
    %76 = vector.load %arg9[%c0_41, %c0_42] : memref<1x64xf32, #tpu.memory_space<vmem>>, vector<1x64xf32>
    %77 = vector.extract_strided_slice %75 {offsets = [0, 0], sizes = [4, 48], strides = [1, 1]} : vector<16x48xf32> to vector<4x48xf32>
    %78 = arith.truncf %77 : vector<4x48xf32> to vector<4x48xbf16>
    %c0_43 = arith.constant 0 : index
    %c0_44 = arith.constant 0 : index
    %c0_45 = arith.constant 0 : index
    %79 = vector.load %arg8[%c0_43, %c0_44, %c0_45] : memref<4x48x64xbf16, #tpu.memory_space<vmem>>, vector<1x48x64xbf16>
    %80 = vector.shape_cast %79 : vector<1x48x64xbf16> to vector<48x64xbf16>
    %cst_46 = arith.constant dense<0.000000e+00> : vector<4x64xf32>
    %81 = tpu.matmul %78, %80, %cst_46 {dimension_numbers = #tpu.dot_dimension_numbers<[1], [0], [0], [1], [0, 0, 1, 1], [], []>} : vector<4x48xbf16>, vector<48x64xbf16>, vector<4x64xf32> -> vector<4x64xf32>
    %82 = vector.broadcast %76 : vector<1x64xf32> to vector<4x64xf32>
    %83 = arith.addf %82, %81 : vector<4x64xf32>
    %84 = vector.extract_strided_slice %75 {offsets = [4, 0], sizes = [4, 48], strides = [1, 1]} : vector<16x48xf32> to vector<4x48xf32>
    %85 = arith.truncf %84 : vector<4x48xf32> to vector<4x48xbf16>
    %c1_47 = arith.constant 1 : index
    %c0_48 = arith.constant 0 : index
    %c0_49 = arith.constant 0 : index
    %86 = vector.load %arg8[%c1_47, %c0_48, %c0_49] : memref<4x48x64xbf16, #tpu.memory_space<vmem>>, vector<1x48x64xbf16>
    %87 = vector.shape_cast %86 : vector<1x48x64xbf16> to vector<48x64xbf16>
    %cst_50 = arith.constant dense<0.000000e+00> : vector<4x64xf32>
    %88 = tpu.matmul %85, %87, %cst_50 {dimension_numbers = #tpu.dot_dimension_numbers<[1], [0], [0], [1], [0, 0, 1, 1], [], []>} : vector<4x48xbf16>, vector<48x64xbf16>, vector<4x64xf32> -> vector<4x64xf32>
    %89 = arith.addf %83, %88 : vector<4x64xf32>
    %90 = vector.extract_strided_slice %75 {offsets = [8, 0], sizes = [4, 48], strides = [1, 1]} : vector<16x48xf32> to vector<4x48xf32>
    %91 = arith.truncf %90 : vector<4x48xf32> to vector<4x48xbf16>
    %c2_51 = arith.constant 2 : index
    %c0_52 = arith.constant 0 : index
    %c0_53 = arith.constant 0 : index
    %92 = vector.load %arg8[%c2_51, %c0_52, %c0_53] : memref<4x48x64xbf16, #tpu.memory_space<vmem>>, vector<1x48x64xbf16>
    %93 = vector.shape_cast %92 : vector<1x48x64xbf16> to vector<48x64xbf16>
    %cst_54 = arith.constant dense<0.000000e+00> : vector<4x64xf32>
    %94 = tpu.matmul %91, %93, %cst_54 {dimension_numbers = #tpu.dot_dimension_numbers<[1], [0], [0], [1], [0, 0, 1, 1], [], []>} : vector<4x48xbf16>, vector<48x64xbf16>, vector<4x64xf32> -> vector<4x64xf32>
    %95 = arith.addf %89, %94 : vector<4x64xf32>
    %96 = vector.extract_strided_slice %75 {offsets = [12, 0], sizes = [4, 48], strides = [1, 1]} : vector<16x48xf32> to vector<4x48xf32>
    %97 = arith.truncf %96 : vector<4x48xf32> to vector<4x48xbf16>
    %c3_55 = arith.constant 3 : index
    %c0_56 = arith.constant 0 : index
    %c0_57 = arith.constant 0 : index
    %98 = vector.load %arg8[%c3_55, %c0_56, %c0_57] : memref<4x48x64xbf16, #tpu.memory_space<vmem>>, vector<1x48x64xbf16>
    %99 = vector.shape_cast %98 : vector<1x48x64xbf16> to vector<48x64xbf16>
    %cst_58 = arith.constant dense<0.000000e+00> : vector<4x64xf32>
    %100 = tpu.matmul %97, %99, %cst_58 {dimension_numbers = #tpu.dot_dimension_numbers<[1], [0], [0], [1], [0, 0, 1, 1], [], []>} : vector<4x48xbf16>, vector<48x64xbf16>, vector<4x64xf32> -> vector<4x64xf32>
    %101 = arith.addf %95, %100 : vector<4x64xf32>
    %102 = arith.negf %101 : vector<4x64xf32>
    %103 = math.exp %102 : vector<4x64xf32>
    %cst_59 = arith.constant 1.000000e+00 : f32
    %104 = vector.broadcast %cst_59 : f32 to vector<4x64xf32>
    %105 = arith.addf %104, %103 : vector<4x64xf32>
    %106 = arith.divf %104, %105 : vector<4x64xf32>
    %107 = arith.mulf %101, %106 : vector<4x64xf32>
    %c0_60 = arith.constant 0 : index
    %c0_61 = arith.constant 0 : index
    %108 = vector.load %arg10[%c0_60, %c0_61] : memref<16x4xf32, #tpu.memory_space<vmem>>, vector<16x4xf32>
    %cst_62 = arith.constant dense<0.000000e+00> : vector<16x64xf32>
    %109 = tpu.matmul %108, %107, %cst_62 {dimension_numbers = #tpu.dot_dimension_numbers<[1], [0], [0], [1], [0, 0, 1, 1], [], []>} : vector<16x4xf32>, vector<4x64xf32>, vector<16x64xf32> -> vector<16x64xf32>
    %c0_63 = arith.constant 0 : index
    %c0_64 = arith.constant 0 : index
    %110 = vector.load %arg11[%c0_63, %c0_64] : memref<16x1xf32, #tpu.memory_space<vmem>>, vector<16x1xf32>
    %111 = vector.broadcast %110 : vector<16x1xf32> to vector<16x64xf32>
    %112 = arith.addf %109, %111 : vector<16x64xf32>
    %113 = arith.truncf %112 : vector<16x64xf32> to vector<16x64xbf16>
    %c0_65 = arith.constant 0 : index
    %c0_66 = arith.constant 0 : index
    %114 = vector.load %arg12[%c0_65, %c0_66] : memref<64x128xbf16, #tpu.memory_space<vmem>>, vector<64x128xbf16>
    %cst_67 = arith.constant dense<0.000000e+00> : vector<16x128xf32>
    %115 = tpu.matmul %113, %114, %cst_67 {dimension_numbers = #tpu.dot_dimension_numbers<[1], [0], [0], [1], [0, 0, 1, 1], [], []>} : vector<16x64xbf16>, vector<64x128xbf16>, vector<16x128xf32> -> vector<16x128xf32>
    %c0_68 = arith.constant 0 : index
    %c0_69 = arith.constant 0 : index
    %116 = vector.load %arg13[%c0_68, %c0_69] : memref<1x128xf32, #tpu.memory_space<vmem>>, vector<1x128xf32>
    %117 = vector.broadcast %116 : vector<1x128xf32> to vector<16x128xf32>
    %118 = arith.addf %115, %117 : vector<16x128xf32>
    %c0_70 = arith.constant 0 : index
    %c0_71 = arith.constant 0 : index
    %119 = vector.load %arg14[%c0_70, %c0_71] : memref<32x128xbf16, #tpu.memory_space<vmem>>, vector<32x128xbf16>
    %c0_72 = arith.constant 0 : index
    %c0_73 = arith.constant 0 : index
    %120 = vector.load %arg15[%c0_72, %c0_73] : memref<1x128xf32, #tpu.memory_space<vmem>>, vector<1x128xf32>
    %c0_74 = arith.constant 0 : index
    %c0_75 = arith.constant 0 : index
    %121 = vector.load %arg16[%c0_74, %c0_75] : memref<32x128xbf16, #tpu.memory_space<vmem>>, vector<32x128xbf16>
    %c0_76 = arith.constant 0 : index
    %c0_77 = arith.constant 0 : index
    %122 = vector.load %arg17[%c0_76, %c0_77] : memref<1x128xf32, #tpu.memory_space<vmem>>, vector<1x128xf32>
    %c0_78 = arith.constant 0 : index
    %c0_79 = arith.constant 0 : index
    %123 = vector.load %arg18[%c0_78, %c0_79] : memref<32x128xbf16, #tpu.memory_space<vmem>>, vector<32x128xbf16>
    %c0_80 = arith.constant 0 : index
    %c0_81 = arith.constant 0 : index
    %124 = vector.load %arg19[%c0_80, %c0_81] : memref<1x128xf32, #tpu.memory_space<vmem>>, vector<1x128xf32>
    %c0_82 = arith.constant 0 : index
    %c0_83 = arith.constant 0 : index
    %125 = vector.load %arg20[%c0_82, %c0_83] : memref<32x128xbf16, #tpu.memory_space<vmem>>, vector<32x128xbf16>
    %c0_84 = arith.constant 0 : index
    %c0_85 = arith.constant 0 : index
    %126 = vector.load %arg21[%c0_84, %c0_85] : memref<1x128xf32, #tpu.memory_space<vmem>>, vector<1x128xf32>
    %cst_86 = arith.constant 0.000000e+00 : f32
    %127 = vector.broadcast %cst_86 : f32 to vector<2x32xf32>
    %cst_87 = arith.constant 0.000000e+00 : f32
    %128 = vector.broadcast %cst_87 : f32 to vector<2x32xf32>
    %129 = vector.extract_strided_slice %118 {offsets = [0, 0], sizes = [2, 128], strides = [1, 1]} : vector<16x128xf32> to vector<2x128xf32>
    %130 = arith.truncf %127 : vector<2x32xf32> to vector<2x32xbf16>
    %cst_88 = arith.constant dense<0.000000e+00> : vector<2x128xf32>
    %131 = tpu.matmul %130, %119, %cst_88 {dimension_numbers = #tpu.dot_dimension_numbers<[1], [0], [0], [1], [0, 0, 1, 1], [], []>} : vector<2x32xbf16>, vector<32x128xbf16>, vector<2x128xf32> -> vector<2x128xf32>
    %132 = arith.addf %129, %131 : vector<2x128xf32>
    %133 = vector.broadcast %120 : vector<1x128xf32> to vector<2x128xf32>
    %134 = arith.addf %132, %133 : vector<2x128xf32>
    %135 = vector.extract_strided_slice %134 {offsets = [0, 0], sizes = [2, 32], strides = [1, 1]} : vector<2x128xf32> to vector<2x32xf32>
    %136 = arith.negf %135 : vector<2x32xf32>
    %137 = math.exp %136 : vector<2x32xf32>
    %cst_89 = arith.constant 1.000000e+00 : f32
    %138 = vector.broadcast %cst_89 : f32 to vector<2x32xf32>
    %139 = arith.addf %138, %137 : vector<2x32xf32>
    %140 = arith.divf %138, %139 : vector<2x32xf32>
    %141 = vector.extract_strided_slice %134 {offsets = [0, 32], sizes = [2, 32], strides = [1, 1]} : vector<2x128xf32> to vector<2x32xf32>
    %142 = arith.negf %141 : vector<2x32xf32>
    %143 = math.exp %142 : vector<2x32xf32>
    %cst_90 = arith.constant 1.000000e+00 : f32
    %144 = vector.broadcast %cst_90 : f32 to vector<2x32xf32>
    %145 = arith.addf %144, %143 : vector<2x32xf32>
    %146 = arith.divf %144, %145 : vector<2x32xf32>
    %147 = vector.extract_strided_slice %134 {offsets = [0, 64], sizes = [2, 32], strides = [1, 1]} : vector<2x128xf32> to vector<2x32xf32>
    %148 = vector.extract_strided_slice %134 {offsets = [0, 96], sizes = [2, 32], strides = [1, 1]} : vector<2x128xf32> to vector<2x32xf32>
    %149 = arith.mulf %140, %148 : vector<2x32xf32>
    %150 = arith.addf %147, %149 : vector<2x32xf32>
    %151 = math.tanh %150 : vector<2x32xf32>
    %cst_91 = arith.constant 1.000000e+00 : f32
    %152 = vector.broadcast %cst_91 : f32 to vector<2x32xf32>
    %153 = arith.subf %152, %146 : vector<2x32xf32>
    %154 = arith.mulf %153, %151 : vector<2x32xf32>
    %155 = arith.mulf %146, %127 : vector<2x32xf32>
    %156 = arith.addf %154, %155 : vector<2x32xf32>
    %157 = vector.extract_strided_slice %118 {offsets = [2, 0], sizes = [2, 128], strides = [1, 1]} : vector<16x128xf32> to vector<2x128xf32>
    %158 = arith.truncf %156 : vector<2x32xf32> to vector<2x32xbf16>
    %cst_92 = arith.constant dense<0.000000e+00> : vector<2x128xf32>
    %159 = tpu.matmul %158, %119, %cst_92 {dimension_numbers = #tpu.dot_dimension_numbers<[1], [0], [0], [1], [0, 0, 1, 1], [], []>} : vector<2x32xbf16>, vector<32x128xbf16>, vector<2x128xf32> -> vector<2x128xf32>
    %160 = arith.addf %157, %159 : vector<2x128xf32>
    %161 = vector.broadcast %120 : vector<1x128xf32> to vector<2x128xf32>
    %162 = arith.addf %160, %161 : vector<2x128xf32>
    %163 = vector.extract_strided_slice %162 {offsets = [0, 0], sizes = [2, 32], strides = [1, 1]} : vector<2x128xf32> to vector<2x32xf32>
    %164 = arith.negf %163 : vector<2x32xf32>
    %165 = math.exp %164 : vector<2x32xf32>
    %cst_93 = arith.constant 1.000000e+00 : f32
    %166 = vector.broadcast %cst_93 : f32 to vector<2x32xf32>
    %167 = arith.addf %166, %165 : vector<2x32xf32>
    %168 = arith.divf %166, %167 : vector<2x32xf32>
    %169 = vector.extract_strided_slice %162 {offsets = [0, 32], sizes = [2, 32], strides = [1, 1]} : vector<2x128xf32> to vector<2x32xf32>
    %170 = arith.negf %169 : vector<2x32xf32>
    %171 = math.exp %170 : vector<2x32xf32>
    %cst_94 = arith.constant 1.000000e+00 : f32
    %172 = vector.broadcast %cst_94 : f32 to vector<2x32xf32>
    %173 = arith.addf %172, %171 : vector<2x32xf32>
    %174 = arith.divf %172, %173 : vector<2x32xf32>
    %175 = vector.extract_strided_slice %162 {offsets = [0, 64], sizes = [2, 32], strides = [1, 1]} : vector<2x128xf32> to vector<2x32xf32>
    %176 = vector.extract_strided_slice %162 {offsets = [0, 96], sizes = [2, 32], strides = [1, 1]} : vector<2x128xf32> to vector<2x32xf32>
    %177 = arith.mulf %168, %176 : vector<2x32xf32>
    %178 = arith.addf %175, %177 : vector<2x32xf32>
    %179 = math.tanh %178 : vector<2x32xf32>
    %cst_95 = arith.constant 1.000000e+00 : f32
    %180 = vector.broadcast %cst_95 : f32 to vector<2x32xf32>
    %181 = arith.subf %180, %174 : vector<2x32xf32>
    %182 = arith.mulf %181, %179 : vector<2x32xf32>
    %183 = arith.mulf %174, %156 : vector<2x32xf32>
    %184 = arith.addf %182, %183 : vector<2x32xf32>
    %185 = arith.truncf %156 : vector<2x32xf32> to vector<2x32xbf16>
    %cst_96 = arith.constant dense<0.000000e+00> : vector<2x128xf32>
    %186 = tpu.matmul %185, %121, %cst_96 {dimension_numbers = #tpu.dot_dimension_numbers<[1], [0], [0], [1], [0, 0, 1, 1], [], []>} : vector<2x32xbf16>, vector<32x128xbf16>, vector<2x128xf32> -> vector<2x128xf32>
    %187 = vector.broadcast %122 : vector<1x128xf32> to vector<2x128xf32>
    %188 = arith.addf %186, %187 : vector<2x128xf32>
    %189 = arith.truncf %128 : vector<2x32xf32> to vector<2x32xbf16>
    %cst_97 = arith.constant dense<0.000000e+00> : vector<2x128xf32>
    %190 = tpu.matmul %189, %123, %cst_97 {dimension_numbers = #tpu.dot_dimension_numbers<[1], [0], [0], [1], [0, 0, 1, 1], [], []>} : vector<2x32xbf16>, vector<32x128xbf16>, vector<2x128xf32> -> vector<2x128xf32>
    %191 = arith.addf %188, %190 : vector<2x128xf32>
    %192 = vector.broadcast %124 : vector<1x128xf32> to vector<2x128xf32>
    %193 = arith.addf %191, %192 : vector<2x128xf32>
    %194 = vector.extract_strided_slice %193 {offsets = [0, 0], sizes = [2, 32], strides = [1, 1]} : vector<2x128xf32> to vector<2x32xf32>
    %195 = arith.negf %194 : vector<2x32xf32>
    %196 = math.exp %195 : vector<2x32xf32>
    %cst_98 = arith.constant 1.000000e+00 : f32
    %197 = vector.broadcast %cst_98 : f32 to vector<2x32xf32>
    %198 = arith.addf %197, %196 : vector<2x32xf32>
    %199 = arith.divf %197, %198 : vector<2x32xf32>
    %200 = vector.extract_strided_slice %193 {offsets = [0, 32], sizes = [2, 32], strides = [1, 1]} : vector<2x128xf32> to vector<2x32xf32>
    %201 = arith.negf %200 : vector<2x32xf32>
    %202 = math.exp %201 : vector<2x32xf32>
    %cst_99 = arith.constant 1.000000e+00 : f32
    %203 = vector.broadcast %cst_99 : f32 to vector<2x32xf32>
    %204 = arith.addf %203, %202 : vector<2x32xf32>
    %205 = arith.divf %203, %204 : vector<2x32xf32>
    %206 = vector.extract_strided_slice %193 {offsets = [0, 64], sizes = [2, 32], strides = [1, 1]} : vector<2x128xf32> to vector<2x32xf32>
    %207 = vector.extract_strided_slice %193 {offsets = [0, 96], sizes = [2, 32], strides = [1, 1]} : vector<2x128xf32> to vector<2x32xf32>
    %208 = arith.mulf %199, %207 : vector<2x32xf32>
    %209 = arith.addf %206, %208 : vector<2x32xf32>
    %210 = math.tanh %209 : vector<2x32xf32>
    %cst_100 = arith.constant 1.000000e+00 : f32
    %211 = vector.broadcast %cst_100 : f32 to vector<2x32xf32>
    %212 = arith.subf %211, %205 : vector<2x32xf32>
    %213 = arith.mulf %212, %210 : vector<2x32xf32>
    %214 = arith.mulf %205, %128 : vector<2x32xf32>
    %215 = arith.addf %213, %214 : vector<2x32xf32>
    %216 = arith.truncf %215 : vector<2x32xf32> to vector<2x32xbf16>
    %cst_101 = arith.constant dense<0.000000e+00> : vector<2x128xf32>
    %217 = tpu.matmul %216, %125, %cst_101 {dimension_numbers = #tpu.dot_dimension_numbers<[1], [0], [0], [1], [0, 0, 1, 1], [], []>} : vector<2x32xbf16>, vector<32x128xbf16>, vector<2x128xf32> -> vector<2x128xf32>
    %218 = vector.broadcast %126 : vector<1x128xf32> to vector<2x128xf32>
    %219 = arith.addf %217, %218 : vector<2x128xf32>
    %c0_102 = arith.constant 0 : index
    %c0_103 = arith.constant 0 : index
    %220 = vector.load %arg22[%c0_102, %c0_103] : memref<16x128xf32, #tpu.memory_space<vmem>>, vector<2x128xf32>
    tpu.vector_store %arg22[%c0_102, %c0_103], %219 {strides = array<i32>} : memref<16x128xf32, #tpu.memory_space<vmem>>, vector<2x128xf32>,
    %221 = vector.extract_strided_slice %118 {offsets = [4, 0], sizes = [2, 128], strides = [1, 1]} : vector<16x128xf32> to vector<2x128xf32>
    %222 = arith.truncf %184 : vector<2x32xf32> to vector<2x32xbf16>
    %cst_104 = arith.constant dense<0.000000e+00> : vector<2x128xf32>
    %223 = tpu.matmul %222, %119, %cst_104 {dimension_numbers = #tpu.dot_dimension_numbers<[1], [0], [0], [1], [0, 0, 1, 1], [], []>} : vector<2x32xbf16>, vector<32x128xbf16>, vector<2x128xf32> -> vector<2x128xf32>
    %224 = arith.addf %221, %223 : vector<2x128xf32>
    %225 = vector.broadcast %120 : vector<1x128xf32> to vector<2x128xf32>
    %226 = arith.addf %224, %225 : vector<2x128xf32>
    %227 = vector.extract_strided_slice %226 {offsets = [0, 0], sizes = [2, 32], strides = [1, 1]} : vector<2x128xf32> to vector<2x32xf32>
    %228 = arith.negf %227 : vector<2x32xf32>
    %229 = math.exp %228 : vector<2x32xf32>
    %cst_105 = arith.constant 1.000000e+00 : f32
    %230 = vector.broadcast %cst_105 : f32 to vector<2x32xf32>
    %231 = arith.addf %230, %229 : vector<2x32xf32>
    %232 = arith.divf %230, %231 : vector<2x32xf32>
    %233 = vector.extract_strided_slice %226 {offsets = [0, 32], sizes = [2, 32], strides = [1, 1]} : vector<2x128xf32> to vector<2x32xf32>
    %234 = arith.negf %233 : vector<2x32xf32>
    %235 = math.exp %234 : vector<2x32xf32>
    %cst_106 = arith.constant 1.000000e+00 : f32
    %236 = vector.broadcast %cst_106 : f32 to vector<2x32xf32>
    %237 = arith.addf %236, %235 : vector<2x32xf32>
    %238 = arith.divf %236, %237 : vector<2x32xf32>
    %239 = vector.extract_strided_slice %226 {offsets = [0, 64], sizes = [2, 32], strides = [1, 1]} : vector<2x128xf32> to vector<2x32xf32>
    %240 = vector.extract_strided_slice %226 {offsets = [0, 96], sizes = [2, 32], strides = [1, 1]} : vector<2x128xf32> to vector<2x32xf32>
    %241 = arith.mulf %232, %240 : vector<2x32xf32>
    %242 = arith.addf %239, %241 : vector<2x32xf32>
    %243 = math.tanh %242 : vector<2x32xf32>
    %cst_107 = arith.constant 1.000000e+00 : f32
    %244 = vector.broadcast %cst_107 : f32 to vector<2x32xf32>
    %245 = arith.subf %244, %238 : vector<2x32xf32>
    %246 = arith.mulf %245, %243 : vector<2x32xf32>
    %247 = arith.mulf %238, %184 : vector<2x32xf32>
    %248 = arith.addf %246, %247 : vector<2x32xf32>
    %249 = arith.truncf %184 : vector<2x32xf32> to vector<2x32xbf16>
    %cst_108 = arith.constant dense<0.000000e+00> : vector<2x128xf32>
    %250 = tpu.matmul %249, %121, %cst_108 {dimension_numbers = #tpu.dot_dimension_numbers<[1], [0], [0], [1], [0, 0, 1, 1], [], []>} : vector<2x32xbf16>, vector<32x128xbf16>, vector<2x128xf32> -> vector<2x128xf32>
    %251 = vector.broadcast %122 : vector<1x128xf32> to vector<2x128xf32>
    %252 = arith.addf %250, %251 : vector<2x128xf32>
    %253 = arith.truncf %215 : vector<2x32xf32> to vector<2x32xbf16>
    %cst_109 = arith.constant dense<0.000000e+00> : vector<2x128xf32>
    %254 = tpu.matmul %253, %123, %cst_109 {dimension_numbers = #tpu.dot_dimension_numbers<[1], [0], [0], [1], [0, 0, 1, 1], [], []>} : vector<2x32xbf16>, vector<32x128xbf16>, vector<2x128xf32> -> vector<2x128xf32>
    %255 = arith.addf %252, %254 : vector<2x128xf32>
    %256 = vector.broadcast %124 : vector<1x128xf32> to vector<2x128xf32>
    %257 = arith.addf %255, %256 : vector<2x128xf32>
    %258 = vector.extract_strided_slice %257 {offsets = [0, 0], sizes = [2, 32], strides = [1, 1]} : vector<2x128xf32> to vector<2x32xf32>
    %259 = arith.negf %258 : vector<2x32xf32>
    %260 = math.exp %259 : vector<2x32xf32>
    %cst_110 = arith.constant 1.000000e+00 : f32
    %261 = vector.broadcast %cst_110 : f32 to vector<2x32xf32>
    %262 = arith.addf %261, %260 : vector<2x32xf32>
    %263 = arith.divf %261, %262 : vector<2x32xf32>
    %264 = vector.extract_strided_slice %257 {offsets = [0, 32], sizes = [2, 32], strides = [1, 1]} : vector<2x128xf32> to vector<2x32xf32>
    %265 = arith.negf %264 : vector<2x32xf32>
    %266 = math.exp %265 : vector<2x32xf32>
    %cst_111 = arith.constant 1.000000e+00 : f32
    %267 = vector.broadcast %cst_111 : f32 to vector<2x32xf32>
    %268 = arith.addf %267, %266 : vector<2x32xf32>
    %269 = arith.divf %267, %268 : vector<2x32xf32>
    %270 = vector.extract_strided_slice %257 {offsets = [0, 64], sizes = [2, 32], strides = [1, 1]} : vector<2x128xf32> to vector<2x32xf32>
    %271 = vector.extract_strided_slice %257 {offsets = [0, 96], sizes = [2, 32], strides = [1, 1]} : vector<2x128xf32> to vector<2x32xf32>
    %272 = arith.mulf %263, %271 : vector<2x32xf32>
    %273 = arith.addf %270, %272 : vector<2x32xf32>
    %274 = math.tanh %273 : vector<2x32xf32>
    %cst_112 = arith.constant 1.000000e+00 : f32
    %275 = vector.broadcast %cst_112 : f32 to vector<2x32xf32>
    %276 = arith.subf %275, %269 : vector<2x32xf32>
    %277 = arith.mulf %276, %274 : vector<2x32xf32>
    %278 = arith.mulf %269, %215 : vector<2x32xf32>
    %279 = arith.addf %277, %278 : vector<2x32xf32>
    %280 = arith.truncf %279 : vector<2x32xf32> to vector<2x32xbf16>
    %cst_113 = arith.constant dense<0.000000e+00> : vector<2x128xf32>
    %281 = tpu.matmul %280, %125, %cst_113 {dimension_numbers = #tpu.dot_dimension_numbers<[1], [0], [0], [1], [0, 0, 1, 1], [], []>} : vector<2x32xbf16>, vector<32x128xbf16>, vector<2x128xf32> -> vector<2x128xf32>
    %282 = vector.broadcast %126 : vector<1x128xf32> to vector<2x128xf32>
    %283 = arith.addf %281, %282 : vector<2x128xf32>
    %c2_114 = arith.constant 2 : index
    %c0_115 = arith.constant 0 : index
    %284 = vector.load %arg22[%c2_114, %c0_115] : memref<16x128xf32, #tpu.memory_space<vmem>>, vector<2x128xf32>
    tpu.vector_store %arg22[%c2_114, %c0_115], %283 {strides = array<i32>} : memref<16x128xf32, #tpu.memory_space<vmem>>, vector<2x128xf32>,
    %285 = vector.extract_strided_slice %118 {offsets = [6, 0], sizes = [2, 128], strides = [1, 1]} : vector<16x128xf32> to vector<2x128xf32>
    %286 = arith.truncf %248 : vector<2x32xf32> to vector<2x32xbf16>
    %cst_116 = arith.constant dense<0.000000e+00> : vector<2x128xf32>
    %287 = tpu.matmul %286, %119, %cst_116 {dimension_numbers = #tpu.dot_dimension_numbers<[1], [0], [0], [1], [0, 0, 1, 1], [], []>} : vector<2x32xbf16>, vector<32x128xbf16>, vector<2x128xf32> -> vector<2x128xf32>
    %288 = arith.addf %285, %287 : vector<2x128xf32>
    %289 = vector.broadcast %120 : vector<1x128xf32> to vector<2x128xf32>
    %290 = arith.addf %288, %289 : vector<2x128xf32>
    %291 = vector.extract_strided_slice %290 {offsets = [0, 0], sizes = [2, 32], strides = [1, 1]} : vector<2x128xf32> to vector<2x32xf32>
    %292 = arith.negf %291 : vector<2x32xf32>
    %293 = math.exp %292 : vector<2x32xf32>
    %cst_117 = arith.constant 1.000000e+00 : f32
    %294 = vector.broadcast %cst_117 : f32 to vector<2x32xf32>
    %295 = arith.addf %294, %293 : vector<2x32xf32>
    %296 = arith.divf %294, %295 : vector<2x32xf32>
    %297 = vector.extract_strided_slice %290 {offsets = [0, 32], sizes = [2, 32], strides = [1, 1]} : vector<2x128xf32> to vector<2x32xf32>
    %298 = arith.negf %297 : vector<2x32xf32>
    %299 = math.exp %298 : vector<2x32xf32>
    %cst_118 = arith.constant 1.000000e+00 : f32
    %300 = vector.broadcast %cst_118 : f32 to vector<2x32xf32>
    %301 = arith.addf %300, %299 : vector<2x32xf32>
    %302 = arith.divf %300, %301 : vector<2x32xf32>
    %303 = vector.extract_strided_slice %290 {offsets = [0, 64], sizes = [2, 32], strides = [1, 1]} : vector<2x128xf32> to vector<2x32xf32>
    %304 = vector.extract_strided_slice %290 {offsets = [0, 96], sizes = [2, 32], strides = [1, 1]} : vector<2x128xf32> to vector<2x32xf32>
    %305 = arith.mulf %296, %304 : vector<2x32xf32>
    %306 = arith.addf %303, %305 : vector<2x32xf32>
    %307 = math.tanh %306 : vector<2x32xf32>
    %cst_119 = arith.constant 1.000000e+00 : f32
    %308 = vector.broadcast %cst_119 : f32 to vector<2x32xf32>
    %309 = arith.subf %308, %302 : vector<2x32xf32>
    %310 = arith.mulf %309, %307 : vector<2x32xf32>
    %311 = arith.mulf %302, %248 : vector<2x32xf32>
    %312 = arith.addf %310, %311 : vector<2x32xf32>
    %313 = arith.truncf %248 : vector<2x32xf32> to vector<2x32xbf16>
    %cst_120 = arith.constant dense<0.000000e+00> : vector<2x128xf32>
    %314 = tpu.matmul %313, %121, %cst_120 {dimension_numbers = #tpu.dot_dimension_numbers<[1], [0], [0], [1], [0, 0, 1, 1], [], []>} : vector<2x32xbf16>, vector<32x128xbf16>, vector<2x128xf32> -> vector<2x128xf32>
    %315 = vector.broadcast %122 : vector<1x128xf32> to vector<2x128xf32>
    %316 = arith.addf %314, %315 : vector<2x128xf32>
    %317 = arith.truncf %279 : vector<2x32xf32> to vector<2x32xbf16>
    %cst_121 = arith.constant dense<0.000000e+00> : vector<2x128xf32>
    %318 = tpu.matmul %317, %123, %cst_121 {dimension_numbers = #tpu.dot_dimension_numbers<[1], [0], [0], [1], [0, 0, 1, 1], [], []>} : vector<2x32xbf16>, vector<32x128xbf16>, vector<2x128xf32> -> vector<2x128xf32>
    %319 = arith.addf %316, %318 : vector<2x128xf32>
    %320 = vector.broadcast %124 : vector<1x128xf32> to vector<2x128xf32>
    %321 = arith.addf %319, %320 : vector<2x128xf32>
    %322 = vector.extract_strided_slice %321 {offsets = [0, 0], sizes = [2, 32], strides = [1, 1]} : vector<2x128xf32> to vector<2x32xf32>
    %323 = arith.negf %322 : vector<2x32xf32>
    %324 = math.exp %323 : vector<2x32xf32>
    %cst_122 = arith.constant 1.000000e+00 : f32
    %325 = vector.broadcast %cst_122 : f32 to vector<2x32xf32>
    %326 = arith.addf %325, %324 : vector<2x32xf32>
    %327 = arith.divf %325, %326 : vector<2x32xf32>
    %328 = vector.extract_strided_slice %321 {offsets = [0, 32], sizes = [2, 32], strides = [1, 1]} : vector<2x128xf32> to vector<2x32xf32>
    %329 = arith.negf %328 : vector<2x32xf32>
    %330 = math.exp %329 : vector<2x32xf32>
    %cst_123 = arith.constant 1.000000e+00 : f32
    %331 = vector.broadcast %cst_123 : f32 to vector<2x32xf32>
    %332 = arith.addf %331, %330 : vector<2x32xf32>
    %333 = arith.divf %331, %332 : vector<2x32xf32>
    %334 = vector.extract_strided_slice %321 {offsets = [0, 64], sizes = [2, 32], strides = [1, 1]} : vector<2x128xf32> to vector<2x32xf32>
    %335 = vector.extract_strided_slice %321 {offsets = [0, 96], sizes = [2, 32], strides = [1, 1]} : vector<2x128xf32> to vector<2x32xf32>
    %336 = arith.mulf %327, %335 : vector<2x32xf32>
    %337 = arith.addf %334, %336 : vector<2x32xf32>
    %338 = math.tanh %337 : vector<2x32xf32>
    %cst_124 = arith.constant 1.000000e+00 : f32
    %339 = vector.broadcast %cst_124 : f32 to vector<2x32xf32>
    %340 = arith.subf %339, %333 : vector<2x32xf32>
    %341 = arith.mulf %340, %338 : vector<2x32xf32>
    %342 = arith.mulf %333, %279 : vector<2x32xf32>
    %343 = arith.addf %341, %342 : vector<2x32xf32>
    %344 = arith.truncf %343 : vector<2x32xf32> to vector<2x32xbf16>
    %cst_125 = arith.constant dense<0.000000e+00> : vector<2x128xf32>
    %345 = tpu.matmul %344, %125, %cst_125 {dimension_numbers = #tpu.dot_dimension_numbers<[1], [0], [0], [1], [0, 0, 1, 1], [], []>} : vector<2x32xbf16>, vector<32x128xbf16>, vector<2x128xf32> -> vector<2x128xf32>
    %346 = vector.broadcast %126 : vector<1x128xf32> to vector<2x128xf32>
    %347 = arith.addf %345, %346 : vector<2x128xf32>
    %c4 = arith.constant 4 : index
    %c0_126 = arith.constant 0 : index
    %348 = vector.load %arg22[%c4, %c0_126] : memref<16x128xf32, #tpu.memory_space<vmem>>, vector<2x128xf32>
    tpu.vector_store %arg22[%c4, %c0_126], %347 {strides = array<i32>} : memref<16x128xf32, #tpu.memory_space<vmem>>, vector<2x128xf32>,
    %349 = vector.extract_strided_slice %118 {offsets = [8, 0], sizes = [2, 128], strides = [1, 1]} : vector<16x128xf32> to vector<2x128xf32>
    %350 = arith.truncf %312 : vector<2x32xf32> to vector<2x32xbf16>
    %cst_127 = arith.constant dense<0.000000e+00> : vector<2x128xf32>
    %351 = tpu.matmul %350, %119, %cst_127 {dimension_numbers = #tpu.dot_dimension_numbers<[1], [0], [0], [1], [0, 0, 1, 1], [], []>} : vector<2x32xbf16>, vector<32x128xbf16>, vector<2x128xf32> -> vector<2x128xf32>
    %352 = arith.addf %349, %351 : vector<2x128xf32>
    %353 = vector.broadcast %120 : vector<1x128xf32> to vector<2x128xf32>
    %354 = arith.addf %352, %353 : vector<2x128xf32>
    %355 = vector.extract_strided_slice %354 {offsets = [0, 0], sizes = [2, 32], strides = [1, 1]} : vector<2x128xf32> to vector<2x32xf32>
    %356 = arith.negf %355 : vector<2x32xf32>
    %357 = math.exp %356 : vector<2x32xf32>
    %cst_128 = arith.constant 1.000000e+00 : f32
    %358 = vector.broadcast %cst_128 : f32 to vector<2x32xf32>
    %359 = arith.addf %358, %357 : vector<2x32xf32>
    %360 = arith.divf %358, %359 : vector<2x32xf32>
    %361 = vector.extract_strided_slice %354 {offsets = [0, 32], sizes = [2, 32], strides = [1, 1]} : vector<2x128xf32> to vector<2x32xf32>
    %362 = arith.negf %361 : vector<2x32xf32>
    %363 = math.exp %362 : vector<2x32xf32>
    %cst_129 = arith.constant 1.000000e+00 : f32
    %364 = vector.broadcast %cst_129 : f32 to vector<2x32xf32>
    %365 = arith.addf %364, %363 : vector<2x32xf32>
    %366 = arith.divf %364, %365 : vector<2x32xf32>
    %367 = vector.extract_strided_slice %354 {offsets = [0, 64], sizes = [2, 32], strides = [1, 1]} : vector<2x128xf32> to vector<2x32xf32>
    %368 = vector.extract_strided_slice %354 {offsets = [0, 96], sizes = [2, 32], strides = [1, 1]} : vector<2x128xf32> to vector<2x32xf32>
    %369 = arith.mulf %360, %368 : vector<2x32xf32>
    %370 = arith.addf %367, %369 : vector<2x32xf32>
    %371 = math.tanh %370 : vector<2x32xf32>
    %cst_130 = arith.constant 1.000000e+00 : f32
    %372 = vector.broadcast %cst_130 : f32 to vector<2x32xf32>
    %373 = arith.subf %372, %366 : vector<2x32xf32>
    %374 = arith.mulf %373, %371 : vector<2x32xf32>
    %375 = arith.mulf %366, %312 : vector<2x32xf32>
    %376 = arith.addf %374, %375 : vector<2x32xf32>
    %377 = arith.truncf %312 : vector<2x32xf32> to vector<2x32xbf16>
    %cst_131 = arith.constant dense<0.000000e+00> : vector<2x128xf32>
    %378 = tpu.matmul %377, %121, %cst_131 {dimension_numbers = #tpu.dot_dimension_numbers<[1], [0], [0], [1], [0, 0, 1, 1], [], []>} : vector<2x32xbf16>, vector<32x128xbf16>, vector<2x128xf32> -> vector<2x128xf32>
    %379 = vector.broadcast %122 : vector<1x128xf32> to vector<2x128xf32>
    %380 = arith.addf %378, %379 : vector<2x128xf32>
    %381 = arith.truncf %343 : vector<2x32xf32> to vector<2x32xbf16>
    %cst_132 = arith.constant dense<0.000000e+00> : vector<2x128xf32>
    %382 = tpu.matmul %381, %123, %cst_132 {dimension_numbers = #tpu.dot_dimension_numbers<[1], [0], [0], [1], [0, 0, 1, 1], [], []>} : vector<2x32xbf16>, vector<32x128xbf16>, vector<2x128xf32> -> vector<2x128xf32>
    %383 = arith.addf %380, %382 : vector<2x128xf32>
    %384 = vector.broadcast %124 : vector<1x128xf32> to vector<2x128xf32>
    %385 = arith.addf %383, %384 : vector<2x128xf32>
    %386 = vector.extract_strided_slice %385 {offsets = [0, 0], sizes = [2, 32], strides = [1, 1]} : vector<2x128xf32> to vector<2x32xf32>
    %387 = arith.negf %386 : vector<2x32xf32>
    %388 = math.exp %387 : vector<2x32xf32>
    %cst_133 = arith.constant 1.000000e+00 : f32
    %389 = vector.broadcast %cst_133 : f32 to vector<2x32xf32>
    %390 = arith.addf %389, %388 : vector<2x32xf32>
    %391 = arith.divf %389, %390 : vector<2x32xf32>
    %392 = vector.extract_strided_slice %385 {offsets = [0, 32], sizes = [2, 32], strides = [1, 1]} : vector<2x128xf32> to vector<2x32xf32>
    %393 = arith.negf %392 : vector<2x32xf32>
    %394 = math.exp %393 : vector<2x32xf32>
    %cst_134 = arith.constant 1.000000e+00 : f32
    %395 = vector.broadcast %cst_134 : f32 to vector<2x32xf32>
    %396 = arith.addf %395, %394 : vector<2x32xf32>
    %397 = arith.divf %395, %396 : vector<2x32xf32>
    %398 = vector.extract_strided_slice %385 {offsets = [0, 64], sizes = [2, 32], strides = [1, 1]} : vector<2x128xf32> to vector<2x32xf32>
    %399 = vector.extract_strided_slice %385 {offsets = [0, 96], sizes = [2, 32], strides = [1, 1]} : vector<2x128xf32> to vector<2x32xf32>
    %400 = arith.mulf %391, %399 : vector<2x32xf32>
    %401 = arith.addf %398, %400 : vector<2x32xf32>
    %402 = math.tanh %401 : vector<2x32xf32>
    %cst_135 = arith.constant 1.000000e+00 : f32
    %403 = vector.broadcast %cst_135 : f32 to vector<2x32xf32>
    %404 = arith.subf %403, %397 : vector<2x32xf32>
    %405 = arith.mulf %404, %402 : vector<2x32xf32>
    %406 = arith.mulf %397, %343 : vector<2x32xf32>
    %407 = arith.addf %405, %406 : vector<2x32xf32>
    %408 = arith.truncf %407 : vector<2x32xf32> to vector<2x32xbf16>
    %cst_136 = arith.constant dense<0.000000e+00> : vector<2x128xf32>
    %409 = tpu.matmul %408, %125, %cst_136 {dimension_numbers = #tpu.dot_dimension_numbers<[1], [0], [0], [1], [0, 0, 1, 1], [], []>} : vector<2x32xbf16>, vector<32x128xbf16>, vector<2x128xf32> -> vector<2x128xf32>
    %410 = vector.broadcast %126 : vector<1x128xf32> to vector<2x128xf32>
    %411 = arith.addf %409, %410 : vector<2x128xf32>
    %c6 = arith.constant 6 : index
    %c0_137 = arith.constant 0 : index
    %412 = vector.load %arg22[%c6, %c0_137] : memref<16x128xf32, #tpu.memory_space<vmem>>, vector<2x128xf32>
    tpu.vector_store %arg22[%c6, %c0_137], %411 {strides = array<i32>} : memref<16x128xf32, #tpu.memory_space<vmem>>, vector<2x128xf32>,
    %413 = vector.extract_strided_slice %118 {offsets = [10, 0], sizes = [2, 128], strides = [1, 1]} : vector<16x128xf32> to vector<2x128xf32>
    %414 = arith.truncf %376 : vector<2x32xf32> to vector<2x32xbf16>
    %cst_138 = arith.constant dense<0.000000e+00> : vector<2x128xf32>
    %415 = tpu.matmul %414, %119, %cst_138 {dimension_numbers = #tpu.dot_dimension_numbers<[1], [0], [0], [1], [0, 0, 1, 1], [], []>} : vector<2x32xbf16>, vector<32x128xbf16>, vector<2x128xf32> -> vector<2x128xf32>
    %416 = arith.addf %413, %415 : vector<2x128xf32>
    %417 = vector.broadcast %120 : vector<1x128xf32> to vector<2x128xf32>
    %418 = arith.addf %416, %417 : vector<2x128xf32>
    %419 = vector.extract_strided_slice %418 {offsets = [0, 0], sizes = [2, 32], strides = [1, 1]} : vector<2x128xf32> to vector<2x32xf32>
    %420 = arith.negf %419 : vector<2x32xf32>
    %421 = math.exp %420 : vector<2x32xf32>
    %cst_139 = arith.constant 1.000000e+00 : f32
    %422 = vector.broadcast %cst_139 : f32 to vector<2x32xf32>
    %423 = arith.addf %422, %421 : vector<2x32xf32>
    %424 = arith.divf %422, %423 : vector<2x32xf32>
    %425 = vector.extract_strided_slice %418 {offsets = [0, 32], sizes = [2, 32], strides = [1, 1]} : vector<2x128xf32> to vector<2x32xf32>
    %426 = arith.negf %425 : vector<2x32xf32>
    %427 = math.exp %426 : vector<2x32xf32>
    %cst_140 = arith.constant 1.000000e+00 : f32
    %428 = vector.broadcast %cst_140 : f32 to vector<2x32xf32>
    %429 = arith.addf %428, %427 : vector<2x32xf32>
    %430 = arith.divf %428, %429 : vector<2x32xf32>
    %431 = vector.extract_strided_slice %418 {offsets = [0, 64], sizes = [2, 32], strides = [1, 1]} : vector<2x128xf32> to vector<2x32xf32>
    %432 = vector.extract_strided_slice %418 {offsets = [0, 96], sizes = [2, 32], strides = [1, 1]} : vector<2x128xf32> to vector<2x32xf32>
    %433 = arith.mulf %424, %432 : vector<2x32xf32>
    %434 = arith.addf %431, %433 : vector<2x32xf32>
    %435 = math.tanh %434 : vector<2x32xf32>
    %cst_141 = arith.constant 1.000000e+00 : f32
    %436 = vector.broadcast %cst_141 : f32 to vector<2x32xf32>
    %437 = arith.subf %436, %430 : vector<2x32xf32>
    %438 = arith.mulf %437, %435 : vector<2x32xf32>
    %439 = arith.mulf %430, %376 : vector<2x32xf32>
    %440 = arith.addf %438, %439 : vector<2x32xf32>
    %441 = arith.truncf %376 : vector<2x32xf32> to vector<2x32xbf16>
    %cst_142 = arith.constant dense<0.000000e+00> : vector<2x128xf32>
    %442 = tpu.matmul %441, %121, %cst_142 {dimension_numbers = #tpu.dot_dimension_numbers<[1], [0], [0], [1], [0, 0, 1, 1], [], []>} : vector<2x32xbf16>, vector<32x128xbf16>, vector<2x128xf32> -> vector<2x128xf32>
    %443 = vector.broadcast %122 : vector<1x128xf32> to vector<2x128xf32>
    %444 = arith.addf %442, %443 : vector<2x128xf32>
    %445 = arith.truncf %407 : vector<2x32xf32> to vector<2x32xbf16>
    %cst_143 = arith.constant dense<0.000000e+00> : vector<2x128xf32>
    %446 = tpu.matmul %445, %123, %cst_143 {dimension_numbers = #tpu.dot_dimension_numbers<[1], [0], [0], [1], [0, 0, 1, 1], [], []>} : vector<2x32xbf16>, vector<32x128xbf16>, vector<2x128xf32> -> vector<2x128xf32>
    %447 = arith.addf %444, %446 : vector<2x128xf32>
    %448 = vector.broadcast %124 : vector<1x128xf32> to vector<2x128xf32>
    %449 = arith.addf %447, %448 : vector<2x128xf32>
    %450 = vector.extract_strided_slice %449 {offsets = [0, 0], sizes = [2, 32], strides = [1, 1]} : vector<2x128xf32> to vector<2x32xf32>
    %451 = arith.negf %450 : vector<2x32xf32>
    %452 = math.exp %451 : vector<2x32xf32>
    %cst_144 = arith.constant 1.000000e+00 : f32
    %453 = vector.broadcast %cst_144 : f32 to vector<2x32xf32>
    %454 = arith.addf %453, %452 : vector<2x32xf32>
    %455 = arith.divf %453, %454 : vector<2x32xf32>
    %456 = vector.extract_strided_slice %449 {offsets = [0, 32], sizes = [2, 32], strides = [1, 1]} : vector<2x128xf32> to vector<2x32xf32>
    %457 = arith.negf %456 : vector<2x32xf32>
    %458 = math.exp %457 : vector<2x32xf32>
    %cst_145 = arith.constant 1.000000e+00 : f32
    %459 = vector.broadcast %cst_145 : f32 to vector<2x32xf32>
    %460 = arith.addf %459, %458 : vector<2x32xf32>
    %461 = arith.divf %459, %460 : vector<2x32xf32>
    %462 = vector.extract_strided_slice %449 {offsets = [0, 64], sizes = [2, 32], strides = [1, 1]} : vector<2x128xf32> to vector<2x32xf32>
    %463 = vector.extract_strided_slice %449 {offsets = [0, 96], sizes = [2, 32], strides = [1, 1]} : vector<2x128xf32> to vector<2x32xf32>
    %464 = arith.mulf %455, %463 : vector<2x32xf32>
    %465 = arith.addf %462, %464 : vector<2x32xf32>
    %466 = math.tanh %465 : vector<2x32xf32>
    %cst_146 = arith.constant 1.000000e+00 : f32
    %467 = vector.broadcast %cst_146 : f32 to vector<2x32xf32>
    %468 = arith.subf %467, %461 : vector<2x32xf32>
    %469 = arith.mulf %468, %466 : vector<2x32xf32>
    %470 = arith.mulf %461, %407 : vector<2x32xf32>
    %471 = arith.addf %469, %470 : vector<2x32xf32>
    %472 = arith.truncf %471 : vector<2x32xf32> to vector<2x32xbf16>
    %cst_147 = arith.constant dense<0.000000e+00> : vector<2x128xf32>
    %473 = tpu.matmul %472, %125, %cst_147 {dimension_numbers = #tpu.dot_dimension_numbers<[1], [0], [0], [1], [0, 0, 1, 1], [], []>} : vector<2x32xbf16>, vector<32x128xbf16>, vector<2x128xf32> -> vector<2x128xf32>
    %474 = vector.broadcast %126 : vector<1x128xf32> to vector<2x128xf32>
    %475 = arith.addf %473, %474 : vector<2x128xf32>
    %c8 = arith.constant 8 : index
    %c0_148 = arith.constant 0 : index
    %476 = vector.load %arg22[%c8, %c0_148] : memref<16x128xf32, #tpu.memory_space<vmem>>, vector<2x128xf32>
    tpu.vector_store %arg22[%c8, %c0_148], %475 {strides = array<i32>} : memref<16x128xf32, #tpu.memory_space<vmem>>, vector<2x128xf32>,
    %477 = vector.extract_strided_slice %118 {offsets = [12, 0], sizes = [2, 128], strides = [1, 1]} : vector<16x128xf32> to vector<2x128xf32>
    %478 = arith.truncf %440 : vector<2x32xf32> to vector<2x32xbf16>
    %cst_149 = arith.constant dense<0.000000e+00> : vector<2x128xf32>
    %479 = tpu.matmul %478, %119, %cst_149 {dimension_numbers = #tpu.dot_dimension_numbers<[1], [0], [0], [1], [0, 0, 1, 1], [], []>} : vector<2x32xbf16>, vector<32x128xbf16>, vector<2x128xf32> -> vector<2x128xf32>
    %480 = arith.addf %477, %479 : vector<2x128xf32>
    %481 = vector.broadcast %120 : vector<1x128xf32> to vector<2x128xf32>
    %482 = arith.addf %480, %481 : vector<2x128xf32>
    %483 = vector.extract_strided_slice %482 {offsets = [0, 0], sizes = [2, 32], strides = [1, 1]} : vector<2x128xf32> to vector<2x32xf32>
    %484 = arith.negf %483 : vector<2x32xf32>
    %485 = math.exp %484 : vector<2x32xf32>
    %cst_150 = arith.constant 1.000000e+00 : f32
    %486 = vector.broadcast %cst_150 : f32 to vector<2x32xf32>
    %487 = arith.addf %486, %485 : vector<2x32xf32>
    %488 = arith.divf %486, %487 : vector<2x32xf32>
    %489 = vector.extract_strided_slice %482 {offsets = [0, 32], sizes = [2, 32], strides = [1, 1]} : vector<2x128xf32> to vector<2x32xf32>
    %490 = arith.negf %489 : vector<2x32xf32>
    %491 = math.exp %490 : vector<2x32xf32>
    %cst_151 = arith.constant 1.000000e+00 : f32
    %492 = vector.broadcast %cst_151 : f32 to vector<2x32xf32>
    %493 = arith.addf %492, %491 : vector<2x32xf32>
    %494 = arith.divf %492, %493 : vector<2x32xf32>
    %495 = vector.extract_strided_slice %482 {offsets = [0, 64], sizes = [2, 32], strides = [1, 1]} : vector<2x128xf32> to vector<2x32xf32>
    %496 = vector.extract_strided_slice %482 {offsets = [0, 96], sizes = [2, 32], strides = [1, 1]} : vector<2x128xf32> to vector<2x32xf32>
    %497 = arith.mulf %488, %496 : vector<2x32xf32>
    %498 = arith.addf %495, %497 : vector<2x32xf32>
    %499 = math.tanh %498 : vector<2x32xf32>
    %cst_152 = arith.constant 1.000000e+00 : f32
    %500 = vector.broadcast %cst_152 : f32 to vector<2x32xf32>
    %501 = arith.subf %500, %494 : vector<2x32xf32>
    %502 = arith.mulf %501, %499 : vector<2x32xf32>
    %503 = arith.mulf %494, %440 : vector<2x32xf32>
    %504 = arith.addf %502, %503 : vector<2x32xf32>
    %505 = arith.truncf %440 : vector<2x32xf32> to vector<2x32xbf16>
    %cst_153 = arith.constant dense<0.000000e+00> : vector<2x128xf32>
    %506 = tpu.matmul %505, %121, %cst_153 {dimension_numbers = #tpu.dot_dimension_numbers<[1], [0], [0], [1], [0, 0, 1, 1], [], []>} : vector<2x32xbf16>, vector<32x128xbf16>, vector<2x128xf32> -> vector<2x128xf32>
    %507 = vector.broadcast %122 : vector<1x128xf32> to vector<2x128xf32>
    %508 = arith.addf %506, %507 : vector<2x128xf32>
    %509 = arith.truncf %471 : vector<2x32xf32> to vector<2x32xbf16>
    %cst_154 = arith.constant dense<0.000000e+00> : vector<2x128xf32>
    %510 = tpu.matmul %509, %123, %cst_154 {dimension_numbers = #tpu.dot_dimension_numbers<[1], [0], [0], [1], [0, 0, 1, 1], [], []>} : vector<2x32xbf16>, vector<32x128xbf16>, vector<2x128xf32> -> vector<2x128xf32>
    %511 = arith.addf %508, %510 : vector<2x128xf32>
    %512 = vector.broadcast %124 : vector<1x128xf32> to vector<2x128xf32>
    %513 = arith.addf %511, %512 : vector<2x128xf32>
    %514 = vector.extract_strided_slice %513 {offsets = [0, 0], sizes = [2, 32], strides = [1, 1]} : vector<2x128xf32> to vector<2x32xf32>
    %515 = arith.negf %514 : vector<2x32xf32>
    %516 = math.exp %515 : vector<2x32xf32>
    %cst_155 = arith.constant 1.000000e+00 : f32
    %517 = vector.broadcast %cst_155 : f32 to vector<2x32xf32>
    %518 = arith.addf %517, %516 : vector<2x32xf32>
    %519 = arith.divf %517, %518 : vector<2x32xf32>
    %520 = vector.extract_strided_slice %513 {offsets = [0, 32], sizes = [2, 32], strides = [1, 1]} : vector<2x128xf32> to vector<2x32xf32>
    %521 = arith.negf %520 : vector<2x32xf32>
    %522 = math.exp %521 : vector<2x32xf32>
    %cst_156 = arith.constant 1.000000e+00 : f32
    %523 = vector.broadcast %cst_156 : f32 to vector<2x32xf32>
    %524 = arith.addf %523, %522 : vector<2x32xf32>
    %525 = arith.divf %523, %524 : vector<2x32xf32>
    %526 = vector.extract_strided_slice %513 {offsets = [0, 64], sizes = [2, 32], strides = [1, 1]} : vector<2x128xf32> to vector<2x32xf32>
    %527 = vector.extract_strided_slice %513 {offsets = [0, 96], sizes = [2, 32], strides = [1, 1]} : vector<2x128xf32> to vector<2x32xf32>
    %528 = arith.mulf %519, %527 : vector<2x32xf32>
    %529 = arith.addf %526, %528 : vector<2x32xf32>
    %530 = math.tanh %529 : vector<2x32xf32>
    %cst_157 = arith.constant 1.000000e+00 : f32
    %531 = vector.broadcast %cst_157 : f32 to vector<2x32xf32>
    %532 = arith.subf %531, %525 : vector<2x32xf32>
    %533 = arith.mulf %532, %530 : vector<2x32xf32>
    %534 = arith.mulf %525, %471 : vector<2x32xf32>
    %535 = arith.addf %533, %534 : vector<2x32xf32>
    %536 = arith.truncf %535 : vector<2x32xf32> to vector<2x32xbf16>
    %cst_158 = arith.constant dense<0.000000e+00> : vector<2x128xf32>
    %537 = tpu.matmul %536, %125, %cst_158 {dimension_numbers = #tpu.dot_dimension_numbers<[1], [0], [0], [1], [0, 0, 1, 1], [], []>} : vector<2x32xbf16>, vector<32x128xbf16>, vector<2x128xf32> -> vector<2x128xf32>
    %538 = vector.broadcast %126 : vector<1x128xf32> to vector<2x128xf32>
    %539 = arith.addf %537, %538 : vector<2x128xf32>
    %c10 = arith.constant 10 : index
    %c0_159 = arith.constant 0 : index
    %540 = vector.load %arg22[%c10, %c0_159] : memref<16x128xf32, #tpu.memory_space<vmem>>, vector<2x128xf32>
    tpu.vector_store %arg22[%c10, %c0_159], %539 {strides = array<i32>} : memref<16x128xf32, #tpu.memory_space<vmem>>, vector<2x128xf32>,
    %541 = vector.extract_strided_slice %118 {offsets = [14, 0], sizes = [2, 128], strides = [1, 1]} : vector<16x128xf32> to vector<2x128xf32>
    %542 = arith.truncf %504 : vector<2x32xf32> to vector<2x32xbf16>
    %cst_160 = arith.constant dense<0.000000e+00> : vector<2x128xf32>
    %543 = tpu.matmul %542, %119, %cst_160 {dimension_numbers = #tpu.dot_dimension_numbers<[1], [0], [0], [1], [0, 0, 1, 1], [], []>} : vector<2x32xbf16>, vector<32x128xbf16>, vector<2x128xf32> -> vector<2x128xf32>
    %544 = arith.addf %541, %543 : vector<2x128xf32>
    %545 = vector.broadcast %120 : vector<1x128xf32> to vector<2x128xf32>
    %546 = arith.addf %544, %545 : vector<2x128xf32>
    %547 = vector.extract_strided_slice %546 {offsets = [0, 0], sizes = [2, 32], strides = [1, 1]} : vector<2x128xf32> to vector<2x32xf32>
    %548 = arith.negf %547 : vector<2x32xf32>
    %549 = math.exp %548 : vector<2x32xf32>
    %cst_161 = arith.constant 1.000000e+00 : f32
    %550 = vector.broadcast %cst_161 : f32 to vector<2x32xf32>
    %551 = arith.addf %550, %549 : vector<2x32xf32>
    %552 = arith.divf %550, %551 : vector<2x32xf32>
    %553 = vector.extract_strided_slice %546 {offsets = [0, 32], sizes = [2, 32], strides = [1, 1]} : vector<2x128xf32> to vector<2x32xf32>
    %554 = arith.negf %553 : vector<2x32xf32>
    %555 = math.exp %554 : vector<2x32xf32>
    %cst_162 = arith.constant 1.000000e+00 : f32
    %556 = vector.broadcast %cst_162 : f32 to vector<2x32xf32>
    %557 = arith.addf %556, %555 : vector<2x32xf32>
    %558 = arith.divf %556, %557 : vector<2x32xf32>
    %559 = vector.extract_strided_slice %546 {offsets = [0, 64], sizes = [2, 32], strides = [1, 1]} : vector<2x128xf32> to vector<2x32xf32>
    %560 = vector.extract_strided_slice %546 {offsets = [0, 96], sizes = [2, 32], strides = [1, 1]} : vector<2x128xf32> to vector<2x32xf32>
    %561 = arith.mulf %552, %560 : vector<2x32xf32>
    %562 = arith.addf %559, %561 : vector<2x32xf32>
    %563 = math.tanh %562 : vector<2x32xf32>
    %cst_163 = arith.constant 1.000000e+00 : f32
    %564 = vector.broadcast %cst_163 : f32 to vector<2x32xf32>
    %565 = arith.subf %564, %558 : vector<2x32xf32>
    %566 = arith.mulf %565, %563 : vector<2x32xf32>
    %567 = arith.mulf %558, %504 : vector<2x32xf32>
    %568 = arith.addf %566, %567 : vector<2x32xf32>
    %569 = arith.truncf %504 : vector<2x32xf32> to vector<2x32xbf16>
    %cst_164 = arith.constant dense<0.000000e+00> : vector<2x128xf32>
    %570 = tpu.matmul %569, %121, %cst_164 {dimension_numbers = #tpu.dot_dimension_numbers<[1], [0], [0], [1], [0, 0, 1, 1], [], []>} : vector<2x32xbf16>, vector<32x128xbf16>, vector<2x128xf32> -> vector<2x128xf32>
    %571 = vector.broadcast %122 : vector<1x128xf32> to vector<2x128xf32>
    %572 = arith.addf %570, %571 : vector<2x128xf32>
    %573 = arith.truncf %535 : vector<2x32xf32> to vector<2x32xbf16>
    %cst_165 = arith.constant dense<0.000000e+00> : vector<2x128xf32>
    %574 = tpu.matmul %573, %123, %cst_165 {dimension_numbers = #tpu.dot_dimension_numbers<[1], [0], [0], [1], [0, 0, 1, 1], [], []>} : vector<2x32xbf16>, vector<32x128xbf16>, vector<2x128xf32> -> vector<2x128xf32>
    %575 = arith.addf %572, %574 : vector<2x128xf32>
    %576 = vector.broadcast %124 : vector<1x128xf32> to vector<2x128xf32>
    %577 = arith.addf %575, %576 : vector<2x128xf32>
    %578 = vector.extract_strided_slice %577 {offsets = [0, 0], sizes = [2, 32], strides = [1, 1]} : vector<2x128xf32> to vector<2x32xf32>
    %579 = arith.negf %578 : vector<2x32xf32>
    %580 = math.exp %579 : vector<2x32xf32>
    %cst_166 = arith.constant 1.000000e+00 : f32
    %581 = vector.broadcast %cst_166 : f32 to vector<2x32xf32>
    %582 = arith.addf %581, %580 : vector<2x32xf32>
    %583 = arith.divf %581, %582 : vector<2x32xf32>
    %584 = vector.extract_strided_slice %577 {offsets = [0, 32], sizes = [2, 32], strides = [1, 1]} : vector<2x128xf32> to vector<2x32xf32>
    %585 = arith.negf %584 : vector<2x32xf32>
    %586 = math.exp %585 : vector<2x32xf32>
    %cst_167 = arith.constant 1.000000e+00 : f32
    %587 = vector.broadcast %cst_167 : f32 to vector<2x32xf32>
    %588 = arith.addf %587, %586 : vector<2x32xf32>
    %589 = arith.divf %587, %588 : vector<2x32xf32>
    %590 = vector.extract_strided_slice %577 {offsets = [0, 64], sizes = [2, 32], strides = [1, 1]} : vector<2x128xf32> to vector<2x32xf32>
    %591 = vector.extract_strided_slice %577 {offsets = [0, 96], sizes = [2, 32], strides = [1, 1]} : vector<2x128xf32> to vector<2x32xf32>
    %592 = arith.mulf %583, %591 : vector<2x32xf32>
    %593 = arith.addf %590, %592 : vector<2x32xf32>
    %594 = math.tanh %593 : vector<2x32xf32>
    %cst_168 = arith.constant 1.000000e+00 : f32
    %595 = vector.broadcast %cst_168 : f32 to vector<2x32xf32>
    %596 = arith.subf %595, %589 : vector<2x32xf32>
    %597 = arith.mulf %596, %594 : vector<2x32xf32>
    %598 = arith.mulf %589, %535 : vector<2x32xf32>
    %599 = arith.addf %597, %598 : vector<2x32xf32>
    %600 = arith.truncf %599 : vector<2x32xf32> to vector<2x32xbf16>
    %cst_169 = arith.constant dense<0.000000e+00> : vector<2x128xf32>
    %601 = tpu.matmul %600, %125, %cst_169 {dimension_numbers = #tpu.dot_dimension_numbers<[1], [0], [0], [1], [0, 0, 1, 1], [], []>} : vector<2x32xbf16>, vector<32x128xbf16>, vector<2x128xf32> -> vector<2x128xf32>
    %602 = vector.broadcast %126 : vector<1x128xf32> to vector<2x128xf32>
    %603 = arith.addf %601, %602 : vector<2x128xf32>
    %c12 = arith.constant 12 : index
    %c0_170 = arith.constant 0 : index
    %604 = vector.load %arg22[%c12, %c0_170] : memref<16x128xf32, #tpu.memory_space<vmem>>, vector<2x128xf32>
    tpu.vector_store %arg22[%c12, %c0_170], %603 {strides = array<i32>} : memref<16x128xf32, #tpu.memory_space<vmem>>, vector<2x128xf32>,
    %605 = arith.truncf %568 : vector<2x32xf32> to vector<2x32xbf16>
    %cst_171 = arith.constant dense<0.000000e+00> : vector<2x128xf32>
    %606 = tpu.matmul %605, %121, %cst_171 {dimension_numbers = #tpu.dot_dimension_numbers<[1], [0], [0], [1], [0, 0, 1, 1], [], []>} : vector<2x32xbf16>, vector<32x128xbf16>, vector<2x128xf32> -> vector<2x128xf32>
    %607 = vector.broadcast %122 : vector<1x128xf32> to vector<2x128xf32>
    %608 = arith.addf %606, %607 : vector<2x128xf32>
    %609 = arith.truncf %599 : vector<2x32xf32> to vector<2x32xbf16>
    %cst_172 = arith.constant dense<0.000000e+00> : vector<2x128xf32>
    %610 = tpu.matmul %609, %123, %cst_172 {dimension_numbers = #tpu.dot_dimension_numbers<[1], [0], [0], [1], [0, 0, 1, 1], [], []>} : vector<2x32xbf16>, vector<32x128xbf16>, vector<2x128xf32> -> vector<2x128xf32>
    %611 = arith.addf %608, %610 : vector<2x128xf32>
    %612 = vector.broadcast %124 : vector<1x128xf32> to vector<2x128xf32>
    %613 = arith.addf %611, %612 : vector<2x128xf32>
    %614 = vector.extract_strided_slice %613 {offsets = [0, 0], sizes = [2, 32], strides = [1, 1]} : vector<2x128xf32> to vector<2x32xf32>
    %615 = arith.negf %614 : vector<2x32xf32>
    %616 = math.exp %615 : vector<2x32xf32>
    %cst_173 = arith.constant 1.000000e+00 : f32
    %617 = vector.broadcast %cst_173 : f32 to vector<2x32xf32>
    %618 = arith.addf %617, %616 : vector<2x32xf32>
    %619 = arith.divf %617, %618 : vector<2x32xf32>
    %620 = vector.extract_strided_slice %613 {offsets = [0, 32], sizes = [2, 32], strides = [1, 1]} : vector<2x128xf32> to vector<2x32xf32>
    %621 = arith.negf %620 : vector<2x32xf32>
    %622 = math.exp %621 : vector<2x32xf32>
    %cst_174 = arith.constant 1.000000e+00 : f32
    %623 = vector.broadcast %cst_174 : f32 to vector<2x32xf32>
    %624 = arith.addf %623, %622 : vector<2x32xf32>
    %625 = arith.divf %623, %624 : vector<2x32xf32>
    %626 = vector.extract_strided_slice %613 {offsets = [0, 64], sizes = [2, 32], strides = [1, 1]} : vector<2x128xf32> to vector<2x32xf32>
    %627 = vector.extract_strided_slice %613 {offsets = [0, 96], sizes = [2, 32], strides = [1, 1]} : vector<2x128xf32> to vector<2x32xf32>
    %628 = arith.mulf %619, %627 : vector<2x32xf32>
    %629 = arith.addf %626, %628 : vector<2x32xf32>
    %630 = math.tanh %629 : vector<2x32xf32>
    %cst_175 = arith.constant 1.000000e+00 : f32
    %631 = vector.broadcast %cst_175 : f32 to vector<2x32xf32>
    %632 = arith.subf %631, %625 : vector<2x32xf32>
    %633 = arith.mulf %632, %630 : vector<2x32xf32>
    %634 = arith.mulf %625, %599 : vector<2x32xf32>
    %635 = arith.addf %633, %634 : vector<2x32xf32>
    %636 = arith.truncf %635 : vector<2x32xf32> to vector<2x32xbf16>
    %cst_176 = arith.constant dense<0.000000e+00> : vector<2x128xf32>
    %637 = tpu.matmul %636, %125, %cst_176 {dimension_numbers = #tpu.dot_dimension_numbers<[1], [0], [0], [1], [0, 0, 1, 1], [], []>} : vector<2x32xbf16>, vector<32x128xbf16>, vector<2x128xf32> -> vector<2x128xf32>
    %638 = vector.broadcast %126 : vector<1x128xf32> to vector<2x128xf32>
    %639 = arith.addf %637, %638 : vector<2x128xf32>
    %c14 = arith.constant 14 : index
    %c0_177 = arith.constant 0 : index
    %640 = vector.load %arg22[%c14, %c0_177] : memref<16x128xf32, #tpu.memory_space<vmem>>, vector<2x128xf32>
    tpu.vector_store %arg22[%c14, %c0_177], %639 {strides = array<i32>} : memref<16x128xf32, #tpu.memory_space<vmem>>, vector<2x128xf32>,
    return
  }
  func.func @transform_0(%arg0: i32) -> (i32, i32) {
    %c0_i32 = arith.constant 0 : i32
    %c0_i32_0 = arith.constant 0 : i32
    %c0_i32_1 = arith.constant 0 : i32
    return %c0_i32, %c0_i32_0 : i32, i32
  }
  func.func @transform_1(%arg0: i32) -> (i32, i32) {
    %c0_i32 = arith.constant 0 : i32
    %c0_i32_0 = arith.constant 0 : i32
    %c0_i32_1 = arith.constant 0 : i32
    return %c0_i32, %c0_i32_0 : i32, i32
  }
  func.func @transform_2(%arg0: i32) -> (i32, i32) {
    %c0_i32 = arith.constant 0 : i32
    %c0_i32_0 = arith.constant 0 : i32
    %c0_i32_1 = arith.constant 0 : i32
    return %c0_i32, %c0_i32_0 : i32, i32
  }
  func.func @transform_3(%arg0: i32) -> (i32, i32, i32) {
    %c0_i32 = arith.constant 0 : i32
    %c0_i32_0 = arith.constant 0 : i32
    %c0_i32_1 = arith.constant 0 : i32
    %c0_i32_2 = arith.constant 0 : i32
    return %c0_i32, %c0_i32_0, %c0_i32_1 : i32, i32, i32
  }
  func.func @transform_4(%arg0: i32) -> (i32, i32) {
    %c0_i32 = arith.constant 0 : i32
    %c0_i32_0 = arith.constant 0 : i32
    %c0_i32_1 = arith.constant 0 : i32
    return %c0_i32, %c0_i32_0 : i32, i32
  }
  func.func @transform_5(%arg0: i32) -> (i32, i32, i32) {
    %c0_i32 = arith.constant 0 : i32
    %c0_i32_0 = arith.constant 0 : i32
    %c0_i32_1 = arith.constant 0 : i32
    %c0_i32_2 = arith.constant 0 : i32
    return %c0_i32, %c0_i32_0, %c0_i32_1 : i32, i32, i32
  }
  func.func @transform_6(%arg0: i32) -> (i32, i32) {
    %c0_i32 = arith.constant 0 : i32
    %c0_i32_0 = arith.constant 0 : i32
    %c0_i32_1 = arith.constant 0 : i32
    return %c0_i32, %c0_i32_0 : i32, i32
  }
  func.func @transform_7(%arg0: i32) -> (i32, i32, i32) {
    %c0_i32 = arith.constant 0 : i32
    %c0_i32_0 = arith.constant 0 : i32
    %c0_i32_1 = arith.constant 0 : i32
    %c0_i32_2 = arith.constant 0 : i32
    return %c0_i32, %c0_i32_0, %c0_i32_1 : i32, i32, i32
  }
  func.func @transform_8(%arg0: i32) -> (i32, i32) {
    %c0_i32 = arith.constant 0 : i32
    %c0_i32_0 = arith.constant 0 : i32
    %c0_i32_1 = arith.constant 0 : i32
    return %c0_i32, %c0_i32_0 : i32, i32
  }
  func.func @transform_9(%arg0: i32) -> (i32, i32) {
    %c0_i32 = arith.constant 0 : i32
    %c0_i32_0 = arith.constant 0 : i32
    %c0_i32_1 = arith.constant 0 : i32
    return %c0_i32, %c0_i32_0 : i32, i32
  }
  func.func @transform_10(%arg0: i32) -> (i32, i32) {
    %c0_i32 = arith.constant 0 : i32
    %c0_i32_0 = arith.constant 0 : i32
    %c0_i32_1 = arith.constant 0 : i32
    return %c0_i32, %c0_i32_0 : i32, i32
  }
  func.func @transform_11(%arg0: i32) -> (i32, i32) {
    %c0_i32 = arith.constant 0 : i32
    %c0_i32_0 = arith.constant 0 : i32
    %c0_i32_1 = arith.constant 0 : i32
    return %c0_i32, %c0_i32_0 : i32, i32
  }
  func.func @transform_12(%arg0: i32) -> (i32, i32) {
    %c0_i32 = arith.constant 0 : i32
    %c0_i32_0 = arith.constant 0 : i32
    %c0_i32_1 = arith.constant 0 : i32
    return %c0_i32, %c0_i32_0 : i32, i32
  }
  func.func @transform_13(%arg0: i32) -> (i32, i32) {
    %c0_i32 = arith.constant 0 : i32
    %c0_i32_0 = arith.constant 0 : i32
    %c0_i32_1 = arith.constant 0 : i32
    return %c0_i32, %c0_i32_0 : i32, i32
  }
  func.func @transform_14(%arg0: i32) -> (i32, i32) {
    %c0_i32 = arith.constant 0 : i32
    %c0_i32_0 = arith.constant 0 : i32
    %c0_i32_1 = arith.constant 0 : i32
    return %c0_i32, %c0_i32_0 : i32, i32
  }
  func.func @transform_15(%arg0: i32) -> (i32, i32) {
    %c0_i32 = arith.constant 0 : i32
    %c0_i32_0 = arith.constant 0 : i32
    %c0_i32_1 = arith.constant 0 : i32
    return %c0_i32, %c0_i32_0 : i32, i32
  }
  func.func @transform_16(%arg0: i32) -> (i32, i32) {
    %c0_i32 = arith.constant 0 : i32
    %c0_i32_0 = arith.constant 0 : i32
    %c0_i32_1 = arith.constant 0 : i32
    return %c0_i32, %c0_i32_0 : i32, i32
  }
  func.func @transform_17(%arg0: i32) -> (i32, i32) {
    %c0_i32 = arith.constant 0 : i32
    %c0_i32_0 = arith.constant 0 : i32
    %c0_i32_1 = arith.constant 0 : i32
    return %c0_i32, %c0_i32_0 : i32, i32
  }
  func.func @transform_18(%arg0: i32) -> (i32, i32) {
    %c0_i32 = arith.constant 0 : i32
    %c0_i32_0 = arith.constant 0 : i32
    %c0_i32_1 = arith.constant 0 : i32
    return %c0_i32, %c0_i32_0 : i32, i32
  }
  func.func @transform_19(%arg0: i32) -> (i32, i32) {
    %c0_i32 = arith.constant 0 : i32
    %c0_i32_0 = arith.constant 0 : i32
    %c0_i32_1 = arith.constant 0 : i32
    return %c0_i32, %c0_i32_0 : i32, i32
  }
  func.func @transform_20(%arg0: i32) -> (i32, i32) {
    %c0_i32 = arith.constant 0 : i32
    %c0_i32_0 = arith.constant 0 : i32
    %c0_i32_1 = arith.constant 0 : i32
    return %c0_i32, %c0_i32_0 : i32, i32
  }
  func.func @transform_21(%arg0: i32) -> (i32, i32) {
    %c0_i32 = arith.constant 0 : i32
    %c0_i32_0 = arith.constant 0 : i32
    %c0_i32_1 = arith.constant 0 : i32
    return %c0_i32, %c0_i32_0 : i32, i32
  }
}

</mosaic_0001>

<llo_original>
// kernel: crnn_forward.1
$region0: #{crnn_forward.1}
  #allocation0 [shape = 'u32[]', space=smem, size = 0x4, offset = 0x4, fixed_abs, tag = 'smem constant byte address 0x4 - core index']
  #allocation1 [shape = 'u32[72,128]{1,0:T(1,128)}', space=vmem, size = 0x9000, scoped, tag = 'internal scratch']
  %s0 = inlined_call_operand.vmem [shape: bf16[256,48], index: 0, kind: input, shape index: {}]
  %s1 = inlined_call_operand.vmem [shape: bf16[48,16], index: 1, kind: input, shape index: {}]
  %s2 = inlined_call_operand.vmem [shape: f32[1,16], index: 2, kind: input, shape index: {}]
  %s3 = inlined_call_operand.vmem [shape: bf16[4,16,32], index: 3, kind: input, shape index: {}]
  %s4 = inlined_call_operand.vmem [shape: f32[1,32], index: 4, kind: input, shape index: {}]
  %s5 = inlined_call_operand.vmem [shape: bf16[4,32,48], index: 5, kind: input, shape index: {}]
  %s6 = inlined_call_operand.vmem [shape: f32[1,48], index: 6, kind: input, shape index: {}]
  %s7 = inlined_call_operand.vmem [shape: bf16[4,48,64], index: 7, kind: input, shape index: {}]
  %s8 = inlined_call_operand.vmem [shape: f32[1,64], index: 8, kind: input, shape index: {}]
  %s9 = inlined_call_operand.vmem [shape: f32[16,4], index: 9, kind: input, shape index: {}]
  %s10 = inlined_call_operand.vmem [shape: f32[16,1], index: 10, kind: input, shape index: {}]
  %s11 = inlined_call_operand.vmem [shape: bf16[64,128], index: 11, kind: input, shape index: {}]
  %s12 = inlined_call_operand.vmem [shape: f32[1,128], index: 12, kind: input, shape index: {}]
  %s13 = inlined_call_operand.vmem [shape: bf16[32,128], index: 13, kind: input, shape index: {}]
  %s14 = inlined_call_operand.vmem [shape: f32[1,128], index: 14, kind: input, shape index: {}]
  %s15 = inlined_call_operand.vmem [shape: bf16[32,128], index: 15, kind: input, shape index: {}]
  %s16 = inlined_call_operand.vmem [shape: f32[1,128], index: 16, kind: input, shape index: {}]
  %s17 = inlined_call_operand.vmem [shape: bf16[32,128], index: 17, kind: input, shape index: {}]
  %s18 = inlined_call_operand.vmem [shape: f32[1,128], index: 18, kind: input, shape index: {}]
  %s19 = inlined_call_operand.vmem [shape: bf16[32,128], index: 19, kind: input, shape index: {}]
  %s20 = inlined_call_operand.vmem [shape: f32[1,128], index: 20, kind: input, shape index: {}]
  %s21 = inlined_call_operand.hbm [shape: f32[16,128], index: 21, kind: output, shape index: {}]
  %s22 = sld [smem:[#allocation0]]
  $region94: #{crnn_forward.1} parent=0
    _
  %s24 = ssub.s32 1, %s22
  %s25 = scalar_select 0, %s24, %s22
  $region1: #{crnn_forward.1} parent=0
    #allocation2 [shape = 'u8[8192]{0}', space=vmem, size = 0x2000, scoped, tag = 'output window, operand 0, single buffered']
    #allocation3 [shape = 's32[1]{0}', space=sflag, size = 0x4, scoped, tag = 'scoped memory for crnn_forward.1']
    %26 = vsyncpa [#allocation3], 0
    // Predicated region
    $region2: #{crnn_forward.1} parent=1 // pred_check
      _
    $region3: #{crnn_forward.1} parent=1 // pred_check_branch
      %28 = sbr.rel (0) target = $region5
    $region4: #{crnn_forward.1} parent=1 // pred_region
      _
    $region5: #{crnn_forward.1} parent=1 // pred_fallthru
      _
    // Predicated region
    $region6: #{crnn_forward.1} parent=1 // pred_check
      _
    $region7: #{crnn_forward.1} parent=1 // pred_check_branch
      %30 = sbr.rel (0) target = $region9
    $region8: #{crnn_forward.1} parent=1 // pred_region
      _
    $region9: #{crnn_forward.1} parent=1 // pred_fallthru
      _
    // Predicated region
    $region10: #{crnn_forward.1} parent=1 // pred_check
      _
    $region11: #{crnn_forward.1} parent=1 // pred_check_branch
      %32 = sbr.rel (0) target = $region13
    $region12: #{crnn_forward.1} parent=1 // pred_region
      _
    $region13: #{crnn_forward.1} parent=1 // pred_fallthru
      _
    // Predicated region
    $region14: #{crnn_forward.1} parent=1 // pred_check
      _
    $region15: #{crnn_forward.1} parent=1 // pred_check_branch
      %34 = sbr.rel (0) target = $region17
    $region16: #{crnn_forward.1} parent=1 // pred_region
      _
    $region17: #{crnn_forward.1} parent=1 // pred_fallthru
      _
    // Predicated region
    $region18: #{crnn_forward.1} parent=1 // pred_check
      _
    $region19: #{crnn_forward.1} parent=1 // pred_check_branch
      %36 = sbr.rel (0) target = $region21
    $region20: #{crnn_forward.1} parent=1 // pred_region
      _
    $region21: #{crnn_forward.1} parent=1 // pred_fallthru
      _
    // Predicated region
    $region22: #{crnn_forward.1} parent=1 // pred_check
      _
    $region23: #{crnn_forward.1} parent=1 // pred_check_branch
      %38 = sbr.rel (0) target = $region25
    $region24: #{crnn_forward.1} parent=1 // pred_region
      _
    $region25: #{crnn_forward.1} parent=1 // pred_fallthru
      _
    // Predicated region
    $region26: #{crnn_forward.1} parent=1 // pred_check
      _
    $region27: #{crnn_forward.1} parent=1 // pred_check_branch
      %40 = sbr.rel (0) target = $region29
    $region28: #{crnn_forward.1} parent=1 // pred_region
      _
    $region29: #{crnn_forward.1} parent=1 // pred_fallthru
      _
    // Predicated region
    $region30: #{crnn_forward.1} parent=1 // pred_check
      _
    $region31: #{crnn_forward.1} parent=1 // pred_check_branch
      %42 = sbr.rel (0) target = $region33
    $region32: #{crnn_forward.1} parent=1 // pred_region
      _
    $region33: #{crnn_forward.1} parent=1 // pred_fallthru
      _
    // Predicated region
    $region34: #{crnn_forward.1} parent=1 // pred_check
      _
    $region35: #{crnn_forward.1} parent=1 // pred_check_branch
      %44 = sbr.rel (0) target = $region37
    $region36: #{crnn_forward.1} parent=1 // pred_region
      _
    $region37: #{crnn_forward.1} parent=1 // pred_fallthru
      _
    // Predicated region
    $region38: #{crnn_forward.1} parent=1 // pred_check
      _
    $region39: #{crnn_forward.1} parent=1 // pred_check_branch
      %46 = sbr.rel (0) target = $region41
    $region40: #{crnn_forward.1} parent=1 // pred_region
      _
    $region41: #{crnn_forward.1} parent=1 // pred_fallthru
      _
    // Predicated region
    $region42: #{crnn_forward.1} parent=1 // pred_check
      _
    $region43: #{crnn_forward.1} parent=1 // pred_check_branch
      %48 = sbr.rel (0) target = $region45
    $region44: #{crnn_forward.1} parent=1 // pred_region
      _
    $region45: #{crnn_forward.1} parent=1 // pred_fallthru
      _
    // Predicated region
    $region46: #{crnn_forward.1} parent=1 // pred_check
      _
    $region47: #{crnn_forward.1} parent=1 // pred_check_branch
      %50 = sbr.rel (0) target = $region49
    $region48: #{crnn_forward.1} parent=1 // pred_region
      _
    $region49: #{crnn_forward.1} parent=1 // pred_fallthru
      _
    // Predicated region
    $region50: #{crnn_forward.1} parent=1 // pred_check
      _
    $region51: #{crnn_forward.1} parent=1 // pred_check_branch
      %52 = sbr.rel (0) target = $region53
    $region52: #{crnn_forward.1} parent=1 // pred_region
      _
    $region53: #{crnn_forward.1} parent=1 // pred_fallthru
      _
    // Predicated region
    $region54: #{crnn_forward.1} parent=1 // pred_check
      _
    $region55: #{crnn_forward.1} parent=1 // pred_check_branch
      %54 = sbr.rel (0) target = $region57
    $region56: #{crnn_forward.1} parent=1 // pred_region
      _
    $region57: #{crnn_forward.1} parent=1 // pred_fallthru
      _
    // Predicated region
    $region58: #{crnn_forward.1} parent=1 // pred_check
      _
    $region59: #{crnn_forward.1} parent=1 // pred_check_branch
      %56 = sbr.rel (0) target = $region61
    $region60: #{crnn_forward.1} parent=1 // pred_region
      _
    $region61: #{crnn_forward.1} parent=1 // pred_fallthru
      _
    // Predicated region
    $region62: #{crnn_forward.1} parent=1 // pred_check
      _
    $region63: #{crnn_forward.1} parent=1 // pred_check_branch
      %58 = sbr.rel (0) target = $region65
    $region64: #{crnn_forward.1} parent=1 // pred_region
      _
    $region65: #{crnn_forward.1} parent=1 // pred_fallthru
      _
    // Predicated region
    $region66: #{crnn_forward.1} parent=1 // pred_check
      _
    $region67: #{crnn_forward.1} parent=1 // pred_check_branch
      %60 = sbr.rel (0) target = $region69
    $region68: #{crnn_forward.1} parent=1 // pred_region
      _
    $region69: #{crnn_forward.1} parent=1 // pred_fallthru
      _
    // Predicated region
    $region70: #{crnn_forward.1} parent=1 // pred_check
      _
    $region71: #{crnn_forward.1} parent=1 // pred_check_branch
      %62 = sbr.rel (0) target = $region73
    $region72: #{crnn_forward.1} parent=1 // pred_region
      _
    $region73: #{crnn_forward.1} parent=1 // pred_fallthru
      _
    // Predicated region
    $region74: #{crnn_forward.1} parent=1 // pred_check
      _
    $region75: #{crnn_forward.1} parent=1 // pred_check_branch
      %64 = sbr.rel (0) target = $region77
    $region76: #{crnn_forward.1} parent=1 // pred_region
      _
    $region77: #{crnn_forward.1} parent=1 // pred_fallthru
      _
    // Predicated region
    $region78: #{crnn_forward.1} parent=1 // pred_check
      _
    $region79: #{crnn_forward.1} parent=1 // pred_check_branch
      %66 = sbr.rel (0) target = $region81
    $region80: #{crnn_forward.1} parent=1 // pred_region
      _
    $region81: #{crnn_forward.1} parent=1 // pred_fallthru
      _
    // Predicated region
    $region82: #{crnn_forward.1} parent=1 // pred_check
      _
    $region83: #{crnn_forward.1} parent=1 // pred_check_branch
      %68 = sbr.rel (0) target = $region85
    $region84: #{crnn_forward.1} parent=1 // pred_region
      _
    $region85: #{crnn_forward.1} parent=1 // pred_fallthru
      _
    %v70 = vld [vmem:[%s0] sm:$0xf]
    %v71 = vld [vmem:[%s0 + $0x4] sm:$0xf]
    %v72 = vld [vmem:[%s0 + $0x8] sm:$0xf]
    %v73 = vld [vmem:[%s0 + $0xc] sm:$0xf]
    %v74 = vld [vmem:[%s0 + $0x10] sm:$0xf]
    %v75 = vld [vmem:[%s0 + $0x14] sm:$0xf]
    %v76 = vld [vmem:[%s0 + $0x18] sm:$0xf]
    %v77 = vld [vmem:[%s0 + $0x1c] sm:$0xf]
    %v78 = vld [vmem:[%s0 + $0x20] sm:$0xf]
    %v79 = vld [vmem:[%s0 + $0x24] sm:$0xf]
    %v80 = vld [vmem:[%s0 + $0x28] sm:$0xf]
    %v81 = vld [vmem:[%s0 + $0x2c] sm:$0xf]
    %v82 = vld [vmem:[%s0 + $0x30] sm:$0xf]
    %v83 = vld [vmem:[%s0 + $0x34] sm:$0xf]
    %v84 = vld [vmem:[%s0 + $0x38] sm:$0xf]
    %v85 = vld [vmem:[%s0 + $0x3c] sm:$0xf]
    %v86 = vld [vmem:[%s0 + $0x40] sm:$0xf]
    %v87 = vld [vmem:[%s0 + $0x44] sm:$0xf]
    %v88 = vld [vmem:[%s0 + $0x48] sm:$0xf]
    %v89 = vld [vmem:[%s0 + $0x4c] sm:$0xf]
    %v90 = vld [vmem:[%s0 + $0x50] sm:$0xf]
    %v91 = vld [vmem:[%s0 + $0x54] sm:$0xf]
    %v92 = vld [vmem:[%s0 + $0x58] sm:$0xf]
    %v93 = vld [vmem:[%s0 + $0x5c] sm:$0xf]
    %v94 = vld [vmem:[%s0 + $0x60] sm:$0xf]
    %v95 = vld [vmem:[%s0 + $0x64] sm:$0xf]
    %v96 = vld [vmem:[%s0 + $0x68] sm:$0xf]
    %v97 = vld [vmem:[%s0 + $0x6c] sm:$0xf]
    %v98 = vld [vmem:[%s0 + $0x70] sm:$0xf]
    %v99 = vld [vmem:[%s0 + $0x74] sm:$0xf]
    %v100 = vld [vmem:[%s0 + $0x78] sm:$0xf]
    %v101 = vld [vmem:[%s0 + $0x7c] sm:$0xf]
    %v102 = vld [vmem:[%s1] sm:$0xf]
    %v103 = vld [vmem:[%s1 + $0x4] sm:$0xf]
    %v104 = vld [vmem:[%s1 + $0x8] sm:$0xf]
    %v105 = vld [vmem:[%s1 + $0xc] sm:$0xf]
    %v106 = vld [vmem:[%s1 + $0x10] sm:$0xf]
    %v107 = vld [vmem:[%s1 + $0x14] sm:$0xf]
    %v108 = vld [vmem:[%s2] sm:$0x1]
    %v110 = vperm.slane %v108, 0
    %v144 = vunpack.c.l.b16 %v70
    %v145 = vunpack.c.l.b16 %v71
    %v146 = vunpack.c.l.b16 %v72
    %v147 = vunpack.c.l.b16 %v73
    %v148 = vunpack.c.l.b16 %v74
    %v149 = vunpack.c.l.b16 %v75
    %v150 = vunpack.c.l.b16 %v76
    %v151 = vunpack.c.l.b16 %v77
    %v152 = vunpack.c.l.b16 %v78
    %v153 = vunpack.c.l.b16 %v79
    %v154 = vunpack.c.l.b16 %v80
    %v155 = vunpack.c.l.b16 %v81
    %v156 = vunpack.c.l.b16 %v82
    %v157 = vunpack.c.l.b16 %v83
    %v158 = vunpack.c.l.b16 %v84
    %v159 = vunpack.c.l.b16 %v85
    %v160 = vunpack.c.l.b16 %v86
    %v161 = vunpack.c.l.b16 %v87
    %v162 = vunpack.c.l.b16 %v88
    %v163 = vunpack.c.l.b16 %v89
    %v164 = vunpack.c.l.b16 %v90
    %v165 = vunpack.c.l.b16 %v91
    %v166 = vunpack.c.l.b16 %v92
    %v167 = vunpack.c.l.b16 %v93
    %v168 = vunpack.c.l.b16 %v94
    %v169 = vunpack.c.l.b16 %v95
    %v170 = vunpack.c.l.b16 %v96
    %v171 = vunpack.c.l.b16 %v97
    %v172 = vunpack.c.l.b16 %v98
    %v173 = vunpack.c.l.b16 %v99
    %v174 = vunpack.c.l.b16 %v100
    %v175 = vunpack.c.l.b16 %v101
    %v176 = vpack.c.b16 %v145, %v144
    %v177 = vpack.c.b16 %v147, %v146
    %v178 = vpack.c.b16 %v149, %v148
    %v179 = vpack.c.b16 %v151, %v150
    %v180 = vpack.c.b16 %v153, %v152
    %v181 = vpack.c.b16 %v155, %v154
    %v182 = vpack.c.b16 %v157, %v156
    %v183 = vpack.c.b16 %v159, %v158
    %v184 = vpack.c.b16 %v161, %v160
    %v185 = vpack.c.b16 %v163, %v162
    %v186 = vpack.c.b16 %v165, %v164
    %v187 = vpack.c.b16 %v167, %v166
    %v188 = vpack.c.b16 %v169, %v168
    %v189 = vpack.c.b16 %v171, %v170
    %v190 = vpack.c.b16 %v173, %v172
    %v191 = vpack.c.b16 %v175, %v174
    %v198 = vunpack.c.l.b16 %v102
    %v199 = vunpack.c.l.b16 %v103
    %v200 = vunpack.c.l.b16 %v104
    %v201 = vunpack.c.l.b16 %v105
    %v202 = vunpack.c.l.b16 %v106
    %v203 = vunpack.c.l.b16 %v107
    %v204 = vpack.c.b16 %v199, %v198
    %v205 = vpack.c.b16 %v201, %v200
    %v206 = vpack.c.b16 %v203, %v202
    %vm210 = vcmask 392192
    %v212 = vsel %vm210, %v176, 0
    %v215 = vsel %vm210, %v177, 0
    %v218 = vsel %vm210, %v178, 0
    %v221 = vsel %vm210, %v179, 0
    %v224 = vsel %vm210, %v180, 0
    %v227 = vsel %vm210, %v181, 0
    %v230 = vsel %vm210, %v182, 0
    %v233 = vsel %vm210, %v183, 0
    %v236 = vsel %vm210, %v184, 0
    %v239 = vsel %vm210, %v185, 0
    %v242 = vsel %vm210, %v186, 0
    %v245 = vsel %vm210, %v187, 0
    %v248 = vsel %vm210, %v188, 0
    %v251 = vsel %vm210, %v189, 0
    %v254 = vsel %vm210, %v190, 0
    %v257 = vsel %vm210, %v191, 0
    %259 = vmatpush.bf16.msra.mxu0 0
    %260 = vmatpush.bf16.msra.mxu0 0
    %261 = vmatpush.bf16.msra.mxu0 0
    %262 = vmatpush.bf16.msra.mxu0 0
    %263 = vmatpush.bf16.msra.mxu0 0
    %264 = vmatpush.bf16.msra.mxu0 %v206
    %265 = vmatpush.bf16.msra.mxu0 %v205
    %266 = vmatpush.bf16.msra.mxu0 %v204
    %267 = vmatmul.bf16.gmra.mxu0 %v212
    %v268 = vpop.f32.mrf.mxu0
    %v269 = vadd.f32 %v110, %v268
    %v270 = vpop.f32.mrf.mxu0
    %v271 = vadd.f32 %v110, %v270
    %272 = vmatmul.bf16.gmra.mxu0 %v215
    %v273 = vpop.f32.mrf.mxu0
    %v274 = vadd.f32 %v110, %v273
    %v275 = vpop.f32.mrf.mxu0
    %v276 = vadd.f32 %v110, %v275
    %277 = vmatmul.bf16.gmra.mxu0 %v218
    %v278 = vpop.f32.mrf.mxu0
    %v279 = vadd.f32 %v110, %v278
    %v280 = vpop.f32.mrf.mxu0
    %v281 = vadd.f32 %v110, %v280
    %282 = vmatmul.bf16.gmra.mxu0 %v221
    %v283 = vpop.f32.mrf.mxu0
    %v284 = vadd.f32 %v110, %v283
    %v285 = vpop.f32.mrf.mxu0
    %v286 = vadd.f32 %v110, %v285
    %287 = vmatmul.bf16.gmra.mxu0 %v224
    %v288 = vpop.f32.mrf.mxu0
    %v289 = vadd.f32 %v110, %v288
    %v290 = vpop.f32.mrf.mxu0
    %v291 = vadd.f32 %v110, %v290
    %292 = vmatmul.bf16.gmra.mxu0 %v227
    %v293 = vpop.f32.mrf.mxu0
    %v294 = vadd.f32 %v110, %v293
    %v295 = vpop.f32.mrf.mxu0
    %v296 = vadd.f32 %v110, %v295
    %297 = vmatmul.bf16.gmra.mxu0 %v230
    %v298 = vpop.f32.mrf.mxu0
    %v299 = vadd.f32 %v110, %v298
    %v300 = vpop.f32.mrf.mxu0
    %v301 = vadd.f32 %v110, %v300
    %302 = vmatmul.bf16.gmra.mxu0 %v233
    %v303 = vpop.f32.mrf.mxu0
    %v304 = vadd.f32 %v110, %v303
    %v305 = vpop.f32.mrf.mxu0
    %v306 = vadd.f32 %v110, %v305
    %307 = vmatmul.bf16.gmra.mxu0 %v236
    %v308 = vpop.f32.mrf.mxu0
    %v309 = vadd.f32 %v110, %v308
    %v310 = vpop.f32.mrf.mxu0
    %v311 = vadd.f32 %v110, %v310
    %312 = vmatmul.bf16.gmra.mxu0 %v239
    %v313 = vpop.f32.mrf.mxu0
    %v314 = vadd.f32 %v110, %v313
    %v315 = vpop.f32.mrf.mxu0
    %v316 = vadd.f32 %v110, %v315
    %317 = vmatmul.bf16.gmra.mxu0 %v242
    %v318 = vpop.f32.mrf.mxu0
    %v319 = vadd.f32 %v110, %v318
    %v320 = vpop.f32.mrf.mxu0
    %v321 = vadd.f32 %v110, %v320
    %322 = vmatmul.bf16.gmra.mxu0 %v245
    %v323 = vpop.f32.mrf.mxu0
    %v324 = vadd.f32 %v110, %v323
    %v325 = vpop.f32.mrf.mxu0
    %v326 = vadd.f32 %v110, %v325
    %327 = vmatmul.bf16.gmra.mxu0 %v248
    %v328 = vpop.f32.mrf.mxu0
    %v329 = vadd.f32 %v110, %v328
    %v330 = vpop.f32.mrf.mxu0
    %v331 = vadd.f32 %v110, %v330
    %332 = vmatmul.bf16.gmra.mxu0 %v251
    %v333 = vpop.f32.mrf.mxu0
    %v334 = vadd.f32 %v110, %v333
    %v335 = vpop.f32.mrf.mxu0
    %v336 = vadd.f32 %v110, %v335
    %337 = vmatmul.bf16.gmra.mxu0 %v254
    %v338 = vpop.f32.mrf.mxu0
    %v339 = vadd.f32 %v110, %v338
    %v340 = vpop.f32.mrf.mxu0
    %v341 = vadd.f32 %v110, %v340
    %342 = vmatmul.bf16.gmra.mxu0 %v257
    %v343 = vpop.f32.mrf.mxu0
    %v344 = vadd.f32 %v110, %v343
    %v345 = vpop.f32.mrf.mxu0
    %v346 = vadd.f32 %v110, %v345
    %347 = vdwg.mxu0
    %v348 = vxor.u32 %v269, 2147483648
    %v349 = vxor.u32 %v271, 2147483648
    %v350 = vxor.u32 %v274, 2147483648
    %v351 = vxor.u32 %v276, 2147483648
    %v352 = vxor.u32 %v279, 2147483648
    %v353 = vxor.u32 %v281, 2147483648
    %v354 = vxor.u32 %v284, 2147483648
    %v355 = vxor.u32 %v286, 2147483648
    %v356 = vxor.u32 %v289, 2147483648
    %v357 = vxor.u32 %v291, 2147483648
    %v358 = vxor.u32 %v294, 2147483648
    %v359 = vxor.u32 %v296, 2147483648
    %v360 = vxor.u32 %v299, 2147483648
    %v361 = vxor.u32 %v301, 2147483648
    %v362 = vxor.u32 %v304, 2147483648
    %v363 = vxor.u32 %v306, 2147483648
    %v364 = vxor.u32 %v309, 2147483648
    %v365 = vxor.u32 %v311, 2147483648
    %v366 = vxor.u32 %v314, 2147483648
    %v367 = vxor.u32 %v316, 2147483648
    %v368 = vxor.u32 %v319, 2147483648
    %v369 = vxor.u32 %v321, 2147483648
    %v370 = vxor.u32 %v324, 2147483648
    %v371 = vxor.u32 %v326, 2147483648
    %v372 = vxor.u32 %v329, 2147483648
    %v373 = vxor.u32 %v331, 2147483648
    %v374 = vxor.u32 %v334, 2147483648
    %v375 = vxor.u32 %v336, 2147483648
    %v376 = vxor.u32 %v339, 2147483648
    %v377 = vxor.u32 %v341, 2147483648
    %v378 = vxor.u32 %v344, 2147483648
    %v379 = vxor.u32 %v346, 2147483648
    %v380 = vmul.f32 %v348, 1.442695
    %v381 = vpow.pop %v380
    %v382 = vmul.f32 %v349, 1.442695
    %v383 = vpow.pop %v382
    %v384 = vmul.f32 %v350, 1.442695
    %v385 = vpow.pop %v384
    %v386 = vmul.f32 %v351, 1.442695
    %v387 = vpow.pop %v386
    %v388 = vmul.f32 %v352, 1.442695
    %v389 = vpow.pop %v388
    %v390 = vmul.f32 %v353, 1.442695
    %v391 = vpow.pop %v390
    %v392 = vmul.f32 %v354, 1.442695
    %v393 = vpow.pop %v392
    %v394 = vmul.f32 %v355, 1.442695
    %v395 = vpow.pop %v394
    %v396 = vmul.f32 %v356, 1.442695
    %v397 = vpow.pop %v396
    %v398 = vmul.f32 %v357, 1.442695
    %v399 = vpow.pop %v398
    %v400 = vmul.f32 %v358, 1.442695
    %v401 = vpow.pop %v400
    %v402 = vmul.f32 %v359, 1.442695
    %v403 = vpow.pop %v402
    %v404 = vmul.f32 %v360, 1.442695
    %v405 = vpow.pop %v404
    %v406 = vmul.f32 %v361, 1.442695
    %v407 = vpow.pop %v406
    %v408 = vmul.f32 %v362, 1.442695
    %v409 = vpow.pop %v408
    %v410 = vmul.f32 %v363, 1.442695
    %v411 = vpow.pop %v410
    %v412 = vmul.f32 %v364, 1.442695
    %v413 = vpow.pop %v412
    %v414 = vmul.f32 %v365, 1.442695
    %v415 = vpow.pop %v414
    %v416 = vmul.f32 %v366, 1.442695
    %v417 = vpow.pop %v416
    %v418 = vmul.f32 %v367, 1.442695
    %v419 = vpow.pop %v418
    %v420 = vmul.f32 %v368, 1.442695
    %v421 = vpow.pop %v420
    %v422 = vmul.f32 %v369, 1.442695
    %v423 = vpow.pop %v422
    %v424 = vmul.f32 %v370, 1.442695
    %v425 = vpow.pop %v424
    %v426 = vmul.f32 %v371, 1.442695
    %v427 = vpow.pop %v426
    %v428 = vmul.f32 %v372, 1.442695
    %v429 = vpow.pop %v428
    %v430 = vmul.f32 %v373, 1.442695
    %v431 = vpow.pop %v430
    %v432 = vmul.f32 %v374, 1.442695
    %v433 = vpow.pop %v432
    %v434 = vmul.f32 %v375, 1.442695
    %v435 = vpow.pop %v434
    %v436 = vmul.f32 %v376, 1.442695
    %v437 = vpow.pop %v436
    %v438 = vmul.f32 %v377, 1.442695
    %v439 = vpow.pop %v438
    %v440 = vmul.f32 %v378, 1.442695
    %v441 = vpow.pop %v440
    %v442 = vmul.f32 %v379, 1.442695
    %v443 = vpow.pop %v442
    %v444 = vadd.f32 %v381, 1.0
    %v445 = vadd.f32 %v383, 1.0
    %v446 = vadd.f32 %v385, 1.0
    %v447 = vadd.f32 %v387, 1.0
    %v448 = vadd.f32 %v389, 1.0
    %v449 = vadd.f32 %v391, 1.0
    %v450 = vadd.f32 %v393, 1.0
    %v451 = vadd.f32 %v395, 1.0
    %v452 = vadd.f32 %v397, 1.0
    %v453 = vadd.f32 %v399, 1.0
    %v454 = vadd.f32 %v401, 1.0
    %v455 = vadd.f32 %v403, 1.0
    %v456 = vadd.f32 %v405, 1.0
    %v457 = vadd.f32 %v407, 1.0
    %v458 = vadd.f32 %v409, 1.0
    %v459 = vadd.f32 %v411, 1.0
    %v460 = vadd.f32 %v413, 1.0
    %v461 = vadd.f32 %v415, 1.0
    %v462 = vadd.f32 %v417, 1.0
    %v463 = vadd.f32 %v419, 1.0
    %v464 = vadd.f32 %v421, 1.0
    %v465 = vadd.f32 %v423, 1.0
    %v466 = vadd.f32 %v425, 1.0
    %v467 = vadd.f32 %v427, 1.0
    %v468 = vadd.f32 %v429, 1.0
    %v469 = vadd.f32 %v431, 1.0
    %v470 = vadd.f32 %v433, 1.0
    %v471 = vadd.f32 %v435, 1.0
    %v472 = vadd.f32 %v437, 1.0
    %v473 = vadd.f32 %v439, 1.0
    %v474 = vadd.f32 %v441, 1.0
    %v475 = vadd.f32 %v443, 1.0
    %v476 = vrcp.pop %v444
    %v477 = vmul.f32 %v444, %v476
    %v478 = vsub.f32 1.0, %v477
    %v479 = vmul.f32 %v476, %v478
    %v480 = vadd.f32 %v476, %v479
    %vm481 = vweird.f32 %v444
    %vm482 = vweird.f32 %v476
    %vm483 = vmor %vm481, %vm482
    %v484 = vsel %vm483, %v476, %v480
    %v485 = vand.u32 2147483647, %v444
    %vm486 = vcmp.eq.f32.partialorder %v485, 8.507059e+37
    %v487 = vand.u32 %v444, 2147483648
    %v488 = vor.u32 1.1754944e-38, %v487
    %v489 = vsel %vm486, %v488, %v484
    %v490 = vmul.f32 1.0, %v489
    %v491 = vrcp.pop %v445
    %v492 = vmul.f32 %v445, %v491
    %v493 = vsub.f32 1.0, %v492
    %v494 = vmul.f32 %v491, %v493
    %v495 = vadd.f32 %v491, %v494
    %vm496 = vweird.f32 %v445
    %vm497 = vweird.f32 %v491
    %vm498 = vmor %vm496, %vm497
    %v499 = vsel %vm498, %v491, %v495
    %v500 = vand.u32 2147483647, %v445
    %vm501 = vcmp.eq.f32.partialorder %v500, 8.507059e+37
    %v502 = vand.u32 %v445, 2147483648
    %v503 = vor.u32 1.1754944e-38, %v502
    %v504 = vsel %vm501, %v503, %v499
    %v505 = vmul.f32 1.0, %v504
    %v506 = vrcp.pop %v446
    %v507 = vmul.f32 %v446, %v506
    %v508 = vsub.f32 1.0, %v507
    %v509 = vmul.f32 %v506, %v508
    %v510 = vadd.f32 %v506, %v509
    %vm511 = vweird.f32 %v446
    %vm512 = vweird.f32 %v506
    %vm513 = vmor %vm511, %vm512
    %v514 = vsel %vm513, %v506, %v510
    %v515 = vand.u32 2147483647, %v446
    %vm516 = vcmp.eq.f32.partialorder %v515, 8.507059e+37
    %v517 = vand.u32 %v446, 2147483648
    %v518 = vor.u32 1.1754944e-38, %v517
    %v519 = vsel %vm516, %v518, %v514
    %v520 = vmul.f32 1.0, %v519
    %v521 = vrcp.pop %v447
    %v522 = vmul.f32 %v447, %v521
    %v523 = vsub.f32 1.0, %v522
    %v524 = vmul.f32 %v521, %v523
    %v525 = vadd.f32 %v521, %v524
    %vm526 = vweird.f32 %v447
    %vm527 = vweird.f32 %v521
    %vm528 = vmor %vm526, %vm527
    %v529 = vsel %vm528, %v521, %v525
    %v530 = vand.u32 2147483647, %v447
    %vm531 = vcmp.eq.f32.partialorder %v530, 8.507059e+37
    %v532 = vand.u32 %v447, 2147483648
    %v533 = vor.u32 1.1754944e-38, %v532
    %v534 = vsel %vm531, %v533, %v529
    %v535 = vmul.f32 1.0, %v534
    %v536 = vrcp.pop %v448
    %v537 = vmul.f32 %v448, %v536
    %v538 = vsub.f32 1.0, %v537
    %v539 = vmul.f32 %v536, %v538
    %v540 = vadd.f32 %v536, %v539
    %vm541 = vweird.f32 %v448
    %vm542 = vweird.f32 %v536
    %vm543 = vmor %vm541, %vm542
    %v544 = vsel %vm543, %v536, %v540
    %v545 = vand.u32 2147483647, %v448
    %vm546 = vcmp.eq.f32.partialorder %v545, 8.507059e+37
    %v547 = vand.u32 %v448, 2147483648
    %v548 = vor.u32 1.1754944e-38, %v547
    %v549 = vsel %vm546, %v548, %v544
    %v550 = vmul.f32 1.0, %v549
    %v551 = vrcp.pop %v449
    %v552 = vmul.f32 %v449, %v551
    %v553 = vsub.f32 1.0, %v552
    %v554 = vmul.f32 %v551, %v553
    %v555 = vadd.f32 %v551, %v554
    %vm556 = vweird.f32 %v449
    %vm557 = vweird.f32 %v551
    %vm558 = vmor %vm556, %vm557
    %v559 = vsel %vm558, %v551, %v555
    %v560 = vand.u32 2147483647, %v449
    %vm561 = vcmp.eq.f32.partialorder %v560, 8.507059e+37
    %v562 = vand.u32 %v449, 2147483648
    %v563 = vor.u32 1.1754944e-38, %v562
    %v564 = vsel %vm561, %v563, %v559
    %v565 = vmul.f32 1.0, %v564
    %v566 = vrcp.pop %v450
    %v567 = vmul.f32 %v450, %v566
    %v568 = vsub.f32 1.0, %v567
    %v569 = vmul.f32 %v566, %v568
    %v570 = vadd.f32 %v566, %v569
    %vm571 = vweird.f32 %v450
    %vm572 = vweird.f32 %v566
    %vm573 = vmor %vm571, %vm572
    %v574 = vsel %vm573, %v566, %v570
    %v575 = vand.u32 2147483647, %v450
    %vm576 = vcmp.eq.f32.partialorder %v575, 8.507059e+37
    %v577 = vand.u32 %v450, 2147483648
    %v578 = vor.u32 1.1754944e-38, %v577
    %v579 = vsel %vm576, %v578, %v574
    %v580 = vmul.f32 1.0, %v579
    %v581 = vrcp.pop %v451
    %v582 = vmul.f32 %v451, %v581
    %v583 = vsub.f32 1.0, %v582
    %v584 = vmul.f32 %v581, %v583
    %v585 = vadd.f32 %v581, %v584
    %vm586 = vweird.f32 %v451
    %vm587 = vweird.f32 %v581
    %vm588 = vmor %vm586, %vm587
    %v589 = vsel %vm588, %v581, %v585
    %v590 = vand.u32 2147483647, %v451
    %vm591 = vcmp.eq.f32.partialorder %v590, 8.507059e+37
    %v592 = vand.u32 %v451, 2147483648
    %v593 = vor.u32 1.1754944e-38, %v592
    %v594 = vsel %vm591, %v593, %v589
    %v595 = vmul.f32 1.0, %v594
    %v596 = vrcp.pop %v452
    %v597 = vmul.f32 %v452, %v596
    %v598 = vsub.f32 1.0, %v597
    %v599 = vmul.f32 %v596, %v598
    %v600 = vadd.f32 %v596, %v599
    %vm601 = vweird.f32 %v452
    %vm602 = vweird.f32 %v596
    %vm603 = vmor %vm601, %vm602
    %v604 = vsel %vm603, %v596, %v600
    %v605 = vand.u32 2147483647, %v452
    %vm606 = vcmp.eq.f32.partialorder %v605, 8.507059e+37
    %v607 = vand.u32 %v452, 2147483648
    %v608 = vor.u32 1.1754944e-38, %v607
    %v609 = vsel %vm606, %v608, %v604
    %v610 = vmul.f32 1.0, %v609
    %v611 = vrcp.pop %v453
    %v612 = vmul.f32 %v453, %v611
    %v613 = vsub.f32 1.0, %v612
    %v614 = vmul.f32 %v611, %v613
    %v615 = vadd.f32 %v611, %v614
    %vm616 = vweird.f32 %v453
    %vm617 = vweird.f32 %v611
    %vm618 = vmor %vm616, %vm617
    %v619 = vsel %vm618, %v611, %v615
    %v620 = vand.u32 2147483647, %v453
    %vm621 = vcmp.eq.f32.partialorder %v620, 8.507059e+37
    %v622 = vand.u32 %v453, 2147483648
    %v623 = vor.u32 1.1754944e-38, %v622
    %v624 = vsel %vm621, %v623, %v619
    %v625 = vmul.f32 1.0, %v624
    %v626 = vrcp.pop %v454
    %v627 = vmul.f32 %v454, %v626
    %v628 = vsub.f32 1.0, %v627
    %v629 = vmul.f32 %v626, %v628
    %v630 = vadd.f32 %v626, %v629
    %vm631 = vweird.f32 %v454
    %vm632 = vweird.f32 %v626
    %vm633 = vmor %vm631, %vm632
    %v634 = vsel %vm633, %v626, %v630
    %v635 = vand.u32 2147483647, %v454
    %vm636 = vcmp.eq.f32.partialorder %v635, 8.507059e+37
    %v637 = vand.u32 %v454, 2147483648
    %v638 = vor.u32 1.1754944e-38, %v637
    %v639 = vsel %vm636, %v638, %v634
    %v640 = vmul.f32 1.0, %v639
    %v641 = vrcp.pop %v455
    %v642 = vmul.f32 %v455, %v641
    %v643 = vsub.f32 1.0, %v642
    %v644 = vmul.f32 %v641, %v643
    %v645 = vadd.f32 %v641, %v644
    %vm646 = vweird.f32 %v455
    %vm647 = vweird.f32 %v641
    %vm648 = vmor %vm646, %vm647
    %v649 = vsel %vm648, %v641, %v645
    %v650 = vand.u32 2147483647, %v455
    %vm651 = vcmp.eq.f32.partialorder %v650, 8.507059e+37
    %v652 = vand.u32 %v455, 2147483648
    %v653 = vor.u32 1.1754944e-38, %v652
    %v654 = vsel %vm651, %v653, %v649
    %v655 = vmul.f32 1.0, %v654
    %v656 = vrcp.pop %v456
    %v657 = vmul.f32 %v456, %v656
    %v658 = vsub.f32 1.0, %v657
    %v659 = vmul.f32 %v656, %v658
    %v660 = vadd.f32 %v656, %v659
    %vm661 = vweird.f32 %v456
    %vm662 = vweird.f32 %v656
    %vm663 = vmor %vm661, %vm662
    %v664 = vsel %vm663, %v656, %v660
    %v665 = vand.u32 2147483647, %v456
    %vm666 = vcmp.eq.f32.partialorder %v665, 8.507059e+37
    %v667 = vand.u32 %v456, 2147483648
    %v668 = vor.u32 1.1754944e-38, %v667
    %v669 = vsel %vm666, %v668, %v664
    %v670 = vmul.f32 1.0, %v669
    %v671 = vrcp.pop %v457
    %v672 = vmul.f32 %v457, %v671
    %v673 = vsub.f32 1.0, %v672
    %v674 = vmul.f32 %v671, %v673
    %v675 = vadd.f32 %v671, %v674
    %vm676 = vweird.f32 %v457
    %vm677 = vweird.f32 %v671
    %vm678 = vmor %vm676, %vm677
    %v679 = vsel %vm678, %v671, %v675
    %v680 = vand.u32 2147483647, %v457
    %vm681 = vcmp.eq.f32.partialorder %v680, 8.507059e+37
    %v682 = vand.u32 %v457, 2147483648
    %v683 = vor.u32 1.1754944e-38, %v682
    %v684 = vsel %vm681, %v683, %v679
    %v685 = vmul.f32 1.0, %v684
    %v686 = vrcp.pop %v458
    %v687 = vmul.f32 %v458, %v686
    %v688 = vsub.f32 1.0, %v687
    %v689 = vmul.f32 %v686, %v688
    %v690 = vadd.f32 %v686, %v689
    %vm691 = vweird.f32 %v458
    %vm692 = vweird.f32 %v686
    %vm693 = vmor %vm691, %vm692
    %v694 = vsel %vm693, %v686, %v690
    %v695 = vand.u32 2147483647, %v458
    %vm696 = vcmp.eq.f32.partialorder %v695, 8.507059e+37
    %v697 = vand.u32 %v458, 2147483648
    %v698 = vor.u32 1.1754944e-38, %v697
    %v699 = vsel %vm696, %v698, %v694
    %v700 = vmul.f32 1.0, %v699
    %v701 = vrcp.pop %v459
    %v702 = vmul.f32 %v459, %v701
    %v703 = vsub.f32 1.0, %v702
    %v704 = vmul.f32 %v701, %v703
    %v705 = vadd.f32 %v701, %v704
    %vm706 = vweird.f32 %v459
    %vm707 = vweird.f32 %v701
    %vm708 = vmor %vm706, %vm707
    %v709 = vsel %vm708, %v701, %v705
    %v710 = vand.u32 2147483647, %v459
    %vm711 = vcmp.eq.f32.partialorder %v710, 8.507059e+37
    %v712 = vand.u32 %v459, 2147483648
    %v713 = vor.u32 1.1754944e-38, %v712
    %v714 = vsel %vm711, %v713, %v709
    %v715 = vmul.f32 1.0, %v714
    %v716 = vrcp.pop %v460
    %v717 = vmul.f32 %v460, %v716
    %v718 = vsub.f32 1.0, %v717
    %v719 = vmul.f32 %v716, %v718
    %v720 = vadd.f32 %v716, %v719
    %vm721 = vweird.f32 %v460
    %vm722 = vweird.f32 %v716
    %vm723 = vmor %vm721, %vm722
    %v724 = vsel %vm723, %v716, %v720
    %v725 = vand.u32 2147483647, %v460
    %vm726 = vcmp.eq.f32.partialorder %v725, 8.507059e+37
    %v727 = vand.u32 %v460, 2147483648
    %v728 = vor.u32 1.1754944e-38, %v727
    %v729 = vsel %vm726, %v728, %v724
    %v730 = vmul.f32 1.0, %v729
    %v731 = vrcp.pop %v461
    %v732 = vmul.f32 %v461, %v731
    %v733 = vsub.f32 1.0, %v732
    %v734 = vmul.f32 %v731, %v733
    %v735 = vadd.f32 %v731, %v734
    %vm736 = vweird.f32 %v461
    %vm737 = vweird.f32 %v731
    %vm738 = vmor %vm736, %vm737
    %v739 = vsel %vm738, %v731, %v735
    %v740 = vand.u32 2147483647, %v461
    %vm741 = vcmp.eq.f32.partialorder %v740, 8.507059e+37
    %v742 = vand.u32 %v461, 2147483648
    %v743 = vor.u32 1.1754944e-38, %v742
    %v744 = vsel %vm741, %v743, %v739
    %v745 = vmul.f32 1.0, %v744
    %v746 = vrcp.pop %v462
    %v747 = vmul.f32 %v462, %v746
    %v748 = vsub.f32 1.0, %v747
    %v749 = vmul.f32 %v746, %v748
    %v750 = vadd.f32 %v746, %v749
    %vm751 = vweird.f32 %v462
    %vm752 = vweird.f32 %v746
    %vm753 = vmor %vm751, %vm752
    %v754 = vsel %vm753, %v746, %v750
    %v755 = vand.u32 2147483647, %v462
    %vm756 = vcmp.eq.f32.partialorder %v755, 8.507059e+37
    %v757 = vand.u32 %v462, 2147483648
    %v758 = vor.u32 1.1754944e-38, %v757
    %v759 = vsel %vm756, %v758, %v754
    %v760 = vmul.f32 1.0, %v759
    %v761 = vrcp.pop %v463
    %v762 = vmul.f32 %v463, %v761
    %v763 = vsub.f32 1.0, %v762
    %v764 = vmul.f32 %v761, %v763
    %v765 = vadd.f32 %v761, %v764
    %vm766 = vweird.f32 %v463
    %vm767 = vweird.f32 %v761
    %vm768 = vmor %vm766, %vm767
    %v769 = vsel %vm768, %v761, %v765
    %v770 = vand.u32 2147483647, %v463
    %vm771 = vcmp.eq.f32.partialorder %v770, 8.507059e+37
    %v772 = vand.u32 %v463, 2147483648
    %v773 = vor.u32 1.1754944e-38, %v772
    %v774 = vsel %vm771, %v773, %v769
    %v775 = vmul.f32 1.0, %v774
    %v776 = vrcp.pop %v464
    %v777 = vmul.f32 %v464, %v776
    %v778 = vsub.f32 1.0, %v777
    %v779 = vmul.f32 %v776, %v778
    %v780 = vadd.f32 %v776, %v779
    %vm781 = vweird.f32 %v464
    %vm782 = vweird.f32 %v776
    %vm783 = vmor %vm781, %vm782
    %v784 = vsel %vm783, %v776, %v780
    %v785 = vand.u32 2147483647, %v464
    %vm786 = vcmp.eq.f32.partialorder %v785, 8.507059e+37
    %v787 = vand.u32 %v464, 2147483648
    %v788 = vor.u32 1.1754944e-38, %v787
    %v789 = vsel %vm786, %v788, %v784
    %v790 = vmul.f32 1.0, %v789
    %v791 = vrcp.pop %v465
    %v792 = vmul.f32 %v465, %v791
    %v793 = vsub.f32 1.0, %v792
    %v794 = vmul.f32 %v791, %v793
    %v795 = vadd.f32 %v791, %v794
    %vm796 = vweird.f32 %v465
    %vm797 = vweird.f32 %v791
    %vm798 = vmor %vm796, %vm797
    %v799 = vsel %vm798, %v791, %v795
    %v800 = vand.u32 2147483647, %v465
    %vm801 = vcmp.eq.f32.partialorder %v800, 8.507059e+37
    %v802 = vand.u32 %v465, 2147483648
    %v803 = vor.u32 1.1754944e-38, %v802
    %v804 = vsel %vm801, %v803, %v799
    %v805 = vmul.f32 1.0, %v804
    %v806 = vrcp.pop %v466
    %v807 = vmul.f32 %v466, %v806
    %v808 = vsub.f32 1.0, %v807
    %v809 = vmul.f32 %v806, %v808
    %v810 = vadd.f32 %v806, %v809
    %vm811 = vweird.f32 %v466
    %vm812 = vweird.f32 %v806
    %vm813 = vmor %vm811, %vm812
    %v814 = vsel %vm813, %v806, %v810
    %v815 = vand.u32 2147483647, %v466
    %vm816 = vcmp.eq.f32.partialorder %v815, 8.507059e+37
    %v817 = vand.u32 %v466, 2147483648
    %v818 = vor.u32 1.1754944e-38, %v817
    %v819 = vsel %vm816, %v818, %v814
    %v820 = vmul.f32 1.0, %v819
    %v821 = vrcp.pop %v467
    %v822 = vmul.f32 %v467, %v821
    %v823 = vsub.f32 1.0, %v822
    %v824 = vmul.f32 %v821, %v823
    %v825 = vadd.f32 %v821, %v824
    %vm826 = vweird.f32 %v467
    %vm827 = vweird.f32 %v821
    %vm828 = vmor %vm826, %vm827
    %v829 = vsel %vm828, %v821, %v825
    %v830 = vand.u32 2147483647, %v467
    %vm831 = vcmp.eq.f32.partialorder %v830, 8.507059e+37
    %v832 = vand.u32 %v467, 2147483648
    %v833 = vor.u32 1.1754944e-38, %v832
    %v834 = vsel %vm831, %v833, %v829
    %v835 = vmul.f32 1.0, %v834
    %v836 = vrcp.pop %v468
    %v837 = vmul.f32 %v468, %v836
    %v838 = vsub.f32 1.0, %v837
    %v839 = vmul.f32 %v836, %v838
    %v840 = vadd.f32 %v836, %v839
    %vm841 = vweird.f32 %v468
    %vm842 = vweird.f32 %v836
    %vm843 = vmor %vm841, %vm842
    %v844 = vsel %vm843, %v836, %v840
    %v845 = vand.u32 2147483647, %v468
    %vm846 = vcmp.eq.f32.partialorder %v845, 8.507059e+37
    %v847 = vand.u32 %v468, 2147483648
    %v848 = vor.u32 1.1754944e-38, %v847
    %v849 = vsel %vm846, %v848, %v844
    %v850 = vmul.f32 1.0, %v849
    %v851 = vrcp.pop %v469
    %v852 = vmul.f32 %v469, %v851
    %v853 = vsub.f32 1.0, %v852
    %v854 = vmul.f32 %v851, %v853
    %v855 = vadd.f32 %v851, %v854
    %vm856 = vweird.f32 %v469
    %vm857 = vweird.f32 %v851
    %vm858 = vmor %vm856, %vm857
    %v859 = vsel %vm858, %v851, %v855
    %v860 = vand.u32 2147483647, %v469
    %vm861 = vcmp.eq.f32.partialorder %v860, 8.507059e+37
    %v862 = vand.u32 %v469, 2147483648
    %v863 = vor.u32 1.1754944e-38, %v862
    %v864 = vsel %vm861, %v863, %v859
    %v865 = vmul.f32 1.0, %v864
    %v866 = vrcp.pop %v470
    %v867 = vmul.f32 %v470, %v866
    %v868 = vsub.f32 1.0, %v867
    %v869 = vmul.f32 %v866, %v868
    %v870 = vadd.f32 %v866, %v869
    %vm871 = vweird.f32 %v470
    %vm872 = vweird.f32 %v866
    %vm873 = vmor %vm871, %vm872
    %v874 = vsel %vm873, %v866, %v870
    %v875 = vand.u32 2147483647, %v470
    %vm876 = vcmp.eq.f32.partialorder %v875, 8.507059e+37
    %v877 = vand.u32 %v470, 2147483648
    %v878 = vor.u32 1.1754944e-38, %v877
    %v879 = vsel %vm876, %v878, %v874
    %v880 = vmul.f32 1.0, %v879
    %v881 = vrcp.pop %v471
    %v882 = vmul.f32 %v471, %v881
    %v883 = vsub.f32 1.0, %v882
    %v884 = vmul.f32 %v881, %v883
    %v885 = vadd.f32 %v881, %v884
    %vm886 = vweird.f32 %v471
    %vm887 = vweird.f32 %v881
    %vm888 = vmor %vm886, %vm887
    %v889 = vsel %vm888, %v881, %v885
    %v890 = vand.u32 2147483647, %v471
    %vm891 = vcmp.eq.f32.partialorder %v890, 8.507059e+37
    %v892 = vand.u32 %v471, 2147483648
    %v893 = vor.u32 1.1754944e-38, %v892
    %v894 = vsel %vm891, %v893, %v889
    %v895 = vmul.f32 1.0, %v894
    %v896 = vrcp.pop %v472
    %v897 = vmul.f32 %v472, %v896
    %v898 = vsub.f32 1.0, %v897
    %v899 = vmul.f32 %v896, %v898
    %v900 = vadd.f32 %v896, %v899
    %vm901 = vweird.f32 %v472
    %vm902 = vweird.f32 %v896
    %vm903 = vmor %vm901, %vm902
    %v904 = vsel %vm903, %v896, %v900
    %v905 = vand.u32 2147483647, %v472
    %vm906 = vcmp.eq.f32.partialorder %v905, 8.507059e+37
    %v907 = vand.u32 %v472, 2147483648
    %v908 = vor.u32 1.1754944e-38, %v907
    %v909 = vsel %vm906, %v908, %v904
    %v910 = vmul.f32 1.0, %v909
    %v911 = vrcp.pop %v473
    %v912 = vmul.f32 %v473, %v911
    %v913 = vsub.f32 1.0, %v912
    %v914 = vmul.f32 %v911, %v913
    %v915 = vadd.f32 %v911, %v914
    %vm916 = vweird.f32 %v473
    %vm917 = vweird.f32 %v911
    %vm918 = vmor %vm916, %vm917
    %v919 = vsel %vm918, %v911, %v915
    %v920 = vand.u32 2147483647, %v473
    %vm921 = vcmp.eq.f32.partialorder %v920, 8.507059e+37
    %v922 = vand.u32 %v473, 2147483648
    %v923 = vor.u32 1.1754944e-38, %v922
    %v924 = vsel %vm921, %v923, %v919
    %v925 = vmul.f32 1.0, %v924
    %v926 = vrcp.pop %v474
    %v927 = vmul.f32 %v474, %v926
    %v928 = vsub.f32 1.0, %v927
    %v929 = vmul.f32 %v926, %v928
    %v930 = vadd.f32 %v926, %v929
    %vm931 = vweird.f32 %v474
    %vm932 = vweird.f32 %v926
    %vm933 = vmor %vm931, %vm932
    %v934 = vsel %vm933, %v926, %v930
    %v935 = vand.u32 2147483647, %v474
    %vm936 = vcmp.eq.f32.partialorder %v935, 8.507059e+37
    %v937 = vand.u32 %v474, 2147483648
    %v938 = vor.u32 1.1754944e-38, %v937
    %v939 = vsel %vm936, %v938, %v934
    %v940 = vmul.f32 1.0, %v939
    %v941 = vrcp.pop %v475
    %v942 = vmul.f32 %v475, %v941
    %v943 = vsub.f32 1.0, %v942
    %v944 = vmul.f32 %v941, %v943
    %v945 = vadd.f32 %v941, %v944
    %vm946 = vweird.f32 %v475
    %vm947 = vweird.f32 %v941
    %vm948 = vmor %vm946, %vm947
    %v949 = vsel %vm948, %v941, %v945
    %v950 = vand.u32 2147483647, %v475
    %vm951 = vcmp.eq.f32.partialorder %v950, 8.507059e+37
    %v952 = vand.u32 %v475, 2147483648
    %v953 = vor.u32 1.1754944e-38, %v952
    %v954 = vsel %vm951, %v953, %v949
    %v955 = vmul.f32 1.0, %v954
    %v956 = vmul.f32 %v269, %v490
    %v957 = vmul.f32 %v271, %v505
    %v958 = vmul.f32 %v274, %v520
    %v959 = vmul.f32 %v276, %v535
    %v960 = vmul.f32 %v279, %v550
    %v961 = vmul.f32 %v281, %v565
    %v962 = vmul.f32 %v284, %v580
    %v963 = vmul.f32 %v286, %v595
    %v964 = vmul.f32 %v289, %v610
    %v965 = vmul.f32 %v291, %v625
    %v966 = vmul.f32 %v294, %v640
    %v967 = vmul.f32 %v296, %v655
    %v968 = vmul.f32 %v299, %v670
    %v969 = vmul.f32 %v301, %v685
    %v970 = vmul.f32 %v304, %v700
    %v971 = vmul.f32 %v306, %v715
    %v972 = vmul.f32 %v309, %v730
    %v973 = vmul.f32 %v311, %v745
    %v974 = vmul.f32 %v314, %v760
    %v975 = vmul.f32 %v316, %v775
    %v976 = vmul.f32 %v319, %v790
    %v977 = vmul.f32 %v321, %v805
    %v978 = vmul.f32 %v324, %v820
    %v979 = vmul.f32 %v326, %v835
    %v980 = vmul.f32 %v329, %v850
    %v981 = vmul.f32 %v331, %v865
    %v982 = vmul.f32 %v334, %v880
    %v983 = vmul.f32 %v336, %v895
    %v984 = vmul.f32 %v339, %v910
    %v985 = vmul.f32 %v341, %v925
    %v986 = vmul.f32 %v344, %v940
    %v987 = vmul.f32 %v346, %v955
    %v988 = vld [vmem:[%s4] sm:$0x1]
    %v989 = vpack.c.bf16 %v957, %v956
    %v990 = vpack.c.bf16 %v959, %v958
    %v991 = vpack.c.bf16 %v961, %v960
    %v992 = vpack.c.bf16 %v963, %v962
    %v993 = vld [vmem:[%s3] sm:$0xf]
    %v994 = vld [vmem:[%s3 + $0x4] sm:$0xf]
    %v997 = vunpack.c.l.b16 %v993
    %v998 = vunpack.c.l.b16 %v994
    %v999 = vpack.c.b16 %v998, %v997
    %vm1001 = vcmask 130048
    %v1003 = vsel %vm1001, %v989, 0
    %v1006 = vsel %vm1001, %v990, 0
    %v1009 = vsel %vm1001, %v991, 0
    %v1012 = vsel %vm1001, %v992, 0
    %1014 = vmatpush.bf16.msra.mxu0 0
    %1015 = vmatpush.bf16.msra.mxu0 0
    %1016 = vmatpush.bf16.msra.mxu0 0
    %1017 = vmatpush.bf16.msra.mxu0 0
    %1018 = vmatpush.bf16.msra.mxu0 0
    %1019 = vmatpush.bf16.msra.mxu0 0
    %1020 = vmatpush.bf16.msra.mxu0 0
    %1021 = vmatpush.bf16.msra.mxu0 %v999
    %1022 = vmatmul.bf16.gmra.mxu0 %v1003
    %v1023 = vpop.f32.mrf.mxu0
    %v1024 = vadd.f32 0.0, %v1023
    %v1025 = vpop.f32.mrf.mxu0
    %v1026 = vadd.f32 0.0, %v1025
    %1027 = vmatmul.bf16.gmra.mxu0 %v1006
    %v1028 = vpop.f32.mrf.mxu0
    %v1029 = vadd.f32 0.0, %v1028
    %v1030 = vpop.f32.mrf.mxu0
    %v1031 = vadd.f32 0.0, %v1030
    %1032 = vmatmul.bf16.gmra.mxu0 %v1009
    %v1033 = vpop.f32.mrf.mxu0
    %v1034 = vadd.f32 0.0, %v1033
    %v1035 = vpop.f32.mrf.mxu0
    %v1036 = vadd.f32 0.0, %v1035
    %1037 = vmatmul.bf16.gmra.mxu0 %v1012
    %v1038 = vpop.f32.mrf.mxu0
    %v1039 = vadd.f32 0.0, %v1038
    %v1040 = vpop.f32.mrf.mxu0
    %v1041 = vadd.f32 0.0, %v1040
    %1042 = vdwg.mxu0
    %v1044 = vperm.slane %v988, 0
    %v1046 = vadd.f32 %v1044, %v1024
    %v1047 = vadd.f32 %v1044, %v1026
    %v1048 = vadd.f32 %v1044, %v1029
    %v1049 = vadd.f32 %v1044, %v1031
    %v1050 = vadd.f32 %v1044, %v1034
    %v1051 = vadd.f32 %v1044, %v1036
    %v1052 = vadd.f32 %v1044, %v1039
    %v1053 = vadd.f32 %v1044, %v1041
    %v1054 = vpack.c.bf16 %v965, %v964
    %v1055 = vpack.c.bf16 %v967, %v966
    %v1056 = vpack.c.bf16 %v969, %v968
    %v1057 = vpack.c.bf16 %v971, %v970
    %s1058 = scalar_lea.vmem %s3, 8
    %v1059 = vld [vmem:[%s1058] sm:$0xf]
    %v1060 = vld [vmem:[%s1058 + $0x4] sm:$0xf]
    %v1063 = vunpack.c.l.b16 %v1059
    %v1064 = vunpack.c.l.b16 %v1060
    %v1065 = vpack.c.b16 %v1064, %v1063
    %v1068 = vsel %vm1001, %v1054, 0
    %v1071 = vsel %vm1001, %v1055, 0
    %v1074 = vsel %vm1001, %v1056, 0
    %v1077 = vsel %vm1001, %v1057, 0
    %1079 = vmatpush.bf16.msra.mxu0 0
    %1080 = vmatpush.bf16.msra.mxu0 0
    %1081 = vmatpush.bf16.msra.mxu0 0
    %1082 = vmatpush.bf16.msra.mxu0 0
    %1083 = vmatpush.bf16.msra.mxu0 0
    %1084 = vmatpush.bf16.msra.mxu0 0
    %1085 = vmatpush.bf16.msra.mxu0 0
    %1086 = vmatpush.bf16.msra.mxu0 %v1065
    %1087 = vmatmul.bf16.gmra.mxu0 %v1068
    %v1088 = vpop.f32.mrf.mxu0
    %v1089 = vadd.f32 0.0, %v1088
    %v1090 = vpop.f32.mrf.mxu0
    %v1091 = vadd.f32 0.0, %v1090
    %1092 = vmatmul.bf16.gmra.mxu0 %v1071
    %v1093 = vpop.f32.mrf.mxu0
    %v1094 = vadd.f32 0.0, %v1093
    %v1095 = vpop.f32.mrf.mxu0
    %v1096 = vadd.f32 0.0, %v1095
    %1097 = vmatmul.bf16.gmra.mxu0 %v1074
    %v1098 = vpop.f32.mrf.mxu0
    %v1099 = vadd.f32 0.0, %v1098
    %v1100 = vpop.f32.mrf.mxu0
    %v1101 = vadd.f32 0.0, %v1100
    %1102 = vmatmul.bf16.gmra.mxu0 %v1077
    %v1103 = vpop.f32.mrf.mxu0
    %v1104 = vadd.f32 0.0, %v1103
    %v1105 = vpop.f32.mrf.mxu0
    %v1106 = vadd.f32 0.0, %v1105
    %1107 = vdwg.mxu0
    %v1108 = vadd.f32 %v1046, %v1089
    %v1109 = vadd.f32 %v1047, %v1091
    %v1110 = vadd.f32 %v1048, %v1094
    %v1111 = vadd.f32 %v1049, %v1096
    %v1112 = vadd.f32 %v1050, %v1099
    %v1113 = vadd.f32 %v1051, %v1101
    %v1114 = vadd.f32 %v1052, %v1104
    %v1115 = vadd.f32 %v1053, %v1106
    %v1116 = vpack.c.bf16 %v973, %v972
    %v1117 = vpack.c.bf16 %v975, %v974
    %v1118 = vpack.c.bf16 %v977, %v976
    %v1119 = vpack.c.bf16 %v979, %v978
    %s1120 = scalar_lea.vmem %s3, 16
    %v1121 = vld [vmem:[%s1120] sm:$0xf]
    %v1122 = vld [vmem:[%s1120 + $0x4] sm:$0xf]
    %v1125 = vunpack.c.l.b16 %v1121
    %v1126 = vunpack.c.l.b16 %v1122
    %v1127 = vpack.c.b16 %v1126, %v1125
    %v1130 = vsel %vm1001, %v1116, 0
    %v1133 = vsel %vm1001, %v1117, 0
    %v1136 = vsel %vm1001, %v1118, 0
    %v1139 = vsel %vm1001, %v1119, 0
    %1141 = vmatpush.bf16.msra.mxu0 0
    %1142 = vmatpush.bf16.msra.mxu0 0
    %1143 = vmatpush.bf16.msra.mxu0 0
    %1144 = vmatpush.bf16.msra.mxu0 0
    %1145 = vmatpush.bf16.msra.mxu0 0
    %1146 = vmatpush.bf16.msra.mxu0 0
    %1147 = vmatpush.bf16.msra.mxu0 0
    %1148 = vmatpush.bf16.msra.mxu0 %v1127
    %1149 = vmatmul.bf16.gmra.mxu0 %v1130
    %v1150 = vpop.f32.mrf.mxu0
    %v1151 = vadd.f32 0.0, %v1150
    %v1152 = vpop.f32.mrf.mxu0
    %v1153 = vadd.f32 0.0, %v1152
    %1154 = vmatmul.bf16.gmra.mxu0 %v1133
    %v1155 = vpop.f32.mrf.mxu0
    %v1156 = vadd.f32 0.0, %v1155
    %v1157 = vpop.f32.mrf.mxu0
    %v1158 = vadd.f32 0.0, %v1157
    %1159 = vmatmul.bf16.gmra.mxu0 %v1136
    %v1160 = vpop.f32.mrf.mxu0
    %v1161 = vadd.f32 0.0, %v1160
    %v1162 = vpop.f32.mrf.mxu0
    %v1163 = vadd.f32 0.0, %v1162
    %1164 = vmatmul.bf16.gmra.mxu0 %v1139
    %v1165 = vpop.f32.mrf.mxu0
    %v1166 = vadd.f32 0.0, %v1165
    %v1167 = vpop.f32.mrf.mxu0
    %v1168 = vadd.f32 0.0, %v1167
    %1169 = vdwg.mxu0
    %v1170 = vadd.f32 %v1108, %v1151
    %v1171 = vadd.f32 %v1109, %v1153
    %v1172 = vadd.f32 %v1110, %v1156
    %v1173 = vadd.f32 %v1111, %v1158
    %v1174 = vadd.f32 %v1112, %v1161
    %v1175 = vadd.f32 %v1113, %v1163
    %v1176 = vadd.f32 %v1114, %v1166
    %v1177 = vadd.f32 %v1115, %v1168
    %v1178 = vpack.c.bf16 %v981, %v980
    %v1179 = vpack.c.bf16 %v983, %v982
    %v1180 = vpack.c.bf16 %v985, %v984
    %v1181 = vpack.c.bf16 %v987, %v986
    %s1182 = scalar_lea.vmem %s3, 24
    %v1183 = vld [vmem:[%s1182] sm:$0xf]
    %v1184 = vld [vmem:[%s1182 + $0x4] sm:$0xf]
    %v1187 = vunpack.c.l.b16 %v1183
    %v1188 = vunpack.c.l.b16 %v1184
    %v1189 = vpack.c.b16 %v1188, %v1187
    %v1192 = vsel %vm1001, %v1178, 0
    %v1195 = vsel %vm1001, %v1179, 0
    %v1198 = vsel %vm1001, %v1180, 0
    %v1201 = vsel %vm1001, %v1181, 0
    %1203 = vmatpush.bf16.msra.mxu0 0
    %1204 = vmatpush.bf16.msra.mxu0 0
    %1205 = vmatpush.bf16.msra.mxu0 0
    %1206 = vmatpush.bf16.msra.mxu0 0
    %1207 = vmatpush.bf16.msra.mxu0 0
    %1208 = vmatpush.bf16.msra.mxu0 0
    %1209 = vmatpush.bf16.msra.mxu0 0
    %1210 = vmatpush.bf16.msra.mxu0 %v1189
    %1211 = vmatmul.bf16.gmra.mxu0 %v1192
    %v1212 = vpop.f32.mrf.mxu0
    %v1213 = vadd.f32 0.0, %v1212
    %v1214 = vpop.f32.mrf.mxu0
    %v1215 = vadd.f32 0.0, %v1214
    %1216 = vmatmul.bf16.gmra.mxu0 %v1195
    %v1217 = vpop.f32.mrf.mxu0
    %v1218 = vadd.f32 0.0, %v1217
    %v1219 = vpop.f32.mrf.mxu0
    %v1220 = vadd.f32 0.0, %v1219
    %1221 = vmatmul.bf16.gmra.mxu0 %v1198
    %v1222 = vpop.f32.mrf.mxu0
    %v1223 = vadd.f32 0.0, %v1222
    %v1224 = vpop.f32.mrf.mxu0
    %v1225 = vadd.f32 0.0, %v1224
    %1226 = vmatmul.bf16.gmra.mxu0 %v1201
    %v1227 = vpop.f32.mrf.mxu0
    %v1228 = vadd.f32 0.0, %v1227
    %v1229 = vpop.f32.mrf.mxu0
    %v1230 = vadd.f32 0.0, %v1229
    %1231 = vdwg.mxu0
    %v1232 = vadd.f32 %v1170, %v1213
    %v1233 = vadd.f32 %v1171, %v1215
    %v1234 = vadd.f32 %v1172, %v1218
    %v1235 = vadd.f32 %v1173, %v1220
    %v1236 = vadd.f32 %v1174, %v1223
    %v1237 = vadd.f32 %v1175, %v1225
    %v1238 = vadd.f32 %v1176, %v1228
    %v1239 = vadd.f32 %v1177, %v1230
    %v1240 = vxor.u32 %v1232, 2147483648
    %v1241 = vxor.u32 %v1233, 2147483648
    %v1242 = vxor.u32 %v1234, 2147483648
    %v1243 = vxor.u32 %v1235, 2147483648
    %v1244 = vxor.u32 %v1236, 2147483648
    %v1245 = vxor.u32 %v1237, 2147483648
    %v1246 = vxor.u32 %v1238, 2147483648
    %v1247 = vxor.u32 %v1239, 2147483648
    %v1248 = vmul.f32 %v1240, 1.442695
    %v1249 = vpow.pop %v1248
    %v1250 = vmul.f32 %v1241, 1.442695
    %v1251 = vpow.pop %v1250
    %v1252 = vmul.f32 %v1242, 1.442695
    %v1253 = vpow.pop %v1252
    %v1254 = vmul.f32 %v1243, 1.442695
    %v1255 = vpow.pop %v1254
    %v1256 = vmul.f32 %v1244, 1.442695
    %v1257 = vpow.pop %v1256
    %v1258 = vmul.f32 %v1245, 1.442695
    %v1259 = vpow.pop %v1258
    %v1260 = vmul.f32 %v1246, 1.442695
    %v1261 = vpow.pop %v1260
    %v1262 = vmul.f32 %v1247, 1.442695
    %v1263 = vpow.pop %v1262
    %v1264 = vadd.f32 %v1249, 1.0
    %v1265 = vadd.f32 %v1251, 1.0
    %v1266 = vadd.f32 %v1253, 1.0
    %v1267 = vadd.f32 %v1255, 1.0
    %v1268 = vadd.f32 %v1257, 1.0
    %v1269 = vadd.f32 %v1259, 1.0
    %v1270 = vadd.f32 %v1261, 1.0
    %v1271 = vadd.f32 %v1263, 1.0
    %v1272 = vrcp.pop %v1264
    %v1273 = vmul.f32 %v1264, %v1272
    %v1274 = vsub.f32 1.0, %v1273
    %v1275 = vmul.f32 %v1272, %v1274
    %v1276 = vadd.f32 %v1272, %v1275
    %vm1277 = vweird.f32 %v1264
    %vm1278 = vweird.f32 %v1272
    %vm1279 = vmor %vm1277, %vm1278
    %v1280 = vsel %vm1279, %v1272, %v1276
    %v1281 = vand.u32 2147483647, %v1264
    %vm1282 = vcmp.eq.f32.partialorder %v1281, 8.507059e+37
    %v1283 = vand.u32 %v1264, 2147483648
    %v1284 = vor.u32 1.1754944e-38, %v1283
    %v1285 = vsel %vm1282, %v1284, %v1280
    %v1286 = vmul.f32 1.0, %v1285
    %v1287 = vrcp.pop %v1265
    %v1288 = vmul.f32 %v1265, %v1287
    %v1289 = vsub.f32 1.0, %v1288
    %v1290 = vmul.f32 %v1287, %v1289
    %v1291 = vadd.f32 %v1287, %v1290
    %vm1292 = vweird.f32 %v1265
    %vm1293 = vweird.f32 %v1287
    %vm1294 = vmor %vm1292, %vm1293
    %v1295 = vsel %vm1294, %v1287, %v1291
    %v1296 = vand.u32 2147483647, %v1265
    %vm1297 = vcmp.eq.f32.partialorder %v1296, 8.507059e+37
    %v1298 = vand.u32 %v1265, 2147483648
    %v1299 = vor.u32 1.1754944e-38, %v1298
    %v1300 = vsel %vm1297, %v1299, %v1295
    %v1301 = vmul.f32 1.0, %v1300
    %v1302 = vrcp.pop %v1266
    %v1303 = vmul.f32 %v1266, %v1302
    %v1304 = vsub.f32 1.0, %v1303
    %v1305 = vmul.f32 %v1302, %v1304
    %v1306 = vadd.f32 %v1302, %v1305
    %vm1307 = vweird.f32 %v1266
    %vm1308 = vweird.f32 %v1302
    %vm1309 = vmor %vm1307, %vm1308
    %v1310 = vsel %vm1309, %v1302, %v1306
    %v1311 = vand.u32 2147483647, %v1266
    %vm1312 = vcmp.eq.f32.partialorder %v1311, 8.507059e+37
    %v1313 = vand.u32 %v1266, 2147483648
    %v1314 = vor.u32 1.1754944e-38, %v1313
    %v1315 = vsel %vm1312, %v1314, %v1310
    %v1316 = vmul.f32 1.0, %v1315
    %v1317 = vrcp.pop %v1267
    %v1318 = vmul.f32 %v1267, %v1317
    %v1319 = vsub.f32 1.0, %v1318
    %v1320 = vmul.f32 %v1317, %v1319
    %v1321 = vadd.f32 %v1317, %v1320
    %vm1322 = vweird.f32 %v1267
    %vm1323 = vweird.f32 %v1317
    %vm1324 = vmor %vm1322, %vm1323
    %v1325 = vsel %vm1324, %v1317, %v1321
    %v1326 = vand.u32 2147483647, %v1267
    %vm1327 = vcmp.eq.f32.partialorder %v1326, 8.507059e+37
    %v1328 = vand.u32 %v1267, 2147483648
    %v1329 = vor.u32 1.1754944e-38, %v1328
    %v1330 = vsel %vm1327, %v1329, %v1325
    %v1331 = vmul.f32 1.0, %v1330
    %v1332 = vrcp.pop %v1268
    %v1333 = vmul.f32 %v1268, %v1332
    %v1334 = vsub.f32 1.0, %v1333
    %v1335 = vmul.f32 %v1332, %v1334
    %v1336 = vadd.f32 %v1332, %v1335
    %vm1337 = vweird.f32 %v1268
    %vm1338 = vweird.f32 %v1332
    %vm1339 = vmor %vm1337, %vm1338
    %v1340 = vsel %vm1339, %v1332, %v1336
    %v1341 = vand.u32 2147483647, %v1268
    %vm1342 = vcmp.eq.f32.partialorder %v1341, 8.507059e+37
    %v1343 = vand.u32 %v1268, 2147483648
    %v1344 = vor.u32 1.1754944e-38, %v1343
    %v1345 = vsel %vm1342, %v1344, %v1340
    %v1346 = vmul.f32 1.0, %v1345
    %v1347 = vrcp.pop %v1269
    %v1348 = vmul.f32 %v1269, %v1347
    %v1349 = vsub.f32 1.0, %v1348
    %v1350 = vmul.f32 %v1347, %v1349
    %v1351 = vadd.f32 %v1347, %v1350
    %vm1352 = vweird.f32 %v1269
    %vm1353 = vweird.f32 %v1347
    %vm1354 = vmor %vm1352, %vm1353
    %v1355 = vsel %vm1354, %v1347, %v1351
    %v1356 = vand.u32 2147483647, %v1269
    %vm1357 = vcmp.eq.f32.partialorder %v1356, 8.507059e+37
    %v1358 = vand.u32 %v1269, 2147483648
    %v1359 = vor.u32 1.1754944e-38, %v1358
    %v1360 = vsel %vm1357, %v1359, %v1355
    %v1361 = vmul.f32 1.0, %v1360
    %v1362 = vrcp.pop %v1270
    %v1363 = vmul.f32 %v1270, %v1362
    %v1364 = vsub.f32 1.0, %v1363
    %v1365 = vmul.f32 %v1362, %v1364
    %v1366 = vadd.f32 %v1362, %v1365
    %vm1367 = vweird.f32 %v1270
    %vm1368 = vweird.f32 %v1362
    %vm1369 = vmor %vm1367, %vm1368
    %v1370 = vsel %vm1369, %v1362, %v1366
    %v1371 = vand.u32 2147483647, %v1270
    %vm1372 = vcmp.eq.f32.partialorder %v1371, 8.507059e+37
    %v1373 = vand.u32 %v1270, 2147483648
    %v1374 = vor.u32 1.1754944e-38, %v1373
    %v1375 = vsel %vm1372, %v1374, %v1370
    %v1376 = vmul.f32 1.0, %v1375
    %v1377 = vrcp.pop %v1271
    %v1378 = vmul.f32 %v1271, %v1377
    %v1379 = vsub.f32 1.0, %v1378
    %v1380 = vmul.f32 %v1377, %v1379
    %v1381 = vadd.f32 %v1377, %v1380
    %vm1382 = vweird.f32 %v1271
    %vm1383 = vweird.f32 %v1377
    %vm1384 = vmor %vm1382, %vm1383
    %v1385 = vsel %vm1384, %v1377, %v1381
    %v1386 = vand.u32 2147483647, %v1271
    %vm1387 = vcmp.eq.f32.partialorder %v1386, 8.507059e+37
    %v1388 = vand.u32 %v1271, 2147483648
    %v1389 = vor.u32 1.1754944e-38, %v1388
    %v1390 = vsel %vm1387, %v1389, %v1385
    %v1391 = vmul.f32 1.0, %v1390
    %v1392 = vmul.f32 %v1232, %v1286
    %v1393 = vmul.f32 %v1233, %v1301
    %v1394 = vmul.f32 %v1234, %v1316
    %v1395 = vmul.f32 %v1235, %v1331
    %v1396 = vmul.f32 %v1236, %v1346
    %v1397 = vmul.f32 %v1237, %v1361
    %v1398 = vmul.f32 %v1238, %v1376
    %v1399 = vmul.f32 %v1239, %v1391
    %v1400 = vld [vmem:[%s6] sm:$0x1]
    %v1401 = vpack.c.bf16 %v1393, %v1392
    %v1402 = vld [vmem:[%s5] sm:$0xf]
    %v1403 = vld [vmem:[%s5 + $0x4] sm:$0xf]
    %v1404 = vld [vmem:[%s5 + $0x8] sm:$0xf]
    %v1405 = vld [vmem:[%s5 + $0xc] sm:$0xf]
    %v1410 = vunpack.c.l.b16 %v1402
    %v1411 = vunpack.c.l.b16 %v1403
    %v1412 = vunpack.c.l.b16 %v1404
    %v1413 = vunpack.c.l.b16 %v1405
    %v1414 = vpack.c.b16 %v1411, %v1410
    %v1415 = vpack.c.b16 %v1413, %v1412
    %vm1418 = vcmask 261120
    %v1420 = vsel %vm1418, %v1401, 0
    %1422 = vmatpush.bf16.msra.mxu0 0
    %1423 = vmatpush.bf16.msra.mxu0 0
    %1424 = vmatpush.bf16.msra.mxu0 0
    %1425 = vmatpush.bf16.msra.mxu0 0
    %1426 = vmatpush.bf16.msra.mxu0 0
    %1427 = vmatpush.bf16.msra.mxu0 0
    %1428 = vmatpush.bf16.msra.mxu0 %v1415
    %1429 = vmatpush.bf16.msra.mxu0 %v1414
    %1430 = vmatmul.bf16.gmra.mxu0 %v1420
    %v1431 = vpop.f32.mrf.mxu0
    %v1432 = vadd.f32 0.0, %v1431
    %v1433 = vpop.f32.mrf.mxu0
    %v1434 = vadd.f32 0.0, %v1433
    %1435 = vdwg.mxu0
    %v1437 = vperm.slane %v1400, 0
    %v1439 = vadd.f32 %v1437, %v1432
    %v1440 = vadd.f32 %v1437, %v1434
    %v1441 = vpack.c.bf16 %v1395, %v1394
    %s1442 = scalar_lea.vmem %s5, 16
    %v1443 = vld [vmem:[%s1442] sm:$0xf]
    %v1444 = vld [vmem:[%s1442 + $0x4] sm:$0xf]
    %v1445 = vld [vmem:[%s1442 + $0x8] sm:$0xf]
    %v1446 = vld [vmem:[%s1442 + $0xc] sm:$0xf]
    %v1451 = vunpack.c.l.b16 %v1443
    %v1452 = vunpack.c.l.b16 %v1444
    %v1453 = vunpack.c.l.b16 %v1445
    %v1454 = vunpack.c.l.b16 %v1446
    %v1455 = vpack.c.b16 %v1452, %v1451
    %v1456 = vpack.c.b16 %v1454, %v1453
    %v1460 = vsel %vm1418, %v1441, 0
    %1462 = vmatpush.bf16.msra.mxu0 0
    %1463 = vmatpush.bf16.msra.mxu0 0
    %1464 = vmatpush.bf16.msra.mxu0 0
    %1465 = vmatpush.bf16.msra.mxu0 0
    %1466 = vmatpush.bf16.msra.mxu0 0
    %1467 = vmatpush.bf16.msra.mxu0 0
    %1468 = vmatpush.bf16.msra.mxu0 %v1456
    %1469 = vmatpush.bf16.msra.mxu0 %v1455
    %1470 = vmatmul.bf16.gmra.mxu0 %v1460
    %v1471 = vpop.f32.mrf.mxu0
    %v1472 = vadd.f32 0.0, %v1471
    %v1473 = vpop.f32.mrf.mxu0
    %v1474 = vadd.f32 0.0, %v1473
    %1475 = vdwg.mxu0
    %v1476 = vadd.f32 %v1439, %v1472
    %v1477 = vadd.f32 %v1440, %v1474
    %v1478 = vpack.c.bf16 %v1397, %v1396
    %s1479 = scalar_lea.vmem %s5, 32
    %v1480 = vld [vmem:[%s1479] sm:$0xf]
    %v1481 = vld [vmem:[%s1479 + $0x4] sm:$0xf]
    %v1482 = vld [vmem:[%s1479 + $0x8] sm:$0xf]
    %v1483 = vld [vmem:[%s1479 + $0xc] sm:$0xf]
    %v1488 = vunpack.c.l.b16 %v1480
    %v1489 = vunpack.c.l.b16 %v1481
    %v1490 = vunpack.c.l.b16 %v1482
    %v1491 = vunpack.c.l.b16 %v1483
    %v1492 = vpack.c.b16 %v1489, %v1488
    %v1493 = vpack.c.b16 %v1491, %v1490
    %v1497 = vsel %vm1418, %v1478, 0
    %1499 = vmatpush.bf16.msra.mxu0 0
    %1500 = vmatpush.bf16.msra.mxu0 0
    %1501 = vmatpush.bf16.msra.mxu0 0
    %1502 = vmatpush.bf16.msra.mxu0 0
    %1503 = vmatpush.bf16.msra.mxu0 0
    %1504 = vmatpush.bf16.msra.mxu0 0
    %1505 = vmatpush.bf16.msra.mxu0 %v1493
    %1506 = vmatpush.bf16.msra.mxu0 %v1492
    %1507 = vmatmul.bf16.gmra.mxu0 %v1497
    %v1508 = vpop.f32.mrf.mxu0
    %v1509 = vadd.f32 0.0, %v1508
    %v1510 = vpop.f32.mrf.mxu0
    %v1511 = vadd.f32 0.0, %v1510
    %1512 = vdwg.mxu0
    %v1513 = vadd.f32 %v1476, %v1509
    %v1514 = vadd.f32 %v1477, %v1511
    %v1515 = vpack.c.bf16 %v1399, %v1398
    %s1516 = scalar_lea.vmem %s5, 48
    %v1517 = vld [vmem:[%s1516] sm:$0xf]
    %v1518 = vld [vmem:[%s1516 + $0x4] sm:$0xf]
    %v1519 = vld [vmem:[%s1516 + $0x8] sm:$0xf]
    %v1520 = vld [vmem:[%s1516 + $0xc] sm:$0xf]
    %v1525 = vunpack.c.l.b16 %v1517
    %v1526 = vunpack.c.l.b16 %v1518
    %v1527 = vunpack.c.l.b16 %v1519
    %v1528 = vunpack.c.l.b16 %v1520
    %v1529 = vpack.c.b16 %v1526, %v1525
    %v1530 = vpack.c.b16 %v1528, %v1527
    %v1534 = vsel %vm1418, %v1515, 0
    %1536 = vmatpush.bf16.msra.mxu0 0
    %1537 = vmatpush.bf16.msra.mxu0 0
    %1538 = vmatpush.bf16.msra.mxu0 0
    %1539 = vmatpush.bf16.msra.mxu0 0
    %1540 = vmatpush.bf16.msra.mxu0 0
    %1541 = vmatpush.bf16.msra.mxu0 0
    %1542 = vmatpush.bf16.msra.mxu0 %v1530
    %1543 = vmatpush.bf16.msra.mxu0 %v1529
    %1544 = vmatmul.bf16.gmra.mxu0 %v1534
    %v1545 = vpop.f32.mrf.mxu0
    %v1546 = vadd.f32 0.0, %v1545
    %v1547 = vpop.f32.mrf.mxu0
    %v1548 = vadd.f32 0.0, %v1547
    %1549 = vdwg.mxu0
    %v1550 = vadd.f32 %v1513, %v1546
    %v1551 = vadd.f32 %v1514, %v1548
    %v1552 = vxor.u32 %v1550, 2147483648
    %v1553 = vxor.u32 %v1551, 2147483648
    %v1554 = vmul.f32 %v1552, 1.442695
    %v1555 = vpow.pop %v1554
    %v1556 = vmul.f32 %v1553, 1.442695
    %v1557 = vpow.pop %v1556
    %v1558 = vadd.f32 %v1555, 1.0
    %v1559 = vadd.f32 %v1557, 1.0
    %v1560 = vrcp.pop %v1558
    %v1561 = vmul.f32 %v1558, %v1560
    %v1562 = vsub.f32 1.0, %v1561
    %v1563 = vmul.f32 %v1560, %v1562
    %v1564 = vadd.f32 %v1560, %v1563
    %vm1565 = vweird.f32 %v1558
    %vm1566 = vweird.f32 %v1560
    %vm1567 = vmor %vm1565, %vm1566
    %v1568 = vsel %vm1567, %v1560, %v1564
    %v1569 = vand.u32 2147483647, %v1558
    %vm1570 = vcmp.eq.f32.partialorder %v1569, 8.507059e+37
    %v1571 = vand.u32 %v1558, 2147483648
    %v1572 = vor.u32 1.1754944e-38, %v1571
    %v1573 = vsel %vm1570, %v1572, %v1568
    %v1574 = vmul.f32 1.0, %v1573
    %v1575 = vrcp.pop %v1559
    %v1576 = vmul.f32 %v1559, %v1575
    %v1577 = vsub.f32 1.0, %v1576
    %v1578 = vmul.f32 %v1575, %v1577
    %v1579 = vadd.f32 %v1575, %v1578
    %vm1580 = vweird.f32 %v1559
    %vm1581 = vweird.f32 %v1575
    %vm1582 = vmor %vm1580, %vm1581
    %v1583 = vsel %vm1582, %v1575, %v1579
    %v1584 = vand.u32 2147483647, %v1559
    %vm1585 = vcmp.eq.f32.partialorder %v1584, 8.507059e+37
    %v1586 = vand.u32 %v1559, 2147483648
    %v1587 = vor.u32 1.1754944e-38, %v1586
    %v1588 = vsel %vm1585, %v1587, %v1583
    %v1589 = vmul.f32 1.0, %v1588
    %v1590 = vmul.f32 %v1550, %v1574
    %v1591 = vmul.f32 %v1551, %v1589
    %v1592 = vld [vmem:[%s8] sm:$0x1]
    %v1593 = vpack.c.bf16 %v1590, %v1590
    %v1594 = vld [vmem:[%s7] sm:$0xf]
    %v1595 = vld [vmem:[%s7 + $0x4] sm:$0xf]
    %v1596 = vld [vmem:[%s7 + $0x8] sm:$0xf]
    %v1597 = vld [vmem:[%s7 + $0xc] sm:$0xf]
    %v1598 = vld [vmem:[%s7 + $0x10] sm:$0xf]
    %v1599 = vld [vmem:[%s7 + $0x14] sm:$0xf]
    %v1606 = vunpack.c.l.b16 %v1594
    %v1607 = vunpack.c.l.b16 %v1595
    %v1608 = vunpack.c.l.b16 %v1596
    %v1609 = vunpack.c.l.b16 %v1597
    %v1610 = vunpack.c.l.b16 %v1598
    %v1611 = vunpack.c.l.b16 %v1599
    %v1612 = vpack.c.b16 %v1607, %v1606
    %v1613 = vpack.c.b16 %v1609, %v1608
    %v1614 = vpack.c.b16 %v1611, %v1610
    %v1619 = vsel %vm210, %v1593, 0
    %1621 = vmatpush.bf16.msra.mxu0 0
    %1622 = vmatpush.bf16.msra.mxu0 0
    %1623 = vmatpush.bf16.msra.mxu0 0
    %1624 = vmatpush.bf16.msra.mxu0 0
    %1625 = vmatpush.bf16.msra.mxu0 0
    %1626 = vmatpush.bf16.msra.mxu0 %v1614
    %1627 = vmatpush.bf16.msra.mxu0 %v1613
    %1628 = vmatpush.bf16.msra.mxu0 %v1612
    %1629 = vmatmul.bf16.gmra.mxu0 %v1619
    %v1630 = vpop.f32.mrf.mxu0
    %v1631 = vadd.f32 0.0, %v1630
    %v1632 = vpop.f32.mrf.mxu0
    %1633 = vdwg.mxu0
    %v1635 = vperm.slane %v1592, 0
    %v1637 = vadd.f32 %v1635, %v1631
    %s1638 = scalar_lea.vmem %s7, 24
    %v1639 = vld [vmem:[%s1638] sm:$0xf]
    %v1640 = vld [vmem:[%s1638 + $0x4] sm:$0xf]
    %v1641 = vld [vmem:[%s1638 + $0x8] sm:$0xf]
    %v1642 = vld [vmem:[%s1638 + $0xc] sm:$0xf]
    %v1643 = vld [vmem:[%s1638 + $0x10] sm:$0xf]
    %v1644 = vld [vmem:[%s1638 + $0x14] sm:$0xf]
    %v1646 = vrot.slane %v1593, 2
    %v1653 = vunpack.c.l.b16 %v1639
    %v1654 = vunpack.c.l.b16 %v1640
    %v1655 = vunpack.c.l.b16 %v1641
    %v1656 = vunpack.c.l.b16 %v1642
    %v1657 = vunpack.c.l.b16 %v1643
    %v1658 = vunpack.c.l.b16 %v1644
    %v1659 = vpack.c.b16 %v1654, %v1653
    %v1660 = vpack.c.b16 %v1656, %v1655
    %v1661 = vpack.c.b16 %v1658, %v1657
    %v1666 = vsel %vm210, %v1646, 0
    %1668 = vmatpush.bf16.msra.mxu0 0
    %1669 = vmatpush.bf16.msra.mxu0 0
    %1670 = vmatpush.bf16.msra.mxu0 0
    %1671 = vmatpush.bf16.msra.mxu0 0
    %1672 = vmatpush.bf16.msra.mxu0 0
    %1673 = vmatpush.bf16.msra.mxu0 %v1661
    %1674 = vmatpush.bf16.msra.mxu0 %v1660
    %1675 = vmatpush.bf16.msra.mxu0 %v1659
    %1676 = vmatmul.bf16.gmra.mxu0 %v1666
    %v1677 = vpop.f32.mrf.mxu0
    %v1678 = vadd.f32 0.0, %v1677
    %v1679 = vpop.f32.mrf.mxu0
    %1680 = vdwg.mxu0
    %v1681 = vadd.f32 %v1637, %v1678
    %v1682 = vpack.c.bf16 %v1591, %v1591
    %s1683 = scalar_lea.vmem %s7, 48
    %v1684 = vld [vmem:[%s1683] sm:$0xf]
    %v1685 = vld [vmem:[%s1683 + $0x4] sm:$0xf]
    %v1686 = vld [vmem:[%s1683 + $0x8] sm:$0xf]
    %v1687 = vld [vmem:[%s1683 + $0xc] sm:$0xf]
    %v1688 = vld [vmem:[%s1683 + $0x10] sm:$0xf]
    %v1689 = vld [vmem:[%s1683 + $0x14] sm:$0xf]
    %v1696 = vunpack.c.l.b16 %v1684
    %v1697 = vunpack.c.l.b16 %v1685
    %v1698 = vunpack.c.l.b16 %v1686
    %v1699 = vunpack.c.l.b16 %v1687
    %v1700 = vunpack.c.l.b16 %v1688
    %v1701 = vunpack.c.l.b16 %v1689
    %v1702 = vpack.c.b16 %v1697, %v1696
    %v1703 = vpack.c.b16 %v1699, %v1698
    %v1704 = vpack.c.b16 %v1701, %v1700
    %v1709 = vsel %vm210, %v1682, 0
    %1711 = vmatpush.bf16.msra.mxu0 0
    %1712 = vmatpush.bf16.msra.mxu0 0
    %1713 = vmatpush.bf16.msra.mxu0 0
    %1714 = vmatpush.bf16.msra.mxu0 0
    %1715 = vmatpush.bf16.msra.mxu0 0
    %1716 = vmatpush.bf16.msra.mxu0 %v1704
    %1717 = vmatpush.bf16.msra.mxu0 %v1703
    %1718 = vmatpush.bf16.msra.mxu0 %v1702
    %1719 = vmatmul.bf16.gmra.mxu0 %v1709
    %v1720 = vpop.f32.mrf.mxu0
    %v1721 = vadd.f32 0.0, %v1720
    %v1722 = vpop.f32.mrf.mxu0
    %1723 = vdwg.mxu0
    %v1724 = vadd.f32 %v1681, %v1721
    %s1725 = scalar_lea.vmem %s7, 72
    %v1726 = vld [vmem:[%s1725] sm:$0xf]
    %v1727 = vld [vmem:[%s1725 + $0x4] sm:$0xf]
    %v1728 = vld [vmem:[%s1725 + $0x8] sm:$0xf]
    %v1729 = vld [vmem:[%s1725 + $0xc] sm:$0xf]
    %v1730 = vld [vmem:[%s1725 + $0x10] sm:$0xf]
    %v1731 = vld [vmem:[%s1725 + $0x14] sm:$0xf]
    %v1733 = vrot.slane %v1682, 2
    %v1740 = vunpack.c.l.b16 %v1726
    %v1741 = vunpack.c.l.b16 %v1727
    %v1742 = vunpack.c.l.b16 %v1728
    %v1743 = vunpack.c.l.b16 %v1729
    %v1744 = vunpack.c.l.b16 %v1730
    %v1745 = vunpack.c.l.b16 %v1731
    %v1746 = vpack.c.b16 %v1741, %v1740
    %v1747 = vpack.c.b16 %v1743, %v1742
    %v1748 = vpack.c.b16 %v1745, %v1744
    %v1753 = vsel %vm210, %v1733, 0
    %1755 = vmatpush.bf16.msra.mxu0 0
    %1756 = vmatpush.bf16.msra.mxu0 0
    %1757 = vmatpush.bf16.msra.mxu0 0
    %1758 = vmatpush.bf16.msra.mxu0 0
    %1759 = vmatpush.bf16.msra.mxu0 0
    %1760 = vmatpush.bf16.msra.mxu0 %v1748
    %1761 = vmatpush.bf16.msra.mxu0 %v1747
    %1762 = vmatpush.bf16.msra.mxu0 %v1746
    %1763 = vmatmul.bf16.gmra.mxu0 %v1753
    %v1764 = vpop.f32.mrf.mxu0
    %v1765 = vadd.f32 0.0, %v1764
    %v1766 = vpop.f32.mrf.mxu0
    %1767 = vdwg.mxu0
    %v1768 = vadd.f32 %v1724, %v1765
    %v1769 = vxor.u32 %v1768, 2147483648
    %v1770 = vmul.f32 %v1769, 1.442695
    %v1771 = vpow.pop %v1770
    %v1772 = vadd.f32 %v1771, 1.0
    %v1773 = vrcp.pop %v1772
    %v1774 = vmul.f32 %v1772, %v1773
    %v1775 = vsub.f32 1.0, %v1774
    %v1776 = vmul.f32 %v1773, %v1775
    %v1777 = vadd.f32 %v1773, %v1776
    %vm1778 = vweird.f32 %v1772
    %vm1779 = vweird.f32 %v1773
    %vm1780 = vmor %vm1778, %vm1779
    %v1781 = vsel %vm1780, %v1773, %v1777
    %v1782 = vand.u32 2147483647, %v1772
    %vm1783 = vcmp.eq.f32.partialorder %v1782, 8.507059e+37
    %v1784 = vand.u32 %v1772, 2147483648
    %v1785 = vor.u32 1.1754944e-38, %v1784
    %v1786 = vsel %vm1783, %v1785, %v1781
    %v1787 = vmul.f32 1.0, %v1786
    %v1788 = vmul.f32 %v1768, %v1787
    %v1789 = vld [vmem:[%s9] sm:$0xff]
    %v1790 = vld [vmem:[%s9 + $0x8] sm:$0xff]
    %v1791 = vld [vmem:[%s10] sm:$0xff]
    %v1792 = vld [vmem:[%s10 + $0x8] sm:$0xff]
    %1794 = vset.pattern.permute.xlu0 0
    %1795 = vperm.xlu0 %1794, %v1791
    %v1796 = vpop.permute.xlu0 %1795
    %1799 = vset.pattern.permute.xlu0 0
    %1800 = vperm.xlu0 %1799, %v1792
    %v1801 = vpop.permute.xlu0 %1800
    %vm1803 = vcmask 31744
    %v1805 = vsel %vm1803, %v1789, 0
    %v1808 = vsel %vm1803, %v1790, 0
    %vm1810 = vcmask 1043456
    %v1812 = vsel %vm1810, %v1788, 0
    %1814 = vmatpush.msra.mxu0 0.0
    %1815 = vmatpush.msra.mxu0 0.0
    %1816 = vmatpush.msra.mxu0 0.0
    %1817 = vmatpush.msra.mxu0 0.0
    %1818 = vmatpush.msra.mxu0 0.0
    %1819 = vmatpush.msra.mxu0 0.0
    %1820 = vmatpush.msra.mxu0 0.0
    %1821 = vmatpush.msra.mxu0 0.0
    %1822 = vmatpush.msra.mxu0 0.0
    %1823 = vmatpush.msra.mxu0 0.0
    %1824 = vmatpush.msra.mxu0 0.0
    %1825 = vmatpush.msra.mxu0 0.0
    %1826 = vmatpush.msra.mxu0 0.0
    %1827 = vmatpush.msra.mxu0 0.0
    %1828 = vmatpush.msra.mxu0 0.0
    %1829 = vmatpush.msra.mxu0 %v1812
    %1830 = vmatmul.f32.gmra.mxu0 %v1805
    %v1831 = vpop.f32.mrf.mxu0
    %v1832 = vadd.f32 %v1796, %v1831
    %1833 = vmatmul.f32.gmra.mxu0 %v1808
    %v1834 = vpop.f32.mrf.mxu0
    %v1835 = vadd.f32 %v1801, %v1834
    %1836 = vdwg.mxu0
    %v1837 = vpack.c.bf16 %v1835, %v1832
    %v1838 = vld [vmem:[%s11] sm:$0xf]
    %v1839 = vld [vmem:[%s11 + $0x4] sm:$0xf]
    %v1840 = vld [vmem:[%s11 + $0x8] sm:$0xf]
    %v1841 = vld [vmem:[%s11 + $0xc] sm:$0xf]
    %v1842 = vld [vmem:[%s11 + $0x10] sm:$0xf]
    %v1843 = vld [vmem:[%s11 + $0x14] sm:$0xf]
    %v1844 = vld [vmem:[%s11 + $0x18] sm:$0xf]
    %v1845 = vld [vmem:[%s11 + $0x1c] sm:$0xf]
    %v1846 = vld [vmem:[%s12] sm:$0x1]
    %v1848 = vperm.slane %v1846, 0
    %v1858 = vunpack.c.l.b16 %v1838
    %v1859 = vunpack.c.l.b16 %v1839
    %v1860 = vunpack.c.l.b16 %v1840
    %v1861 = vunpack.c.l.b16 %v1841
    %v1862 = vunpack.c.l.b16 %v1842
    %v1863 = vunpack.c.l.b16 %v1843
    %v1864 = vunpack.c.l.b16 %v1844
    %v1865 = vunpack.c.l.b16 %v1845
    %v1866 = vpack.c.b16 %v1859, %v1858
    %v1867 = vpack.c.b16 %v1861, %v1860
    %v1868 = vpack.c.b16 %v1863, %v1862
    %v1869 = vpack.c.b16 %v1865, %v1864
    %vm1874 = vcmask 523264
    %v1876 = vsel %vm1874, %v1837, 0
    %1878 = vmatpush.bf16.msra.mxu0 0
    %1879 = vmatpush.bf16.msra.mxu0 0
    %1880 = vmatpush.bf16.msra.mxu0 0
    %1881 = vmatpush.bf16.msra.mxu0 0
    %1882 = vmatpush.bf16.msra.mxu0 %v1869
    %1883 = vmatpush.bf16.msra.mxu0 %v1868
    %1884 = vmatpush.bf16.msra.mxu0 %v1867
    %1885 = vmatpush.bf16.msra.mxu0 %v1866
    %1886 = vmatmul.bf16.gmra.mxu0 %v1876
    %v1887 = vpop.f32.mrf.mxu0
    %v1888 = vadd.f32 %v1848, %v1887
    %v1889 = vpop.f32.mrf.mxu0
    %v1890 = vadd.f32 %v1848, %v1889
    %1891 = vdwg.mxu0
    %v1892 = vld [vmem:[%s13] sm:$0xf]
    %v1893 = vld [vmem:[%s13 + $0x4] sm:$0xf]
    %v1894 = vld [vmem:[%s13 + $0x8] sm:$0xf]
    %v1895 = vld [vmem:[%s13 + $0xc] sm:$0xf]
    %v1896 = vld [vmem:[%s14] sm:$0x1]
    %v1897 = vld [vmem:[%s15] sm:$0xf]
    %v1898 = vld [vmem:[%s15 + $0x4] sm:$0xf]
    %v1899 = vld [vmem:[%s15 + $0x8] sm:$0xf]
    %v1900 = vld [vmem:[%s15 + $0xc] sm:$0xf]
    %v1901 = vld [vmem:[%s16] sm:$0x1]
    %v1902 = vld [vmem:[%s17] sm:$0xf]
    %v1903 = vld [vmem:[%s17 + $0x4] sm:$0xf]
    %v1904 = vld [vmem:[%s17 + $0x8] sm:$0xf]
    %v1905 = vld [vmem:[%s17 + $0xc] sm:$0xf]
    %v1906 = vld [vmem:[%s18] sm:$0x1]
    %v1907 = vld [vmem:[%s19] sm:$0xf]
    %v1908 = vld [vmem:[%s19 + $0x4] sm:$0xf]
    %v1909 = vld [vmem:[%s19 + $0x8] sm:$0xf]
    %v1910 = vld [vmem:[%s19 + $0xc] sm:$0xf]
    %v1911 = vld [vmem:[%s20] sm:$0x1]
    %v1916 = vunpack.c.l.b16 %v1892
    %v1917 = vunpack.c.l.b16 %v1893
    %v1918 = vunpack.c.l.b16 %v1894
    %v1919 = vunpack.c.l.b16 %v1895
    %v1920 = vpack.c.b16 %v1917, %v1916
    %v1921 = vpack.c.b16 %v1919, %v1918
    %v1925 = vsel %vm1418, 0, 0
    %1927 = vmatpush.bf16.msra.mxu0 0
    %1928 = vmatpush.bf16.msra.mxu0 0
    %1929 = vmatpush.bf16.msra.mxu0 0
    %1930 = vmatpush.bf16.msra.mxu0 0
    %1931 = vmatpush.bf16.msra.mxu0 0
    %1932 = vmatpush.bf16.msra.mxu0 0
    %1933 = vmatpush.bf16.msra.mxu0 %v1921
    %1934 = vmatpush.bf16.msra.mxu0 %v1920
    %1935 = vmatmul.bf16.gmra.mxu0 %v1925
    %v1936 = vpop.f32.mrf.mxu0
    %v1937 = vadd.f32 0.0, %v1936
    %v1938 = vpop.f32.mrf.mxu0
    %1939 = vdwg.mxu0
    %v1940 = vadd.f32 %v1888, %v1937
    %v1942 = vperm.slane %v1896, 0
    %v1944 = vadd.f32 %v1940, %v1942
    %v1945 = vxor.u32 %v1944, 2147483648
    %v1946 = vmul.f32 %v1945, 1.442695
    %v1947 = vpow.pop %v1946
    %v1948 = vadd.f32 %v1947, 1.0
    %v1949 = vrcp.pop %v1948
    %v1950 = vmul.f32 %v1948, %v1949
    %v1951 = vsub.f32 1.0, %v1950
    %v1952 = vmul.f32 %v1949, %v1951
    %v1953 = vadd.f32 %v1949, %v1952
    %vm1954 = vweird.f32 %v1948
    %vm1955 = vweird.f32 %v1949
    %vm1956 = vmor %vm1954, %vm1955
    %v1957 = vsel %vm1956, %v1949, %v1953
    %v1958 = vand.u32 2147483647, %v1948
    %vm1959 = vcmp.eq.f32.partialorder %v1958, 8.507059e+37
    %v1960 = vand.u32 %v1948, 2147483648
    %v1961 = vor.u32 1.1754944e-38, %v1960
    %v1962 = vsel %vm1959, %v1961, %v1957
    %v1963 = vmul.f32 1.0, %v1962
    %1965 = vrot.lane.b32.xlu0 %v1944, 32
    %v1966 = vpop.permute.xlu0 %1965
    %v1968 = vmul.f32 %v1963, %v1966
    %1970 = vrot.lane.b32.xlu0 %v1968, 64
    %v1971 = vpop.permute.xlu0 %1970
    %v1973 = vadd.f32 %v1944, %v1971
    %v1974 = vtanh.pop %v1973
    %v1975 = vsub.f32 1.0, %v1963
    %1977 = vrot.lane.b32.xlu0 %v1974, 96
    %v1978 = vpop.permute.xlu0 %1977
    %v1980 = vmul.f32 %v1975, %v1978
    %v1981 = vmul.f32 %v1963, 0.0
    %v1982 = vadd.f32 %v1980, %v1981
    %v1983 = vpack.c.bf16 %v1982, %v1982
    %1985 = vrot.lane.b32.xlu0 %v1983, 96
    %v1986 = vpop.permute.xlu0 %1985
    %v1988 = vsel %vm1418, %v1986, 0
    %1990 = vmatpush.bf16.msra.mxu0 0
    %1991 = vmatpush.bf16.msra.mxu0 0
    %1992 = vmatpush.bf16.msra.mxu0 0
    %1993 = vmatpush.bf16.msra.mxu0 0
    %1994 = vmatpush.bf16.msra.mxu0 0
    %1995 = vmatpush.bf16.msra.mxu0 0
    %1996 = vmatpush.bf16.msra.mxu0 %v1921
    %1997 = vmatpush.bf16.msra.mxu0 %v1920
    %1998 = vmatmul.bf16.gmra.mxu0 %v1988
    %v1999 = vpop.f32.mrf.mxu0
    %v2000 = vadd.f32 0.0, %v1999
    %v2001 = vpop.f32.mrf.mxu0
    %2002 = vdwg.mxu0
    %v2004 = vrot.slane %v2000, 6
    %v2006 = vadd.f32 %v1888, %v2004
    %v2007 = vadd.f32 %v2006, %v1942
    %v2008 = vxor.u32 %v2007, 2147483648
    %v2009 = vmul.f32 %v2008, 1.442695
    %v2010 = vpow.pop %v2009
    %v2011 = vadd.f32 %v2010, 1.0
    %v2012 = vrcp.pop %v2011
    %v2013 = vmul.f32 %v2011, %v2012
    %v2014 = vsub.f32 1.0, %v2013
    %v2015 = vmul.f32 %v2012, %v2014
    %v2016 = vadd.f32 %v2012, %v2015
    %vm2017 = vweird.f32 %v2011
    %vm2018 = vweird.f32 %v2012
    %vm2019 = vmor %vm2017, %vm2018
    %v2020 = vsel %vm2019, %v2012, %v2016
    %v2021 = vand.u32 2147483647, %v2011
    %vm2022 = vcmp.eq.f32.partialorder %v2021, 8.507059e+37
    %v2023 = vand.u32 %v2011, 2147483648
    %v2024 = vor.u32 1.1754944e-38, %v2023
    %v2025 = vsel %vm2022, %v2024, %v2020
    %v2026 = vmul.f32 1.0, %v2025
    %2028 = vrot.lane.b32.xlu0 %v2007, 32
    %v2029 = vpop.permute.xlu0 %2028
    %v2031 = vmul.f32 %v2026, %v2029
    %2033 = vrot.lane.b32.xlu0 %v2031, 64
    %v2034 = vpop.permute.xlu0 %2033
    %v2036 = vadd.f32 %v2007, %v2034
    %v2037 = vtanh.pop %v2036
    %v2038 = vsub.f32 1.0, %v2026
    %2040 = vrot.lane.b32.xlu0 %v2037, 96
    %v2041 = vpop.permute.xlu0 %2040
    %v2043 = vmul.f32 %v2038, %v2041
    %v2045 = vrot.slane %v1982, 6
    %v2047 = vmul.f32 %v2026, %v2045
    %v2048 = vadd.f32 %v2043, %v2047
    %v2050 = vperm.slane %v1901, 0
    %v2056 = vunpack.c.l.b16 %v1897
    %v2057 = vunpack.c.l.b16 %v1898
    %v2058 = vunpack.c.l.b16 %v1899
    %v2059 = vunpack.c.l.b16 %v1900
    %v2060 = vpack.c.b16 %v2057, %v2056
    %v2061 = vpack.c.b16 %v2059, %v2058
    %2064 = vmatpush.bf16.msra.mxu0 0
    %2065 = vmatpush.bf16.msra.mxu0 0
    %2066 = vmatpush.bf16.msra.mxu0 0
    %2067 = vmatpush.bf16.msra.mxu0 0
    %2068 = vmatpush.bf16.msra.mxu0 0
    %2069 = vmatpush.bf16.msra.mxu0 0
    %2070 = vmatpush.bf16.msra.mxu0 %v2061
    %2071 = vmatpush.bf16.msra.mxu0 %v2060
    %2072 = vmatmul.bf16.gmra.mxu0 %v1988
    %v2073 = vpop.f32.mrf.mxu0
    %v2074 = vadd.f32 %v2050, %v2073
    %v2075 = vpop.f32.mrf.mxu0
    %2076 = vdwg.mxu0
    %v2081 = vunpack.c.l.b16 %v1902
    %v2082 = vunpack.c.l.b16 %v1903
    %v2083 = vunpack.c.l.b16 %v1904
    %v2084 = vunpack.c.l.b16 %v1905
    %v2085 = vpack.c.b16 %v2082, %v2081
    %v2086 = vpack.c.b16 %v2084, %v2083
    %2089 = vmatpush.bf16.msra.mxu0 0
    %2090 = vmatpush.bf16.msra.mxu0 0
    %2091 = vmatpush.bf16.msra.mxu0 0
    %2092 = vmatpush.bf16.msra.mxu0 0
    %2093 = vmatpush.bf16.msra.mxu0 0
    %2094 = vmatpush.bf16.msra.mxu0 0
    %2095 = vmatpush.bf16.msra.mxu0 %v2086
    %2096 = vmatpush.bf16.msra.mxu0 %v2085
    %2097 = vmatmul.bf16.gmra.mxu0 %v1925
    %v2098 = vpop.f32.mrf.mxu0
    %v2099 = vadd.f32 0.0, %v2098
    %v2100 = vpop.f32.mrf.mxu0
    %2101 = vdwg.mxu0
    %v2102 = vadd.f32 %v2074, %v2099
    %v2104 = vperm.slane %v1906, 0
    %v2106 = vadd.f32 %v2102, %v2104
    %v2107 = vxor.u32 %v2106, 2147483648
    %v2108 = vmul.f32 %v2107, 1.442695
    %v2109 = vpow.pop %v2108
    %v2110 = vadd.f32 %v2109, 1.0
    %v2111 = vrcp.pop %v2110
    %v2112 = vmul.f32 %v2110, %v2111
    %v2113 = vsub.f32 1.0, %v2112
    %v2114 = vmul.f32 %v2111, %v2113
    %v2115 = vadd.f32 %v2111, %v2114
    %vm2116 = vweird.f32 %v2110
    %vm2117 = vweird.f32 %v2111
    %vm2118 = vmor %vm2116, %vm2117
    %v2119 = vsel %vm2118, %v2111, %v2115
    %v2120 = vand.u32 2147483647, %v2110
    %vm2121 = vcmp.eq.f32.partialorder %v2120, 8.507059e+37
    %v2122 = vand.u32 %v2110, 2147483648
    %v2123 = vor.u32 1.1754944e-38, %v2122
    %v2124 = vsel %vm2121, %v2123, %v2119
    %v2125 = vmul.f32 1.0, %v2124
    %2127 = vrot.lane.b32.xlu0 %v2106, 32
    %v2128 = vpop.permute.xlu0 %2127
    %v2130 = vmul.f32 %v2125, %v2128
    %2132 = vrot.lane.b32.xlu0 %v2130, 64
    %v2133 = vpop.permute.xlu0 %2132
    %v2135 = vadd.f32 %v2106, %v2133
    %v2136 = vtanh.pop %v2135
    %v2137 = vsub.f32 1.0, %v2125
    %2139 = vrot.lane.b32.xlu0 %v2136, 96
    %v2140 = vpop.permute.xlu0 %2139
    %v2142 = vmul.f32 %v2137, %v2140
    %v2143 = vmul.f32 %v2125, 0.0
    %v2144 = vadd.f32 %v2142, %v2143
    %v2145 = vpack.c.bf16 %v2144, %v2144
    %v2147 = vperm.slane %v1911, 0
    %2150 = vrot.lane.b32.xlu0 %v2145, 96
    %v2151 = vpop.permute.xlu0 %2150
    %v2156 = vunpack.c.l.b16 %v1907
    %v2157 = vunpack.c.l.b16 %v1908
    %v2158 = vunpack.c.l.b16 %v1909
    %v2159 = vunpack.c.l.b16 %v1910
    %v2160 = vpack.c.b16 %v2157, %v2156
    %v2161 = vpack.c.b16 %v2159, %v2158
    %v2165 = vsel %vm1418, %v2151, 0
    %2167 = vmatpush.bf16.msra.mxu0 0
    %2168 = vmatpush.bf16.msra.mxu0 0
    %2169 = vmatpush.bf16.msra.mxu0 0
    %2170 = vmatpush.bf16.msra.mxu0 0
    %2171 = vmatpush.bf16.msra.mxu0 0
    %2172 = vmatpush.bf16.msra.mxu0 0
    %2173 = vmatpush.bf16.msra.mxu0 %v2161
    %2174 = vmatpush.bf16.msra.mxu0 %v2160
    %2175 = vmatmul.bf16.gmra.mxu0 %v2165
    %v2176 = vpop.f32.mrf.mxu0
    %v2177 = vadd.f32 %v2147, %v2176
    %v2178 = vpop.f32.mrf.mxu0
    %2179 = vdwg.mxu0
    %2180 = vst [vmem:[#allocation2] sm:$0x3] %v2177
    %v2181 = vpack.c.bf16 %v2048, %v2048
    %v2183 = vrot.slane %v2181, 1
    %2184 = vrot.lane.b32.xlu0 %v2183, 96
    %v2185 = vpop.permute.xlu0 %2184
    %v2187 = vsel %vm1418, %v2185, 0
    %2189 = vmatpush.bf16.msra.mxu0 0
    %2190 = vmatpush.bf16.msra.mxu0 0
    %2191 = vmatpush.bf16.msra.mxu0 0
    %2192 = vmatpush.bf16.msra.mxu0 0
    %2193 = vmatpush.bf16.msra.mxu0 0
    %2194 = vmatpush.bf16.msra.mxu0 0
    %2195 = vmatpush.bf16.msra.mxu0 %v1921
    %2196 = vmatpush.bf16.msra.mxu0 %v1920
    %2197 = vmatmul.bf16.gmra.mxu0 %v2187
    %v2198 = vpop.f32.mrf.mxu0
    %v2199 = vadd.f32 0.0, %v2198
    %v2200 = vpop.f32.mrf.mxu0
    %2201 = vdwg.mxu0
    %v2203 = vrot.slane %v2199, 4
    %v2205 = vadd.f32 %v1888, %v2203
    %v2206 = vadd.f32 %v2205, %v1942
    %v2207 = vxor.u32 %v2206, 2147483648
    %v2208 = vmul.f32 %v2207, 1.442695
    %v2209 = vpow.pop %v2208
    %v2210 = vadd.f32 %v2209, 1.0
    %v2211 = vrcp.pop %v2210
    %v2212 = vmul.f32 %v2210, %v2211
    %v2213 = vsub.f32 1.0, %v2212
    %v2214 = vmul.f32 %v2211, %v2213
    %v2215 = vadd.f32 %v2211, %v2214
    %vm2216 = vweird.f32 %v2210
    %vm2217 = vweird.f32 %v2211
    %vm2218 = vmor %vm2216, %vm2217
    %v2219 = vsel %vm2218, %v2211, %v2215
    %v2220 = vand.u32 2147483647, %v2210
    %vm2221 = vcmp.eq.f32.partialorder %v2220, 8.507059e+37
    %v2222 = vand.u32 %v2210, 2147483648
    %v2223 = vor.u32 1.1754944e-38, %v2222
    %v2224 = vsel %vm2221, %v2223, %v2219
    %v2225 = vmul.f32 1.0, %v2224
    %2227 = vrot.lane.b32.xlu0 %v2206, 32
    %v2228 = vpop.permute.xlu0 %2227
    %v2230 = vmul.f32 %v2225, %v2228
    %2232 = vrot.lane.b32.xlu0 %v2230, 64
    %v2233 = vpop.permute.xlu0 %2232
    %v2235 = vadd.f32 %v2206, %v2233
    %v2236 = vtanh.pop %v2235
    %v2237 = vsub.f32 1.0, %v2225
    %2239 = vrot.lane.b32.xlu0 %v2236, 96
    %v2240 = vpop.permute.xlu0 %2239
    %v2242 = vmul.f32 %v2237, %v2240
    %v2244 = vrot.slane %v2048, 6
    %v2246 = vmul.f32 %v2225, %v2244
    %v2247 = vadd.f32 %v2242, %v2246
    %2248 = vmatpush.bf16.msra.mxu0 0
    %2249 = vmatpush.bf16.msra.mxu0 0
    %2250 = vmatpush.bf16.msra.mxu0 0
    %2251 = vmatpush.bf16.msra.mxu0 0
    %2252 = vmatpush.bf16.msra.mxu0 0
    %2253 = vmatpush.bf16.msra.mxu0 0
    %2254 = vmatpush.bf16.msra.mxu0 %v2061
    %2255 = vmatpush.bf16.msra.mxu0 %v2060
    %2256 = vmatmul.bf16.gmra.mxu0 %v2187
    %v2257 = vpop.f32.mrf.mxu0
    %v2258 = vadd.f32 %v2050, %v2257
    %v2259 = vpop.f32.mrf.mxu0
    %2260 = vdwg.mxu0
    %2261 = vmatpush.bf16.msra.mxu0 0
    %2262 = vmatpush.bf16.msra.mxu0 0
    %2263 = vmatpush.bf16.msra.mxu0 0
    %2264 = vmatpush.bf16.msra.mxu0 0
    %2265 = vmatpush.bf16.msra.mxu0 0
    %2266 = vmatpush.bf16.msra.mxu0 0
    %2267 = vmatpush.bf16.msra.mxu0 %v2086
    %2268 = vmatpush.bf16.msra.mxu0 %v2085
    %2269 = vmatmul.bf16.gmra.mxu0 %v2165
    %v2270 = vpop.f32.mrf.mxu0
    %v2271 = vadd.f32 0.0, %v2270
    %v2272 = vpop.f32.mrf.mxu0
    %2273 = vdwg.mxu0
    %v2274 = vadd.f32 %v2258, %v2271
    %v2275 = vadd.f32 %v2274, %v2104
    %v2276 = vxor.u32 %v2275, 2147483648
    %v2277 = vmul.f32 %v2276, 1.442695
    %v2278 = vpow.pop %v2277
    %v2279 = vadd.f32 %v2278, 1.0
    %v2280 = vrcp.pop %v2279
    %v2281 = vmul.f32 %v2279, %v2280
    %v2282 = vsub.f32 1.0, %v2281
    %v2283 = vmul.f32 %v2280, %v2282
    %v2284 = vadd.f32 %v2280, %v2283
    %vm2285 = vweird.f32 %v2279
    %vm2286 = vweird.f32 %v2280
    %vm2287 = vmor %vm2285, %vm2286
    %v2288 = vsel %vm2287, %v2280, %v2284
    %v2289 = vand.u32 2147483647, %v2279
    %vm2290 = vcmp.eq.f32.partialorder %v2289, 8.507059e+37
    %v2291 = vand.u32 %v2279, 2147483648
    %v2292 = vor.u32 1.1754944e-38, %v2291
    %v2293 = vsel %vm2290, %v2292, %v2288
    %v2294 = vmul.f32 1.0, %v2293
    %2296 = vrot.lane.b32.xlu0 %v2275, 32
    %v2297 = vpop.permute.xlu0 %2296
    %v2299 = vmul.f32 %v2294, %v2297
    %2301 = vrot.lane.b32.xlu0 %v2299, 64
    %v2302 = vpop.permute.xlu0 %2301
    %v2304 = vadd.f32 %v2275, %v2302
    %v2305 = vtanh.pop %v2304
    %v2306 = vsub.f32 1.0, %v2294
    %2308 = vrot.lane.b32.xlu0 %v2305, 96
    %v2309 = vpop.permute.xlu0 %2308
    %v2311 = vmul.f32 %v2306, %v2309
    %v2312 = vmul.f32 %v2294, %v2144
    %v2313 = vadd.f32 %v2311, %v2312
    %v2314 = vpack.c.bf16 %v2313, %v2313
    %2316 = vrot.lane.b32.xlu0 %v2314, 96
    %v2317 = vpop.permute.xlu0 %2316
    %v2319 = vsel %vm1418, %v2317, 0
    %2321 = vmatpush.bf16.msra.mxu0 0
    %2322 = vmatpush.bf16.msra.mxu0 0
    %2323 = vmatpush.bf16.msra.mxu0 0
    %2324 = vmatpush.bf16.msra.mxu0 0
    %2325 = vmatpush.bf16.msra.mxu0 0
    %2326 = vmatpush.bf16.msra.mxu0 0
    %2327 = vmatpush.bf16.msra.mxu0 %v2161
    %2328 = vmatpush.bf16.msra.mxu0 %v2160
    %2329 = vmatmul.bf16.gmra.mxu0 %v2319
    %v2330 = vpop.f32.mrf.mxu0
    %v2331 = vadd.f32 %v2147, %v2330
    %v2332 = vpop.f32.mrf.mxu0
    %2333 = vdwg.mxu0
    %2334 = vst [vmem:[#allocation2 + $0x2] sm:$0x3] %v2331
    %v2335 = vpack.c.bf16 %v2247, %v2247
    %v2337 = vrot.slane %v2335, 2
    %2338 = vrot.lane.b32.xlu0 %v2337, 96
    %v2339 = vpop.permute.xlu0 %2338
    %v2341 = vsel %vm1418, %v2339, 0
    %2343 = vmatpush.bf16.msra.mxu0 0
    %2344 = vmatpush.bf16.msra.mxu0 0
    %2345 = vmatpush.bf16.msra.mxu0 0
    %2346 = vmatpush.bf16.msra.mxu0 0
    %2347 = vmatpush.bf16.msra.mxu0 0
    %2348 = vmatpush.bf16.msra.mxu0 0
    %2349 = vmatpush.bf16.msra.mxu0 %v1921
    %2350 = vmatpush.bf16.msra.mxu0 %v1920
    %2351 = vmatmul.bf16.gmra.mxu0 %v2341
    %v2352 = vpop.f32.mrf.mxu0
    %v2353 = vadd.f32 0.0, %v2352
    %v2354 = vpop.f32.mrf.mxu0
    %2355 = vdwg.mxu0
    %v2357 = vrot.slane %v2353, 2
    %v2359 = vadd.f32 %v1888, %v2357
    %v2360 = vadd.f32 %v2359, %v1942
    %v2361 = vxor.u32 %v2360, 2147483648
    %v2362 = vmul.f32 %v2361, 1.442695
    %v2363 = vpow.pop %v2362
    %v2364 = vadd.f32 %v2363, 1.0
    %v2365 = vrcp.pop %v2364
    %v2366 = vmul.f32 %v2364, %v2365
    %v2367 = vsub.f32 1.0, %v2366
    %v2368 = vmul.f32 %v2365, %v2367
    %v2369 = vadd.f32 %v2365, %v2368
    %vm2370 = vweird.f32 %v2364
    %vm2371 = vweird.f32 %v2365
    %vm2372 = vmor %vm2370, %vm2371
    %v2373 = vsel %vm2372, %v2365, %v2369
    %v2374 = vand.u32 2147483647, %v2364
    %vm2375 = vcmp.eq.f32.partialorder %v2374, 8.507059e+37
    %v2376 = vand.u32 %v2364, 2147483648
    %v2377 = vor.u32 1.1754944e-38, %v2376
    %v2378 = vsel %vm2375, %v2377, %v2373
    %v2379 = vmul.f32 1.0, %v2378
    %2381 = vrot.lane.b32.xlu0 %v2360, 32
    %v2382 = vpop.permute.xlu0 %2381
    %v2384 = vmul.f32 %v2379, %v2382
    %2386 = vrot.lane.b32.xlu0 %v2384, 64
    %v2387 = vpop.permute.xlu0 %2386
    %v2389 = vadd.f32 %v2360, %v2387
    %v2390 = vtanh.pop %v2389
    %v2391 = vsub.f32 1.0, %v2379
    %2393 = vrot.lane.b32.xlu0 %v2390, 96
    %v2394 = vpop.permute.xlu0 %2393
    %v2396 = vmul.f32 %v2391, %v2394
    %v2398 = vrot.slane %v2247, 6
    %v2400 = vmul.f32 %v2379, %v2398
    %v2401 = vadd.f32 %v2396, %v2400
    %2402 = vmatpush.bf16.msra.mxu0 0
    %2403 = vmatpush.bf16.msra.mxu0 0
    %2404 = vmatpush.bf16.msra.mxu0 0
    %2405 = vmatpush.bf16.msra.mxu0 0
    %2406 = vmatpush.bf16.msra.mxu0 0
    %2407 = vmatpush.bf16.msra.mxu0 0
    %2408 = vmatpush.bf16.msra.mxu0 %v2061
    %2409 = vmatpush.bf16.msra.mxu0 %v2060
    %2410 = vmatmul.bf16.gmra.mxu0 %v2341
    %v2411 = vpop.f32.mrf.mxu0
    %v2412 = vadd.f32 %v2050, %v2411
    %v2413 = vpop.f32.mrf.mxu0
    %2414 = vdwg.mxu0
    %2415 = vmatpush.bf16.msra.mxu0 0
    %2416 = vmatpush.bf16.msra.mxu0 0
    %2417 = vmatpush.bf16.msra.mxu0 0
    %2418 = vmatpush.bf16.msra.mxu0 0
    %2419 = vmatpush.bf16.msra.mxu0 0
    %2420 = vmatpush.bf16.msra.mxu0 0
    %2421 = vmatpush.bf16.msra.mxu0 %v2086
    %2422 = vmatpush.bf16.msra.mxu0 %v2085
    %2423 = vmatmul.bf16.gmra.mxu0 %v2319
    %v2424 = vpop.f32.mrf.mxu0
    %v2425 = vadd.f32 0.0, %v2424
    %v2426 = vpop.f32.mrf.mxu0
    %2427 = vdwg.mxu0
    %v2428 = vadd.f32 %v2412, %v2425
    %v2429 = vadd.f32 %v2428, %v2104
    %v2430 = vxor.u32 %v2429, 2147483648
    %v2431 = vmul.f32 %v2430, 1.442695
    %v2432 = vpow.pop %v2431
    %v2433 = vadd.f32 %v2432, 1.0
    %v2434 = vrcp.pop %v2433
    %v2435 = vmul.f32 %v2433, %v2434
    %v2436 = vsub.f32 1.0, %v2435
    %v2437 = vmul.f32 %v2434, %v2436
    %v2438 = vadd.f32 %v2434, %v2437
    %vm2439 = vweird.f32 %v2433
    %vm2440 = vweird.f32 %v2434
    %vm2441 = vmor %vm2439, %vm2440
    %v2442 = vsel %vm2441, %v2434, %v2438
    %v2443 = vand.u32 2147483647, %v2433
    %vm2444 = vcmp.eq.f32.partialorder %v2443, 8.507059e+37
    %v2445 = vand.u32 %v2433, 2147483648
    %v2446 = vor.u32 1.1754944e-38, %v2445
    %v2447 = vsel %vm2444, %v2446, %v2442
    %v2448 = vmul.f32 1.0, %v2447
    %2450 = vrot.lane.b32.xlu0 %v2429, 32
    %v2451 = vpop.permute.xlu0 %2450
    %v2453 = vmul.f32 %v2448, %v2451
    %2455 = vrot.lane.b32.xlu0 %v2453, 64
    %v2456 = vpop.permute.xlu0 %2455
    %v2458 = vadd.f32 %v2429, %v2456
    %v2459 = vtanh.pop %v2458
    %v2460 = vsub.f32 1.0, %v2448
    %2462 = vrot.lane.b32.xlu0 %v2459, 96
    %v2463 = vpop.permute.xlu0 %2462
    %v2465 = vmul.f32 %v2460, %v2463
    %v2466 = vmul.f32 %v2448, %v2313
    %v2467 = vadd.f32 %v2465, %v2466
    %v2468 = vpack.c.bf16 %v2467, %v2467
    %2470 = vrot.lane.b32.xlu0 %v2468, 96
    %v2471 = vpop.permute.xlu0 %2470
    %v2473 = vsel %vm1418, %v2471, 0
    %2475 = vmatpush.bf16.msra.mxu0 0
    %2476 = vmatpush.bf16.msra.mxu0 0
    %2477 = vmatpush.bf16.msra.mxu0 0
    %2478 = vmatpush.bf16.msra.mxu0 0
    %2479 = vmatpush.bf16.msra.mxu0 0
    %2480 = vmatpush.bf16.msra.mxu0 0
    %2481 = vmatpush.bf16.msra.mxu0 %v2161
    %2482 = vmatpush.bf16.msra.mxu0 %v2160
    %2483 = vmatmul.bf16.gmra.mxu0 %v2473
    %v2484 = vpop.f32.mrf.mxu0
    %v2485 = vadd.f32 %v2147, %v2484
    %v2486 = vpop.f32.mrf.mxu0
    %2487 = vdwg.mxu0
    %2488 = vst [vmem:[#allocation2 + $0x4] sm:$0x3] %v2485
    %v2489 = vpack.c.bf16 %v2401, %v2401
    %v2491 = vrot.slane %v2489, 3
    %2492 = vrot.lane.b32.xlu0 %v2491, 96
    %v2493 = vpop.permute.xlu0 %2492
    %v2495 = vsel %vm1418, %v2493, 0
    %2497 = vmatpush.bf16.msra.mxu0 0
    %2498 = vmatpush.bf16.msra.mxu0 0
    %2499 = vmatpush.bf16.msra.mxu0 0
    %2500 = vmatpush.bf16.msra.mxu0 0
    %2501 = vmatpush.bf16.msra.mxu0 0
    %2502 = vmatpush.bf16.msra.mxu0 0
    %2503 = vmatpush.bf16.msra.mxu0 %v1921
    %2504 = vmatpush.bf16.msra.mxu0 %v1920
    %2505 = vmatmul.bf16.gmra.mxu0 %v2495
    %v2506 = vpop.f32.mrf.mxu0
    %v2507 = vadd.f32 0.0, %v2506
    %v2508 = vpop.f32.mrf.mxu0
    %2509 = vdwg.mxu0
    %v2510 = vadd.f32 %v1890, %v2507
    %v2511 = vadd.f32 %v2510, %v1942
    %v2512 = vxor.u32 %v2511, 2147483648
    %v2513 = vmul.f32 %v2512, 1.442695
    %v2514 = vpow.pop %v2513
    %v2515 = vadd.f32 %v2514, 1.0
    %v2516 = vrcp.pop %v2515
    %v2517 = vmul.f32 %v2515, %v2516
    %v2518 = vsub.f32 1.0, %v2517
    %v2519 = vmul.f32 %v2516, %v2518
    %v2520 = vadd.f32 %v2516, %v2519
    %vm2521 = vweird.f32 %v2515
    %vm2522 = vweird.f32 %v2516
    %vm2523 = vmor %vm2521, %vm2522
    %v2524 = vsel %vm2523, %v2516, %v2520
    %v2525 = vand.u32 2147483647, %v2515
    %vm2526 = vcmp.eq.f32.partialorder %v2525, 8.507059e+37
    %v2527 = vand.u32 %v2515, 2147483648
    %v2528 = vor.u32 1.1754944e-38, %v2527
    %v2529 = vsel %vm2526, %v2528, %v2524
    %v2530 = vmul.f32 1.0, %v2529
    %2532 = vrot.lane.b32.xlu0 %v2511, 32
    %v2533 = vpop.permute.xlu0 %2532
    %v2535 = vmul.f32 %v2530, %v2533
    %2537 = vrot.lane.b32.xlu0 %v2535, 64
    %v2538 = vpop.permute.xlu0 %2537
    %v2540 = vadd.f32 %v2511, %v2538
    %v2541 = vtanh.pop %v2540
    %v2542 = vsub.f32 1.0, %v2530
    %2544 = vrot.lane.b32.xlu0 %v2541, 96
    %v2545 = vpop.permute.xlu0 %2544
    %v2547 = vmul.f32 %v2542, %v2545
    %v2549 = vrot.slane %v2401, 6
    %v2551 = vmul.f32 %v2530, %v2549
    %v2552 = vadd.f32 %v2547, %v2551
    %2553 = vmatpush.bf16.msra.mxu0 0
    %2554 = vmatpush.bf16.msra.mxu0 0
    %2555 = vmatpush.bf16.msra.mxu0 0
    %2556 = vmatpush.bf16.msra.mxu0 0
    %2557 = vmatpush.bf16.msra.mxu0 0
    %2558 = vmatpush.bf16.msra.mxu0 0
    %2559 = vmatpush.bf16.msra.mxu0 %v2061
    %2560 = vmatpush.bf16.msra.mxu0 %v2060
    %2561 = vmatmul.bf16.gmra.mxu0 %v2495
    %v2562 = vpop.f32.mrf.mxu0
    %v2563 = vadd.f32 %v2050, %v2562
    %v2564 = vpop.f32.mrf.mxu0
    %2565 = vdwg.mxu0
    %2566 = vmatpush.bf16.msra.mxu0 0
    %2567 = vmatpush.bf16.msra.mxu0 0
    %2568 = vmatpush.bf16.msra.mxu0 0
    %2569 = vmatpush.bf16.msra.mxu0 0
    %2570 = vmatpush.bf16.msra.mxu0 0
    %2571 = vmatpush.bf16.msra.mxu0 0
    %2572 = vmatpush.bf16.msra.mxu0 %v2086
    %2573 = vmatpush.bf16.msra.mxu0 %v2085
    %2574 = vmatmul.bf16.gmra.mxu0 %v2473
    %v2575 = vpop.f32.mrf.mxu0
    %v2576 = vadd.f32 0.0, %v2575
    %v2577 = vpop.f32.mrf.mxu0
    %2578 = vdwg.mxu0
    %v2579 = vadd.f32 %v2563, %v2576
    %v2580 = vadd.f32 %v2579, %v2104
    %v2581 = vxor.u32 %v2580, 2147483648
    %v2582 = vmul.f32 %v2581, 1.442695
    %v2583 = vpow.pop %v2582
    %v2584 = vadd.f32 %v2583, 1.0
    %v2585 = vrcp.pop %v2584
    %v2586 = vmul.f32 %v2584, %v2585
    %v2587 = vsub.f32 1.0, %v2586
    %v2588 = vmul.f32 %v2585, %v2587
    %v2589 = vadd.f32 %v2585, %v2588
    %vm2590 = vweird.f32 %v2584
    %vm2591 = vweird.f32 %v2585
    %vm2592 = vmor %vm2590, %vm2591
    %v2593 = vsel %vm2592, %v2585, %v2589
    %v2594 = vand.u32 2147483647, %v2584
    %vm2595 = vcmp.eq.f32.partialorder %v2594, 8.507059e+37
    %v2596 = vand.u32 %v2584, 2147483648
    %v2597 = vor.u32 1.1754944e-38, %v2596
    %v2598 = vsel %vm2595, %v2597, %v2593
    %v2599 = vmul.f32 1.0, %v2598
    %2601 = vrot.lane.b32.xlu0 %v2580, 32
    %v2602 = vpop.permute.xlu0 %2601
    %v2604 = vmul.f32 %v2599, %v2602
    %2606 = vrot.lane.b32.xlu0 %v2604, 64
    %v2607 = vpop.permute.xlu0 %2606
    %v2609 = vadd.f32 %v2580, %v2607
    %v2610 = vtanh.pop %v2609
    %v2611 = vsub.f32 1.0, %v2599
    %2613 = vrot.lane.b32.xlu0 %v2610, 96
    %v2614 = vpop.permute.xlu0 %2613
    %v2616 = vmul.f32 %v2611, %v2614
    %v2617 = vmul.f32 %v2599, %v2467
    %v2618 = vadd.f32 %v2616, %v2617
    %v2619 = vpack.c.bf16 %v2618, %v2618
    %2621 = vrot.lane.b32.xlu0 %v2619, 96
    %v2622 = vpop.permute.xlu0 %2621
    %v2624 = vsel %vm1418, %v2622, 0
    %2626 = vmatpush.bf16.msra.mxu0 0
    %2627 = vmatpush.bf16.msra.mxu0 0
    %2628 = vmatpush.bf16.msra.mxu0 0
    %2629 = vmatpush.bf16.msra.mxu0 0
    %2630 = vmatpush.bf16.msra.mxu0 0
    %2631 = vmatpush.bf16.msra.mxu0 0
    %2632 = vmatpush.bf16.msra.mxu0 %v2161
    %2633 = vmatpush.bf16.msra.mxu0 %v2160
    %2634 = vmatmul.bf16.gmra.mxu0 %v2624
    %v2635 = vpop.f32.mrf.mxu0
    %v2636 = vadd.f32 %v2147, %v2635
    %v2637 = vpop.f32.mrf.mxu0
    %2638 = vdwg.mxu0
    %2639 = vst [vmem:[#allocation2 + $0x6] sm:$0x3] %v2636
    %v2640 = vpack.c.bf16 %v2552, %v2552
    %2642 = vrot.lane.b32.xlu0 %v2640, 96
    %v2643 = vpop.permute.xlu0 %2642
    %v2645 = vsel %vm1418, %v2643, 0
    %2647 = vmatpush.bf16.msra.mxu0 0
    %2648 = vmatpush.bf16.msra.mxu0 0
    %2649 = vmatpush.bf16.msra.mxu0 0
    %2650 = vmatpush.bf16.msra.mxu0 0
    %2651 = vmatpush.bf16.msra.mxu0 0
    %2652 = vmatpush.bf16.msra.mxu0 0
    %2653 = vmatpush.bf16.msra.mxu0 %v1921
    %2654 = vmatpush.bf16.msra.mxu0 %v1920
    %2655 = vmatmul.bf16.gmra.mxu0 %v2645
    %v2656 = vpop.f32.mrf.mxu0
    %v2657 = vadd.f32 0.0, %v2656
    %v2658 = vpop.f32.mrf.mxu0
    %2659 = vdwg.mxu0
    %v2661 = vrot.slane %v2657, 6
    %v2663 = vadd.f32 %v1890, %v2661
    %v2664 = vadd.f32 %v2663, %v1942
    %v2665 = vxor.u32 %v2664, 2147483648
    %v2666 = vmul.f32 %v2665, 1.442695
    %v2667 = vpow.pop %v2666
    %v2668 = vadd.f32 %v2667, 1.0
    %v2669 = vrcp.pop %v2668
    %v2670 = vmul.f32 %v2668, %v2669
    %v2671 = vsub.f32 1.0, %v2670
    %v2672 = vmul.f32 %v2669, %v2671
    %v2673 = vadd.f32 %v2669, %v2672
    %vm2674 = vweird.f32 %v2668
    %vm2675 = vweird.f32 %v2669
    %vm2676 = vmor %vm2674, %vm2675
    %v2677 = vsel %vm2676, %v2669, %v2673
    %v2678 = vand.u32 2147483647, %v2668
    %vm2679 = vcmp.eq.f32.partialorder %v2678, 8.507059e+37
    %v2680 = vand.u32 %v2668, 2147483648
    %v2681 = vor.u32 1.1754944e-38, %v2680
    %v2682 = vsel %vm2679, %v2681, %v2677
    %v2683 = vmul.f32 1.0, %v2682
    %2685 = vrot.lane.b32.xlu0 %v2664, 32
    %v2686 = vpop.permute.xlu0 %2685
    %v2688 = vmul.f32 %v2683, %v2686
    %2690 = vrot.lane.b32.xlu0 %v2688, 64
    %v2691 = vpop.permute.xlu0 %2690
    %v2693 = vadd.f32 %v2664, %v2691
    %v2694 = vtanh.pop %v2693
    %v2695 = vsub.f32 1.0, %v2683
    %2697 = vrot.lane.b32.xlu0 %v2694, 96
    %v2698 = vpop.permute.xlu0 %2697
    %v2700 = vmul.f32 %v2695, %v2698
    %v2702 = vrot.slane %v2552, 6
    %v2704 = vmul.f32 %v2683, %v2702
    %v2705 = vadd.f32 %v2700, %v2704
    %2706 = vmatpush.bf16.msra.mxu0 0
    %2707 = vmatpush.bf16.msra.mxu0 0
    %2708 = vmatpush.bf16.msra.mxu0 0
    %2709 = vmatpush.bf16.msra.mxu0 0
    %2710 = vmatpush.bf16.msra.mxu0 0
    %2711 = vmatpush.bf16.msra.mxu0 0
    %2712 = vmatpush.bf16.msra.mxu0 %v2061
    %2713 = vmatpush.bf16.msra.mxu0 %v2060
    %2714 = vmatmul.bf16.gmra.mxu0 %v2645
    %v2715 = vpop.f32.mrf.mxu0
    %v2716 = vadd.f32 %v2050, %v2715
    %v2717 = vpop.f32.mrf.mxu0
    %2718 = vdwg.mxu0
    %2719 = vmatpush.bf16.msra.mxu0 0
    %2720 = vmatpush.bf16.msra.mxu0 0
    %2721 = vmatpush.bf16.msra.mxu0 0
    %2722 = vmatpush.bf16.msra.mxu0 0
    %2723 = vmatpush.bf16.msra.mxu0 0
    %2724 = vmatpush.bf16.msra.mxu0 0
    %2725 = vmatpush.bf16.msra.mxu0 %v2086
    %2726 = vmatpush.bf16.msra.mxu0 %v2085
    %2727 = vmatmul.bf16.gmra.mxu0 %v2624
    %v2728 = vpop.f32.mrf.mxu0
    %v2729 = vadd.f32 0.0, %v2728
    %v2730 = vpop.f32.mrf.mxu0
    %2731 = vdwg.mxu0
    %v2732 = vadd.f32 %v2716, %v2729
    %v2733 = vadd.f32 %v2732, %v2104
    %v2734 = vxor.u32 %v2733, 2147483648
    %v2735 = vmul.f32 %v2734, 1.442695
    %v2736 = vpow.pop %v2735
    %v2737 = vadd.f32 %v2736, 1.0
    %v2738 = vrcp.pop %v2737
    %v2739 = vmul.f32 %v2737, %v2738
    %v2740 = vsub.f32 1.0, %v2739
    %v2741 = vmul.f32 %v2738, %v2740
    %v2742 = vadd.f32 %v2738, %v2741
    %vm2743 = vweird.f32 %v2737
    %vm2744 = vweird.f32 %v2738
    %vm2745 = vmor %vm2743, %vm2744
    %v2746 = vsel %vm2745, %v2738, %v2742
    %v2747 = vand.u32 2147483647, %v2737
    %vm2748 = vcmp.eq.f32.partialorder %v2747, 8.507059e+37
    %v2749 = vand.u32 %v2737, 2147483648
    %v2750 = vor.u32 1.1754944e-38, %v2749
    %v2751 = vsel %vm2748, %v2750, %v2746
    %v2752 = vmul.f32 1.0, %v2751
    %2754 = vrot.lane.b32.xlu0 %v2733, 32
    %v2755 = vpop.permute.xlu0 %2754
    %v2757 = vmul.f32 %v2752, %v2755
    %2759 = vrot.lane.b32.xlu0 %v2757, 64
    %v2760 = vpop.permute.xlu0 %2759
    %v2762 = vadd.f32 %v2733, %v2760
    %v2763 = vtanh.pop %v2762
    %v2764 = vsub.f32 1.0, %v2752
    %2766 = vrot.lane.b32.xlu0 %v2763, 96
    %v2767 = vpop.permute.xlu0 %2766
    %v2769 = vmul.f32 %v2764, %v2767
    %v2770 = vmul.f32 %v2752, %v2618
    %v2771 = vadd.f32 %v2769, %v2770
    %v2772 = vpack.c.bf16 %v2771, %v2771
    %2774 = vrot.lane.b32.xlu0 %v2772, 96
    %v2775 = vpop.permute.xlu0 %2774
    %v2777 = vsel %vm1418, %v2775, 0
    %2779 = vmatpush.bf16.msra.mxu0 0
    %2780 = vmatpush.bf16.msra.mxu0 0
    %2781 = vmatpush.bf16.msra.mxu0 0
    %2782 = vmatpush.bf16.msra.mxu0 0
    %2783 = vmatpush.bf16.msra.mxu0 0
    %2784 = vmatpush.bf16.msra.mxu0 0
    %2785 = vmatpush.bf16.msra.mxu0 %v2161
    %2786 = vmatpush.bf16.msra.mxu0 %v2160
    %2787 = vmatmul.bf16.gmra.mxu0 %v2777
    %v2788 = vpop.f32.mrf.mxu0
    %v2789 = vadd.f32 %v2147, %v2788
    %v2790 = vpop.f32.mrf.mxu0
    %2791 = vdwg.mxu0
    %2792 = vst [vmem:[#allocation2 + $0x8] sm:$0x3] %v2789
    %v2793 = vpack.c.bf16 %v2705, %v2705
    %v2795 = vrot.slane %v2793, 1
    %2796 = vrot.lane.b32.xlu0 %v2795, 96
    %v2797 = vpop.permute.xlu0 %2796
    %v2799 = vsel %vm1418, %v2797, 0
    %2801 = vmatpush.bf16.msra.mxu0 0
    %2802 = vmatpush.bf16.msra.mxu0 0
    %2803 = vmatpush.bf16.msra.mxu0 0
    %2804 = vmatpush.bf16.msra.mxu0 0
    %2805 = vmatpush.bf16.msra.mxu0 0
    %2806 = vmatpush.bf16.msra.mxu0 0
    %2807 = vmatpush.bf16.msra.mxu0 %v1921
    %2808 = vmatpush.bf16.msra.mxu0 %v1920
    %2809 = vmatmul.bf16.gmra.mxu0 %v2799
    %v2810 = vpop.f32.mrf.mxu0
    %v2811 = vadd.f32 0.0, %v2810
    %v2812 = vpop.f32.mrf.mxu0
    %2813 = vdwg.mxu0
    %v2815 = vrot.slane %v2811, 4
    %v2817 = vadd.f32 %v1890, %v2815
    %v2818 = vadd.f32 %v2817, %v1942
    %v2819 = vxor.u32 %v2818, 2147483648
    %v2820 = vmul.f32 %v2819, 1.442695
    %v2821 = vpow.pop %v2820
    %v2822 = vadd.f32 %v2821, 1.0
    %v2823 = vrcp.pop %v2822
    %v2824 = vmul.f32 %v2822, %v2823
    %v2825 = vsub.f32 1.0, %v2824
    %v2826 = vmul.f32 %v2823, %v2825
    %v2827 = vadd.f32 %v2823, %v2826
    %vm2828 = vweird.f32 %v2822
    %vm2829 = vweird.f32 %v2823
    %vm2830 = vmor %vm2828, %vm2829
    %v2831 = vsel %vm2830, %v2823, %v2827
    %v2832 = vand.u32 2147483647, %v2822
    %vm2833 = vcmp.eq.f32.partialorder %v2832, 8.507059e+37
    %v2834 = vand.u32 %v2822, 2147483648
    %v2835 = vor.u32 1.1754944e-38, %v2834
    %v2836 = vsel %vm2833, %v2835, %v2831
    %v2837 = vmul.f32 1.0, %v2836
    %2839 = vrot.lane.b32.xlu0 %v2818, 32
    %v2840 = vpop.permute.xlu0 %2839
    %v2842 = vmul.f32 %v2837, %v2840
    %2844 = vrot.lane.b32.xlu0 %v2842, 64
    %v2845 = vpop.permute.xlu0 %2844
    %v2847 = vadd.f32 %v2818, %v2845
    %v2848 = vtanh.pop %v2847
    %v2849 = vsub.f32 1.0, %v2837
    %2851 = vrot.lane.b32.xlu0 %v2848, 96
    %v2852 = vpop.permute.xlu0 %2851
    %v2854 = vmul.f32 %v2849, %v2852
    %v2856 = vrot.slane %v2705, 6
    %v2858 = vmul.f32 %v2837, %v2856
    %v2859 = vadd.f32 %v2854, %v2858
    %2860 = vmatpush.bf16.msra.mxu0 0
    %2861 = vmatpush.bf16.msra.mxu0 0
    %2862 = vmatpush.bf16.msra.mxu0 0
    %2863 = vmatpush.bf16.msra.mxu0 0
    %2864 = vmatpush.bf16.msra.mxu0 0
    %2865 = vmatpush.bf16.msra.mxu0 0
    %2866 = vmatpush.bf16.msra.mxu0 %v2061
    %2867 = vmatpush.bf16.msra.mxu0 %v2060
    %2868 = vmatmul.bf16.gmra.mxu0 %v2799
    %v2869 = vpop.f32.mrf.mxu0
    %v2870 = vadd.f32 %v2050, %v2869
    %v2871 = vpop.f32.mrf.mxu0
    %2872 = vdwg.mxu0
    %2873 = vmatpush.bf16.msra.mxu0 0
    %2874 = vmatpush.bf16.msra.mxu0 0
    %2875 = vmatpush.bf16.msra.mxu0 0
    %2876 = vmatpush.bf16.msra.mxu0 0
    %2877 = vmatpush.bf16.msra.mxu0 0
    %2878 = vmatpush.bf16.msra.mxu0 0
    %2879 = vmatpush.bf16.msra.mxu0 %v2086
    %2880 = vmatpush.bf16.msra.mxu0 %v2085
    %2881 = vmatmul.bf16.gmra.mxu0 %v2777
    %v2882 = vpop.f32.mrf.mxu0
    %v2883 = vadd.f32 0.0, %v2882
    %v2884 = vpop.f32.mrf.mxu0
    %2885 = vdwg.mxu0
    %v2886 = vadd.f32 %v2870, %v2883
    %v2887 = vadd.f32 %v2886, %v2104
    %v2888 = vxor.u32 %v2887, 2147483648
    %v2889 = vmul.f32 %v2888, 1.442695
    %v2890 = vpow.pop %v2889
    %v2891 = vadd.f32 %v2890, 1.0
    %v2892 = vrcp.pop %v2891
    %v2893 = vmul.f32 %v2891, %v2892
    %v2894 = vsub.f32 1.0, %v2893
    %v2895 = vmul.f32 %v2892, %v2894
    %v2896 = vadd.f32 %v2892, %v2895
    %vm2897 = vweird.f32 %v2891
    %vm2898 = vweird.f32 %v2892
    %vm2899 = vmor %vm2897, %vm2898
    %v2900 = vsel %vm2899, %v2892, %v2896
    %v2901 = vand.u32 2147483647, %v2891
    %vm2902 = vcmp.eq.f32.partialorder %v2901, 8.507059e+37
    %v2903 = vand.u32 %v2891, 2147483648
    %v2904 = vor.u32 1.1754944e-38, %v2903
    %v2905 = vsel %vm2902, %v2904, %v2900
    %v2906 = vmul.f32 1.0, %v2905
    %2908 = vrot.lane.b32.xlu0 %v2887, 32
    %v2909 = vpop.permute.xlu0 %2908
    %v2911 = vmul.f32 %v2906, %v2909
    %2913 = vrot.lane.b32.xlu0 %v2911, 64
    %v2914 = vpop.permute.xlu0 %2913
    %v2916 = vadd.f32 %v2887, %v2914
    %v2917 = vtanh.pop %v2916
    %v2918 = vsub.f32 1.0, %v2906
    %2920 = vrot.lane.b32.xlu0 %v2917, 96
    %v2921 = vpop.permute.xlu0 %2920
    %v2923 = vmul.f32 %v2918, %v2921
    %v2924 = vmul.f32 %v2906, %v2771
    %v2925 = vadd.f32 %v2923, %v2924
    %v2926 = vpack.c.bf16 %v2925, %v2925
    %2928 = vrot.lane.b32.xlu0 %v2926, 96
    %v2929 = vpop.permute.xlu0 %2928
    %v2931 = vsel %vm1418, %v2929, 0
    %2933 = vmatpush.bf16.msra.mxu0 0
    %2934 = vmatpush.bf16.msra.mxu0 0
    %2935 = vmatpush.bf16.msra.mxu0 0
    %2936 = vmatpush.bf16.msra.mxu0 0
    %2937 = vmatpush.bf16.msra.mxu0 0
    %2938 = vmatpush.bf16.msra.mxu0 0
    %2939 = vmatpush.bf16.msra.mxu0 %v2161
    %2940 = vmatpush.bf16.msra.mxu0 %v2160
    %2941 = vmatmul.bf16.gmra.mxu0 %v2931
    %v2942 = vpop.f32.mrf.mxu0
    %v2943 = vadd.f32 %v2147, %v2942
    %v2944 = vpop.f32.mrf.mxu0
    %2945 = vdwg.mxu0
    %2946 = vst [vmem:[#allocation2 + $0xa] sm:$0x3] %v2943
    %v2947 = vpack.c.bf16 %v2859, %v2859
    %v2949 = vrot.slane %v2947, 2
    %2950 = vrot.lane.b32.xlu0 %v2949, 96
    %v2951 = vpop.permute.xlu0 %2950
    %v2953 = vsel %vm1418, %v2951, 0
    %2955 = vmatpush.bf16.msra.mxu0 0
    %2956 = vmatpush.bf16.msra.mxu0 0
    %2957 = vmatpush.bf16.msra.mxu0 0
    %2958 = vmatpush.bf16.msra.mxu0 0
    %2959 = vmatpush.bf16.msra.mxu0 0
    %2960 = vmatpush.bf16.msra.mxu0 0
    %2961 = vmatpush.bf16.msra.mxu0 %v1921
    %2962 = vmatpush.bf16.msra.mxu0 %v1920
    %2963 = vmatmul.bf16.gmra.mxu0 %v2953
    %v2964 = vpop.f32.mrf.mxu0
    %v2965 = vadd.f32 0.0, %v2964
    %v2966 = vpop.f32.mrf.mxu0
    %2967 = vdwg.mxu0
    %v2969 = vrot.slane %v2965, 2
    %v2971 = vadd.f32 %v1890, %v2969
    %v2972 = vadd.f32 %v2971, %v1942
    %v2973 = vxor.u32 %v2972, 2147483648
    %v2974 = vmul.f32 %v2973, 1.442695
    %v2975 = vpow.pop %v2974
    %v2976 = vadd.f32 %v2975, 1.0
    %v2977 = vrcp.pop %v2976
    %v2978 = vmul.f32 %v2976, %v2977
    %v2979 = vsub.f32 1.0, %v2978
    %v2980 = vmul.f32 %v2977, %v2979
    %v2981 = vadd.f32 %v2977, %v2980
    %vm2982 = vweird.f32 %v2976
    %vm2983 = vweird.f32 %v2977
    %vm2984 = vmor %vm2982, %vm2983
    %v2985 = vsel %vm2984, %v2977, %v2981
    %v2986 = vand.u32 2147483647, %v2976
    %vm2987 = vcmp.eq.f32.partialorder %v2986, 8.507059e+37
    %v2988 = vand.u32 %v2976, 2147483648
    %v2989 = vor.u32 1.1754944e-38, %v2988
    %v2990 = vsel %vm2987, %v2989, %v2985
    %v2991 = vmul.f32 1.0, %v2990
    %2993 = vrot.lane.b32.xlu0 %v2972, 32
    %v2994 = vpop.permute.xlu0 %2993
    %v2996 = vmul.f32 %v2991, %v2994
    %2998 = vrot.lane.b32.xlu0 %v2996, 64
    %v2999 = vpop.permute.xlu0 %2998
    %v3001 = vadd.f32 %v2972, %v2999
    %v3002 = vtanh.pop %v3001
    %v3003 = vsub.f32 1.0, %v2991
    %3005 = vrot.lane.b32.xlu0 %v3002, 96
    %v3006 = vpop.permute.xlu0 %3005
    %v3008 = vmul.f32 %v3003, %v3006
    %v3010 = vrot.slane %v2859, 6
    %v3012 = vmul.f32 %v2991, %v3010
    %v3013 = vadd.f32 %v3008, %v3012
    %3014 = vmatpush.bf16.msra.mxu0 0
    %3015 = vmatpush.bf16.msra.mxu0 0
    %3016 = vmatpush.bf16.msra.mxu0 0
    %3017 = vmatpush.bf16.msra.mxu0 0
    %3018 = vmatpush.bf16.msra.mxu0 0
    %3019 = vmatpush.bf16.msra.mxu0 0
    %3020 = vmatpush.bf16.msra.mxu0 %v2061
    %3021 = vmatpush.bf16.msra.mxu0 %v2060
    %3022 = vmatmul.bf16.gmra.mxu0 %v2953
    %v3023 = vpop.f32.mrf.mxu0
    %v3024 = vadd.f32 %v2050, %v3023
    %v3025 = vpop.f32.mrf.mxu0
    %3026 = vdwg.mxu0
    %3027 = vmatpush.bf16.msra.mxu0 0
    %3028 = vmatpush.bf16.msra.mxu0 0
    %3029 = vmatpush.bf16.msra.mxu0 0
    %3030 = vmatpush.bf16.msra.mxu0 0
    %3031 = vmatpush.bf16.msra.mxu0 0
    %3032 = vmatpush.bf16.msra.mxu0 0
    %3033 = vmatpush.bf16.msra.mxu0 %v2086
    %3034 = vmatpush.bf16.msra.mxu0 %v2085
    %3035 = vmatmul.bf16.gmra.mxu0 %v2931
    %v3036 = vpop.f32.mrf.mxu0
    %v3037 = vadd.f32 0.0, %v3036
    %v3038 = vpop.f32.mrf.mxu0
    %3039 = vdwg.mxu0
    %v3040 = vadd.f32 %v3024, %v3037
    %v3041 = vadd.f32 %v3040, %v2104
    %v3042 = vxor.u32 %v3041, 2147483648
    %v3043 = vmul.f32 %v3042, 1.442695
    %v3044 = vpow.pop %v3043
    %v3045 = vadd.f32 %v3044, 1.0
    %v3046 = vrcp.pop %v3045
    %v3047 = vmul.f32 %v3045, %v3046
    %v3048 = vsub.f32 1.0, %v3047
    %v3049 = vmul.f32 %v3046, %v3048
    %v3050 = vadd.f32 %v3046, %v3049
    %vm3051 = vweird.f32 %v3045
    %vm3052 = vweird.f32 %v3046
    %vm3053 = vmor %vm3051, %vm3052
    %v3054 = vsel %vm3053, %v3046, %v3050
    %v3055 = vand.u32 2147483647, %v3045
    %vm3056 = vcmp.eq.f32.partialorder %v3055, 8.507059e+37
    %v3057 = vand.u32 %v3045, 2147483648
    %v3058 = vor.u32 1.1754944e-38, %v3057
    %v3059 = vsel %vm3056, %v3058, %v3054
    %v3060 = vmul.f32 1.0, %v3059
    %3062 = vrot.lane.b32.xlu0 %v3041, 32
    %v3063 = vpop.permute.xlu0 %3062
    %v3065 = vmul.f32 %v3060, %v3063
    %3067 = vrot.lane.b32.xlu0 %v3065, 64
    %v3068 = vpop.permute.xlu0 %3067
    %v3070 = vadd.f32 %v3041, %v3068
    %v3071 = vtanh.pop %v3070
    %v3072 = vsub.f32 1.0, %v3060
    %3074 = vrot.lane.b32.xlu0 %v3071, 96
    %v3075 = vpop.permute.xlu0 %3074
    %v3077 = vmul.f32 %v3072, %v3075
    %v3078 = vmul.f32 %v3060, %v2925
    %v3079 = vadd.f32 %v3077, %v3078
    %v3080 = vpack.c.bf16 %v3079, %v3079
    %3082 = vrot.lane.b32.xlu0 %v3080, 96
    %v3083 = vpop.permute.xlu0 %3082
    %v3085 = vsel %vm1418, %v3083, 0
    %3087 = vmatpush.bf16.msra.mxu0 0
    %3088 = vmatpush.bf16.msra.mxu0 0
    %3089 = vmatpush.bf16.msra.mxu0 0
    %3090 = vmatpush.bf16.msra.mxu0 0
    %3091 = vmatpush.bf16.msra.mxu0 0
    %3092 = vmatpush.bf16.msra.mxu0 0
    %3093 = vmatpush.bf16.msra.mxu0 %v2161
    %3094 = vmatpush.bf16.msra.mxu0 %v2160
    %3095 = vmatmul.bf16.gmra.mxu0 %v3085
    %v3096 = vpop.f32.mrf.mxu0
    %v3097 = vadd.f32 %v2147, %v3096
    %v3098 = vpop.f32.mrf.mxu0
    %3099 = vdwg.mxu0
    %3100 = vst [vmem:[#allocation2 + $0xc] sm:$0x3] %v3097
    %v3101 = vpack.c.bf16 %v3013, %v3013
    %v3103 = vrot.slane %v3101, 3
    %3104 = vrot.lane.b32.xlu0 %v3103, 96
    %v3105 = vpop.permute.xlu0 %3104
    %v3107 = vsel %vm1418, %v3105, 0
    %3109 = vmatpush.bf16.msra.mxu0 0
    %3110 = vmatpush.bf16.msra.mxu0 0
    %3111 = vmatpush.bf16.msra.mxu0 0
    %3112 = vmatpush.bf16.msra.mxu0 0
    %3113 = vmatpush.bf16.msra.mxu0 0
    %3114 = vmatpush.bf16.msra.mxu0 0
    %3115 = vmatpush.bf16.msra.mxu0 %v2061
    %3116 = vmatpush.bf16.msra.mxu0 %v2060
    %3117 = vmatmul.bf16.gmra.mxu0 %v3107
    %v3118 = vpop.f32.mrf.mxu0
    %v3119 = vadd.f32 %v2050, %v3118
    %v3120 = vpop.f32.mrf.mxu0
    %3121 = vdwg.mxu0
    %3122 = vmatpush.bf16.msra.mxu0 0
    %3123 = vmatpush.bf16.msra.mxu0 0
    %3124 = vmatpush.bf16.msra.mxu0 0
    %3125 = vmatpush.bf16.msra.mxu0 0
    %3126 = vmatpush.bf16.msra.mxu0 0
    %3127 = vmatpush.bf16.msra.mxu0 0
    %3128 = vmatpush.bf16.msra.mxu0 %v2086
    %3129 = vmatpush.bf16.msra.mxu0 %v2085
    %3130 = vmatmul.bf16.gmra.mxu0 %v3085
    %v3131 = vpop.f32.mrf.mxu0
    %v3132 = vadd.f32 0.0, %v3131
    %v3133 = vpop.f32.mrf.mxu0
    %3134 = vdwg.mxu0
    %v3135 = vadd.f32 %v3119, %v3132
    %v3136 = vadd.f32 %v3135, %v2104
    %v3137 = vxor.u32 %v3136, 2147483648
    %v3138 = vmul.f32 %v3137, 1.442695
    %v3139 = vpow.pop %v3138
    %v3140 = vadd.f32 %v3139, 1.0
    %v3141 = vrcp.pop %v3140
    %v3142 = vmul.f32 %v3140, %v3141
    %v3143 = vsub.f32 1.0, %v3142
    %v3144 = vmul.f32 %v3141, %v3143
    %v3145 = vadd.f32 %v3141, %v3144
    %vm3146 = vweird.f32 %v3140
    %vm3147 = vweird.f32 %v3141
    %vm3148 = vmor %vm3146, %vm3147
    %v3149 = vsel %vm3148, %v3141, %v3145
    %v3150 = vand.u32 2147483647, %v3140
    %vm3151 = vcmp.eq.f32.partialorder %v3150, 8.507059e+37
    %v3152 = vand.u32 %v3140, 2147483648
    %v3153 = vor.u32 1.1754944e-38, %v3152
    %v3154 = vsel %vm3151, %v3153, %v3149
    %v3155 = vmul.f32 1.0, %v3154
    %3157 = vrot.lane.b32.xlu0 %v3136, 32
    %v3158 = vpop.permute.xlu0 %3157
    %v3160 = vmul.f32 %v3155, %v3158
    %3162 = vrot.lane.b32.xlu0 %v3160, 64
    %v3163 = vpop.permute.xlu0 %3162
    %v3165 = vadd.f32 %v3136, %v3163
    %v3166 = vtanh.pop %v3165
    %v3167 = vsub.f32 1.0, %v3155
    %3169 = vrot.lane.b32.xlu0 %v3166, 96
    %v3170 = vpop.permute.xlu0 %3169
    %v3172 = vmul.f32 %v3167, %v3170
    %v3173 = vmul.f32 %v3155, %v3079
    %v3174 = vadd.f32 %v3172, %v3173
    %v3175 = vpack.c.bf16 %v3174, %v3174
    %3177 = vrot.lane.b32.xlu0 %v3175, 96
    %v3178 = vpop.permute.xlu0 %3177
    %v3180 = vsel %vm1418, %v3178, 0
    %3182 = vmatpush.bf16.msra.mxu0 0
    %3183 = vmatpush.bf16.msra.mxu0 0
    %3184 = vmatpush.bf16.msra.mxu0 0
    %3185 = vmatpush.bf16.msra.mxu0 0
    %3186 = vmatpush.bf16.msra.mxu0 0
    %3187 = vmatpush.bf16.msra.mxu0 0
    %3188 = vmatpush.bf16.msra.mxu0 %v2161
    %3189 = vmatpush.bf16.msra.mxu0 %v2160
    %3190 = vmatmul.bf16.gmra.mxu0 %v3180
    %v3191 = vpop.f32.mrf.mxu0
    %v3192 = vadd.f32 %v2147, %v3191
    %v3193 = vpop.f32.mrf.mxu0
    %3194 = vdwg.mxu0
    %3195 = vst [vmem:[#allocation2 + $0xe] sm:$0x3] %v3192
    // Predicated region
    $region86: #{crnn_forward.1} parent=1 // pred_check
      _
    $region87: #{crnn_forward.1} parent=1 // pred_check_branch
      %3197 = sbr.rel (0) target = $region89
    $region88: #{crnn_forward.1} parent=1 // pred_region
      %3199 = vsyncadd [#allocation3], 0
      %s3200 = sshll.u32 [#allocation2], 4
      %s3201 = int_to_ptr.vmem [resolvable:$true] %s3200
      %s3202 = sshll.u32 %s21, 4
      %s3203 = int_to_ptr.hbm [resolvable:$true] %s3202
      %3208 = dma.vmem_to_hbm [thread:$0]  %s3201, 256, %s3203, [#allocation3], 128, 128, 8
    $region89: #{crnn_forward.1} parent=1 // pred_fallthru
      _
    // Predicated region
    $region90: #{crnn_forward.1} parent=1 // pred_check
      _
    $region91: #{crnn_forward.1} parent=1 // pred_check_branch
      %3210 = sbr.rel (0) target = $region93
    $region92: #{crnn_forward.1} parent=1 // pred_region
      %3212 = dma.done [#allocation3], 256
    $region93: #{crnn_forward.1} parent=1 // pred_fallthru
      _
    %3213 = vsyncpa [#allocation3], 1

</llo_original>
